<compile_context>
chip_gen: v5e
topology: v5e:2x2
jax: 0.10.0
libtpu: 0.0.40
codegen_flags: <defaults>
</compile_context>

<pallas_src>
import numpy as np
import jax
import jax.numpy as jnp
from jax.experimental import pallas as pl
from jax.experimental.pallas import tpu as pltpu

# ---------------------------------------------------------------------------
# Kinematic tree (standard SMPL 24-joint topology), built in-script.
# ---------------------------------------------------------------------------
_PARENTS = np.array([-1, 0, 0, 0, 1, 2, 3, 4, 5, 6, 7, 8,
                     9, 9, 9, 12, 13, 14, 16, 17, 18, 19, 20, 21], dtype=np.int64)
KINTREE_TABLE = np.stack([_PARENTS, np.arange(24, dtype=np.int64)], axis=0)  # [2, 24]
NUM_JOINTS = KINTREE_TABLE.shape[1]


def _parent_map(kintree_table):
    id_to_col = {int(kintree_table[1, i]): i for i in range(kintree_table.shape[1])}
    return {i: id_to_col[int(kintree_table[0, i])]
            for i in range(1, kintree_table.shape[1])}


def _round_up(x, m):
    return (x + m - 1) // m * m


# ---------------------------------------------------------------------------
# Plain-JAX glue: Rodrigues, with_zeros, pack (tiny per-joint math, fused by XLA).
# ---------------------------------------------------------------------------
def rodrigues(r):
    """r: [K, 1, 3] axis-angle -> [K, 3, 3] rotation (mirrors the torch code,
    including its cos(theta*pi) / sin(theta) quirk)."""
    eps = 1e-8
    theta = jnp.sqrt(jnp.sum((r + eps) ** 2, axis=(1, 2), keepdims=True))  # [K,1,1]
    r_hat = r / theta
    cos = jnp.cos(theta * np.pi)
    K = r.shape[0]
    z = jnp.zeros((K,), dtype=r.dtype)
    m = jnp.stack([z, -r_hat[:, 0, 2], r_hat[:, 0, 1],
                   r_hat[:, 0, 2], z, -r_hat[:, 0, 0],
                   -r_hat[:, 0, 1], r_hat[:, 0, 0], z], axis=1).reshape(-1, 3, 3)
    i_cube = jnp.broadcast_to(jnp.eye(3, dtype=r.dtype)[None], (K, 3, 3))
    dot = jnp.matmul(jnp.transpose(r_hat, (0, 2, 1)), r_hat)
    return cos * i_cube + (1.0 - cos) * dot + jnp.sin(theta) * m


def with_zeros(x):
    """x: [B, 3, 4] -> [B, 4, 4] (append [0,0,0,1] row)."""
    row = jnp.broadcast_to(
        jnp.array([[[0.0, 0.0, 0.0, 1.0]]], dtype=x.dtype), (x.shape[0], 1, 4))
    return jnp.concatenate([x, row], axis=1)


def pack(x):
    """x: [B, M, 4, 1] -> [B, M, 4, 4] (prepend zero [4,3])."""
    zeros43 = jnp.zeros((x.shape[0], x.shape[1], 4, 3), dtype=x.dtype)
    return jnp.concatenate([zeros43, x], axis=3)


# ---------------------------------------------------------------------------
# Pallas LBS kernel (vertex-on-lanes layout).
#   A[4k+j, n] = sum_m T[b,m,k,j] * W[b,n,m]          (one MXU matmul)
#   out[k, n]  = A[4k,n]*x + A[4k+1,n]*y + A[4k+2,n]*z + A[4k+3,n]   (VPU FMAs)
# ---------------------------------------------------------------------------
def _lbs_kernel(w_ref, vh_ref, t_ref, o_ref):
    w = w_ref[0].astype(jnp.float32)     # [24, TN]  (bf16 on HBM -> f32 in vregs)
    vh = vh_ref[0]                       # [4,  TN]  rows = x, y, z, 1
    tt = t_ref[0]                        # [16, 24]  row 4k+j holds T[:, k, j]
    a = jnp.dot(tt, w, preferred_element_type=jnp.float32)   # [16, TN] blended T
    rows = []
    for k in range(3):                   # rows 0..2 of the blended transform
        r = (a[4 * k + 0:4 * k + 1, :] * vh[0:1, :]
             + a[4 * k + 1:4 * k + 2, :] * vh[1:2, :]
             + a[4 * k + 2:4 * k + 3, :] * vh[2:3, :]
             + a[4 * k + 3:4 * k + 4, :])
        rows.append(r)                   # [1, TN], lane-dense
    o_ref[0] = jnp.concatenate(rows, axis=0).astype(o_ref.dtype)   # [3, TN]


def lbs_pallas(V, W, T, *, tile_n=None, w_dtype=jnp.bfloat16):
    """V:[B,N,3], W:[B,N,M], T:[B,M,4,4] -> [B,N,3]."""
    B, N, _ = V.shape
    M = W.shape[2]

    # Tile selection: per-grid-step overhead dominates this mem-bound kernel, so
    # use one big lane-dense tile per batch when it fits comfortably in VMEM.
    if tile_n is None:
        if N <= 8192:
            tile_n = _round_up(N, 256)
            if B == 1 and tile_n >= 512:          # keep >=2 grid steps (v7x 2 TCs)
                tile_n = _round_up((N + 1) // 2, 256)
        else:
            tile_n = 2048
    if tile_n % 128 != 0:
        raise ValueError("tile_n must be a multiple of 128")
    N_pad = _round_up(N, tile_n)
    num_tiles = pl.cdiv(N_pad, tile_n)
    pad = N_pad - N

    # Wrapper-side relayout to vertex-on-lanes (cast+transpose fuse in XLA; in a
    # real pipeline W would be stored pre-transposed / pre-cast once).
    Wt = jnp.transpose(W, (0, 2, 1))                                 # [B, M, N]
    Wt = jnp.pad(Wt, ((0, 0), (0, 0), (0, pad))).astype(w_dtype)     # [B, M, Np]
    Vt = jnp.pad(jnp.transpose(V, (0, 2, 1)), ((0, 0), (0, 0), (0, pad)))
    Vht = jnp.concatenate([Vt, jnp.ones((B, 1, N_pad), V.dtype)], axis=1)  # [B,4,Np]
    Tt = jnp.transpose(T, (0, 2, 3, 1)).reshape(B, 16, M)            # [B, 16, M]

    out_t = pl.pallas_call(
        _lbs_kernel,
        out_shape=jax.ShapeDtypeStruct((B, 3, N_pad), V.dtype),
        grid_spec=pltpu.PrefetchScalarGridSpec(
            num_scalar_prefetch=0,
            grid=(B, num_tiles),
            in_specs=[
                pl.BlockSpec((1, M, tile_n), lambda b, i: (b, 0, i)),   # Wt
                pl.BlockSpec((1, 4, tile_n), lambda b, i: (b, 0, i)),   # Vht
                pl.BlockSpec((1, 16, M),     lambda b, i: (b, 0, 0)),   # Tt
            ],
            out_specs=pl.BlockSpec((1, 3, tile_n), lambda b, i: (b, 0, i)),
        ),
        compiler_params=pltpu.CompilerParams(
            dimension_semantics=("parallel", "parallel")),
    )(Wt, Vht, Tt)

    return jnp.transpose(out_t[:, :, :N], (0, 2, 1))                 # [B, N, 3]


# ---------------------------------------------------------------------------
# Full forward pass (== DeformationtionNet.forward).
# ---------------------------------------------------------------------------
def deformation_net_forward(V, J, pose, W, kintree_table=KINTREE_TABLE,
                            use_pallas=True, w_dtype=jnp.bfloat16, tile_n=None):
    B = V.shape[0]
    M = kintree_table.shape[1]
    parent = _parent_map(kintree_table)

    R = rodrigues(pose.reshape(-1, 1, 3)).reshape(B, M, 3, 3)

    results = [with_zeros(jnp.concatenate(
        [R[:, 0], J[:, 0, :].reshape(-1, 3, 1)], axis=2))]
    for i in range(1, M):
        local = with_zeros(jnp.concatenate(
            [R[:, i], (J[:, i, :] - J[:, parent[i], :]).reshape(-1, 3, 1)], axis=2))
        results.append(jnp.matmul(results[parent[i]], local))
    stacked = jnp.stack(results, axis=1)                              # [B,M,4,4]

    Jh = jnp.concatenate(
        [J, jnp.zeros((B, M, 1), dtype=J.dtype)], axis=2).reshape(B, M, 4, 1)
    T = stacked - pack(jnp.matmul(stacked, Jh))                       # [B,M,4,4]

    if use_pallas:
        return lbs_pallas(V, W, T, tile_n=tile_n, w_dtype=w_dtype)
    # pure-JAX reference LBS (for verification)
    Vh = jnp.concatenate([V, jnp.ones(V.shape[:2] + (1,), V.dtype)], axis=-1)
    TV = jnp.einsum('bmkj,bnj->bnmk', T, Vh)
    return jnp.sum(W[..., None] * TV, axis=2)[..., :3]


# ---------------------------------------------------------------------------
if __name__ == "__main__":
    key = jax.random.PRNGKey(0)
    kV, kJ, kP, kW = jax.random.split(key, 4)
    B, N, M = 2, 6890, NUM_JOINTS   # real SMPL vertex count -> exercises padding

    V = jax.random.normal(kV, (B, N, 3), dtype=jnp.float32)
    J = 0.5 * jax.random.normal(kJ, (B, M, 3), dtype=jnp.float32)
    pose = 0.2 * jax.random.normal(kP, (B, M * 3), dtype=jnp.float32)
    W = jax.nn.softmax(jax.random.normal(kW, (B, N, M), dtype=jnp.float32), axis=-1)

    fwd_bf16 = jax.jit(lambda v, j, p, w: deformation_net_forward(v, j, p, w))
    fwd_f32 = jax.jit(lambda v, j, p, w: deformation_net_forward(
        v, j, p, w, w_dtype=jnp.float32))
    fwd_ref = jax.jit(lambda v, j, p, w: deformation_net_forward(
        v, j, p, w, use_pallas=False))

    out_bf16 = jax.block_until_ready(fwd_bf16(V, J, pose, W))
    out_f32 = jax.block_until_ready(fwd_f32(V, J, pose, W))
    ref = jax.block_until_ready(fwd_ref(V, J, pose, W))

    assert out_bf16.shape == (B, N, 3) and out_f32.shape == (B, N, 3)
    # f32-weight kernel path: tight check against the pure-JAX reference.
    np.testing.assert_allclose(np.asarray(out_f32), np.asarray(ref),
                               rtol=5e-3, atol=5e-3)
    # bf16-weight (bandwidth-optimized) path: weights sum to 1 so quantization
    # error stays small; verified at a slightly looser tolerance.
    np.testing.assert_allclose(np.asarray(out_bf16), np.asarray(ref),
                               rtol=2e-2, atol=2e-2)
    print("KERNEL_OK")
</pallas_src>

<mosaic_0001>
module attributes {stable_mosaic.version = 11 : i64} {
  func.func @_lbs_kernel(%arg0: i32, %arg1: i32, %arg2: memref<1x24x6912xbf16, #tpu.memory_space<vmem>>, %arg3: memref<1x4x6912xf32, #tpu.memory_space<vmem>>, %arg4: memref<1x16x24xf32, #tpu.memory_space<vmem>>, %arg5: memref<1x3x6912xf32, #tpu.memory_space<vmem>>) attributes {dimension_semantics = [#tpu.dimension_semantics<parallel>, #tpu.dimension_semantics<parallel>], iteration_bounds = array<i64: 2, 1>, scalar_prefetch = 0 : i64, scratch_operands = 0 : i64, tpu.core_type = #tpu.core_type<tc>, window_params = [{transform_indices = @transform_0, window_bounds = array<i64: 1, 24, 6912>}, {transform_indices = @transform_1, window_bounds = array<i64: 1, 4, 6912>}, {transform_indices = @transform_2, window_bounds = array<i64: 1, 16, 24>}, {transform_indices = @transform_3, window_bounds = array<i64: 1, 3, 6912>}]} {
    %c0 = arith.constant 0 : index
    %c0_0 = arith.constant 0 : index
    %c0_1 = arith.constant 0 : index
    %0 = vector.load %arg2[%c0, %c0_0, %c0_1] : memref<1x24x6912xbf16, #tpu.memory_space<vmem>>, vector<1x24x6912xbf16>
    %1 = vector.shape_cast %0 : vector<1x24x6912xbf16> to vector<24x6912xbf16>
    %2 = arith.extf %1 : vector<24x6912xbf16> to vector<24x6912xf32>
    %c0_2 = arith.constant 0 : index
    %c0_3 = arith.constant 0 : index
    %c0_4 = arith.constant 0 : index
    %3 = vector.load %arg3[%c0_2, %c0_3, %c0_4] : memref<1x4x6912xf32, #tpu.memory_space<vmem>>, vector<1x4x6912xf32>
    %4 = vector.shape_cast %3 : vector<1x4x6912xf32> to vector<4x6912xf32>
    %c0_5 = arith.constant 0 : index
    %c0_6 = arith.constant 0 : index
    %c0_7 = arith.constant 0 : index
    %5 = vector.load %arg4[%c0_5, %c0_6, %c0_7] : memref<1x16x24xf32, #tpu.memory_space<vmem>>, vector<1x16x24xf32>
    %6 = vector.shape_cast %5 : vector<1x16x24xf32> to vector<16x24xf32>
    %cst = arith.constant dense<0.000000e+00> : vector<16x6912xf32>
    %7 = tpu.matmul %6, %2, %cst {dimension_numbers = #tpu.dot_dimension_numbers<[1], [0], [0], [1], [0, 0, 1, 1], [], []>} : vector<16x24xf32>, vector<24x6912xf32>, vector<16x6912xf32> -> vector<16x6912xf32>
    %8 = vector.extract_strided_slice %7 {offsets = [0, 0], sizes = [1, 6912], strides = [1, 1]} : vector<16x6912xf32> to vector<1x6912xf32>
    %9 = vector.extract_strided_slice %4 {offsets = [0, 0], sizes = [1, 6912], strides = [1, 1]} : vector<4x6912xf32> to vector<1x6912xf32>
    %10 = arith.mulf %8, %9 : vector<1x6912xf32>
    %11 = vector.extract_strided_slice %7 {offsets = [1, 0], sizes = [1, 6912], strides = [1, 1]} : vector<16x6912xf32> to vector<1x6912xf32>
    %12 = vector.extract_strided_slice %4 {offsets = [1, 0], sizes = [1, 6912], strides = [1, 1]} : vector<4x6912xf32> to vector<1x6912xf32>
    %13 = arith.mulf %11, %12 : vector<1x6912xf32>
    %14 = arith.addf %10, %13 : vector<1x6912xf32>
    %15 = vector.extract_strided_slice %7 {offsets = [2, 0], sizes = [1, 6912], strides = [1, 1]} : vector<16x6912xf32> to vector<1x6912xf32>
    %16 = vector.extract_strided_slice %4 {offsets = [2, 0], sizes = [1, 6912], strides = [1, 1]} : vector<4x6912xf32> to vector<1x6912xf32>
    %17 = arith.mulf %15, %16 : vector<1x6912xf32>
    %18 = arith.addf %14, %17 : vector<1x6912xf32>
    %19 = vector.extract_strided_slice %7 {offsets = [3, 0], sizes = [1, 6912], strides = [1, 1]} : vector<16x6912xf32> to vector<1x6912xf32>
    %20 = arith.addf %18, %19 : vector<1x6912xf32>
    %21 = vector.extract_strided_slice %7 {offsets = [4, 0], sizes = [1, 6912], strides = [1, 1]} : vector<16x6912xf32> to vector<1x6912xf32>
    %22 = vector.extract_strided_slice %4 {offsets = [0, 0], sizes = [1, 6912], strides = [1, 1]} : vector<4x6912xf32> to vector<1x6912xf32>
    %23 = arith.mulf %21, %22 : vector<1x6912xf32>
    %24 = vector.extract_strided_slice %7 {offsets = [5, 0], sizes = [1, 6912], strides = [1, 1]} : vector<16x6912xf32> to vector<1x6912xf32>
    %25 = vector.extract_strided_slice %4 {offsets = [1, 0], sizes = [1, 6912], strides = [1, 1]} : vector<4x6912xf32> to vector<1x6912xf32>
    %26 = arith.mulf %24, %25 : vector<1x6912xf32>
    %27 = arith.addf %23, %26 : vector<1x6912xf32>
    %28 = vector.extract_strided_slice %7 {offsets = [6, 0], sizes = [1, 6912], strides = [1, 1]} : vector<16x6912xf32> to vector<1x6912xf32>
    %29 = vector.extract_strided_slice %4 {offsets = [2, 0], sizes = [1, 6912], strides = [1, 1]} : vector<4x6912xf32> to vector<1x6912xf32>
    %30 = arith.mulf %28, %29 : vector<1x6912xf32>
    %31 = arith.addf %27, %30 : vector<1x6912xf32>
    %32 = vector.extract_strided_slice %7 {offsets = [7, 0], sizes = [1, 6912], strides = [1, 1]} : vector<16x6912xf32> to vector<1x6912xf32>
    %33 = arith.addf %31, %32 : vector<1x6912xf32>
    %34 = vector.extract_strided_slice %7 {offsets = [8, 0], sizes = [1, 6912], strides = [1, 1]} : vector<16x6912xf32> to vector<1x6912xf32>
    %35 = vector.extract_strided_slice %4 {offsets = [0, 0], sizes = [1, 6912], strides = [1, 1]} : vector<4x6912xf32> to vector<1x6912xf32>
    %36 = arith.mulf %34, %35 : vector<1x6912xf32>
    %37 = vector.extract_strided_slice %7 {offsets = [9, 0], sizes = [1, 6912], strides = [1, 1]} : vector<16x6912xf32> to vector<1x6912xf32>
    %38 = vector.extract_strided_slice %4 {offsets = [1, 0], sizes = [1, 6912], strides = [1, 1]} : vector<4x6912xf32> to vector<1x6912xf32>
    %39 = arith.mulf %37, %38 : vector<1x6912xf32>
    %40 = arith.addf %36, %39 : vector<1x6912xf32>
    %41 = vector.extract_strided_slice %7 {offsets = [10, 0], sizes = [1, 6912], strides = [1, 1]} : vector<16x6912xf32> to vector<1x6912xf32>
    %42 = vector.extract_strided_slice %4 {offsets = [2, 0], sizes = [1, 6912], strides = [1, 1]} : vector<4x6912xf32> to vector<1x6912xf32>
    %43 = arith.mulf %41, %42 : vector<1x6912xf32>
    %44 = arith.addf %40, %43 : vector<1x6912xf32>
    %45 = vector.extract_strided_slice %7 {offsets = [11, 0], sizes = [1, 6912], strides = [1, 1]} : vector<16x6912xf32> to vector<1x6912xf32>
    %46 = arith.addf %44, %45 : vector<1x6912xf32>
    %47 = tpu.concatenate %20, %33, %46 in 0 : vector<1x6912xf32>, vector<1x6912xf32>, vector<1x6912xf32> -> vector<3x6912xf32>
    %c0_8 = arith.constant 0 : index
    %c0_9 = arith.constant 0 : index
    %c0_10 = arith.constant 0 : index
    %48 = vector.load %arg5[%c0_8, %c0_9, %c0_10] : memref<1x3x6912xf32, #tpu.memory_space<vmem>>, vector<1x3x6912xf32>
    %49 = vector.shape_cast %48 : vector<1x3x6912xf32> to vector<3x6912xf32>
    %50 = vector.shape_cast %47 : vector<3x6912xf32> to vector<1x3x6912xf32>
    tpu.vector_store %arg5[%c0_8, %c0_9, %c0_10], %50 {strides = array<i32>} : memref<1x3x6912xf32, #tpu.memory_space<vmem>>, vector<1x3x6912xf32>,
    return
  }
  func.func @transform_0(%arg0: i32, %arg1: i32) -> (i32, i32, i32) {
    %c0_i32 = arith.constant 0 : i32
    %c0_i32_0 = arith.constant 0 : i32
    return %arg0, %c0_i32, %arg1 : i32, i32, i32
  }
  func.func @transform_1(%arg0: i32, %arg1: i32) -> (i32, i32, i32) {
    %c0_i32 = arith.constant 0 : i32
    %c0_i32_0 = arith.constant 0 : i32
    return %arg0, %c0_i32, %arg1 : i32, i32, i32
  }
  func.func @transform_2(%arg0: i32, %arg1: i32) -> (i32, i32, i32) {
    %c0_i32 = arith.constant 0 : i32
    %c0_i32_0 = arith.constant 0 : i32
    %c0_i32_1 = arith.constant 0 : i32
    return %arg0, %c0_i32, %c0_i32_0 : i32, i32, i32
  }
  func.func @transform_3(%arg0: i32, %arg1: i32) -> (i32, i32, i32) {
    %c0_i32 = arith.constant 0 : i32
    %c0_i32_0 = arith.constant 0 : i32
    return %arg0, %c0_i32, %arg1 : i32, i32, i32
  }
}

</mosaic_0001>

<llo_original>
// kernel: _lambda_.1
$region0: #{_lambda_.1}
  #allocation0 [shape = 'u32[]', space=smem, size = 0x4, offset = 0x4, fixed_abs, tag = 'smem constant byte address 0x4 - core index']
  #allocation1 [shape = 'u32[72,128]{1,0:T(1,128)}', space=vmem, size = 0x9000, scoped, tag = 'internal scratch']
  %s0 = inlined_call_operand.vmem [shape: bf16[2,24,6912], index: 0, kind: input, shape index: {}]
  %s1 = inlined_call_operand.vmem [shape: f32[2,4,6912], index: 1, kind: input, shape index: {}]
  %s2 = inlined_call_operand.vmem [shape: f32[2,16,24], index: 2, kind: input, shape index: {}]
  %s3 = inlined_call_operand.vmem [shape: f32[2,3,6912], index: 3, kind: output, shape index: {}]
  %s4 = sld [smem:[#allocation0]]
  $region45: #{_lambda_.1} parent=0
    _
  %s6 = ssub.s32 1, %s4
  %s7 = scalar_select 0, %s6, %s4
  loop: start=0, step=1, limit=4
  $region2: #{_lambda_.1} parent=0 // loop_pre_header
    _
  $region3: #{_lambda_.1} parent=0 // loop_header
    %s9 = sphi 0, %s13
    %p10 = scmp.ge.s32.totalorder %s9, 4
    %s16 = sphi 0, %s28
    %s17 = sphi 0, %s24
    %s18 = sphi 0, %s16
    %s19 = sphi 0, %s17
    %s20 = sphi 0, %s18
    %s21 = sphi 0, %s19
    %s33 = sphi 0, %s35
    %s36 = sphi 0, %s33
    %s37 = sphi 0, %s36
    %s53 = sphi 0, %s37
    %s61 = sphi 0, %s63
    %s64 = sphi 0, %s61
    %s65 = sphi 0, %s64
    %s81 = sphi 0, %s65
    %s87 = sphi 0, %s89
    %s90 = sphi 0, %s87
    %s91 = sphi 0, %s90
    %s107 = sphi 0, %s91
    %s115 = sphi 0, %s117
    %s118 = sphi 0, %s115
    %s119 = sphi 0, %s118
    %s135 = sphi 0, %s119
  $region4: #{_lambda_.1} parent=0 // loop_header_branch
    %12 = sbr.rel (%p10) target = $region8
  $region5: #{_lambda_.1} parent=0 // loop_body
    %s14 = ssub.s32 %s9, 1
    %s15 = ssub.s32 %s9, 2
    %s22 = sadd.s32 1, %s17
    %p23 = scmp.ge.s32.totalorder %s22, 1
    %s24 = scalar_select %p23, 0, %s22
    %s25 = sadd.s32 1, %s16
    %s26 = scalar_select %p23, %s25, %s16
    %p27 = scmp.ge.s32.totalorder %s26, 2
    %s28 = scalar_select %p27, 0, %s26
    %s29 = ssub.s32 %s16, %s28
    %s30 = ssub.s32 %s17, %s24
    %s31 = sor.u32 %s29, %s30
    %p32 = scmp.eq.s32.totalorder %s31, 0
    %s34 = sadd.s32 %s33, 1
    %s35 = scalar_select %p32, %s33, %s34
    %p38 = pneg %p32
    %p39 = scmp.eq.s32.totalorder %s9, 1
    %p40 = por %p38, %p39
    %p41 = scmp.ne.s32.totalorder %s33, %s36
    %p42 = scmp.eq.s32.totalorder %s9, 0
    %p43 = por %p41, %p42
    %p44 = scmp.ne.s32.totalorder %s33, %s36
    %p45 = scmp.eq.s32.totalorder %s14, 1
    %p46 = por %p44, %p45
    %p47 = scmp.ne.s32.totalorder %s36, %s37
    %p48 = scmp.eq.s32.totalorder %s14, 0
    %p49 = por %p47, %p48
    %p50 = scmp.ne.s32.totalorder %s36, %s37
    %p51 = scmp.eq.s32.totalorder %s15, 1
    %p52 = por %p50, %p51
    %p54 = scmp.ne.s32.totalorder %s37, %s53
    %p55 = scmp.eq.s32.totalorder %s15, 0
    %p56 = por %p54, %p55
    %s57 = ssub.s32 %s16, %s28
    %s58 = ssub.s32 %s17, %s24
    %s59 = sor.u32 %s57, %s58
    %p60 = scmp.eq.s32.totalorder %s59, 0
    %s62 = sadd.s32 %s61, 1
    %s63 = scalar_select %p60, %s61, %s62
    %p66 = pneg %p60
    %p67 = scmp.eq.s32.totalorder %s9, 1
    %p68 = por %p66, %p67
    %p69 = scmp.ne.s32.totalorder %s61, %s64
    %p70 = scmp.eq.s32.totalorder %s9, 0
    %p71 = por %p69, %p70
    %p72 = scmp.ne.s32.totalorder %s61, %s64
    %p73 = scmp.eq.s32.totalorder %s14, 1
    %p74 = por %p72, %p73
    %p75 = scmp.ne.s32.totalorder %s64, %s65
    %p76 = scmp.eq.s32.totalorder %s14, 0
    %p77 = por %p75, %p76
    %p78 = scmp.ne.s32.totalorder %s64, %s65
    %p79 = scmp.eq.s32.totalorder %s15, 1
    %p80 = por %p78, %p79
    %p82 = scmp.ne.s32.totalorder %s65, %s81
    %p83 = scmp.eq.s32.totalorder %s15, 0
    %p84 = por %p82, %p83
    %s85 = ssub.s32 %s16, %s28
    %p86 = scmp.eq.s32.totalorder %s85, 0
    %s88 = sadd.s32 %s87, 1
    %s89 = scalar_select %p86, %s87, %s88
    %p92 = pneg %p86
    %p93 = scmp.eq.s32.totalorder %s9, 1
    %p94 = por %p92, %p93
    %p95 = scmp.ne.s32.totalorder %s87, %s90
    %p96 = scmp.eq.s32.totalorder %s9, 0
    %p97 = por %p95, %p96
    %p98 = scmp.ne.s32.totalorder %s87, %s90
    %p99 = scmp.eq.s32.totalorder %s14, 1
    %p100 = por %p98, %p99
    %p101 = scmp.ne.s32.totalorder %s90, %s91
    %p102 = scmp.eq.s32.totalorder %s14, 0
    %p103 = por %p101, %p102
    %p104 = scmp.ne.s32.totalorder %s90, %s91
    %p105 = scmp.eq.s32.totalorder %s15, 1
    %p106 = por %p104, %p105
    %p108 = scmp.ne.s32.totalorder %s91, %s107
    %p109 = scmp.eq.s32.totalorder %s15, 0
    %p110 = por %p108, %p109
    %s111 = ssub.s32 %s16, %s28
    %s112 = ssub.s32 %s17, %s24
    %s113 = sor.u32 %s111, %s112
    %p114 = scmp.eq.s32.totalorder %s113, 0
    %s116 = sadd.s32 %s115, 1
    %s117 = scalar_select %p114, %s115, %s116
    %p120 = pneg %p114
    %p121 = scmp.eq.s32.totalorder %s9, 1
    %p122 = por %p120, %p121
    %p123 = scmp.ne.s32.totalorder %s115, %s118
    %p124 = scmp.eq.s32.totalorder %s9, 0
    %p125 = por %p123, %p124
    %p126 = scmp.ne.s32.totalorder %s115, %s118
    %p127 = scmp.eq.s32.totalorder %s14, 1
    %p128 = por %p126, %p127
    %p129 = scmp.ne.s32.totalorder %s118, %s119
    %p130 = scmp.eq.s32.totalorder %s14, 0
    %p131 = por %p129, %p130
    %p132 = scmp.ne.s32.totalorder %s118, %s119
    %p133 = scmp.eq.s32.totalorder %s15, 1
    %p134 = por %p132, %p133
    %p136 = scmp.ne.s32.totalorder %s119, %s135
    %p137 = scmp.eq.s32.totalorder %s15, 0
    %p138 = por %p136, %p137
    %p139 = scmp.le.s32.totalorder 1, %s9
    %p140 = scmp.lt.s32.totalorder %s9, 3
    %p141 = pnand %p139, %p140
    %p142 = pneg %p141
    // Predicated region
    $region9: #{_lambda_.1} parent=5 // pred_check
      _
    $region10: #{_lambda_.1} parent=5 // pred_check_branch
      %144 = sbr.rel (%p141) target = $region12
    $region11: #{_lambda_.1} parent=5 // pred_region
      %s145 = ssub.s32 %s9, 1
    $region12: #{_lambda_.1} parent=5 // pred_fallthru
      _
    %p146 = scmp.lt.s32.totalorder %s9, 2
    // Predicated region
    $region13: #{_lambda_.1} parent=5 // pred_check
      %p147 = pneg %p146
    $region14: #{_lambda_.1} parent=5 // pred_check_branch
      %149 = sbr.rel (%p147) target = $region16
    $region15: #{_lambda_.1} parent=5 // pred_region
      // Predicated region
      $region17: #{_lambda_.1} parent=15 // pred_check
        %p150 = pneg %p43
      $region18: #{_lambda_.1} parent=15 // pred_check_branch
        %152 = sbr.rel (%p150) target = $region20
      $region19: #{_lambda_.1} parent=15 // pred_region
        %s153 = smul.u32 54, %s17
        %p154 = scmp.lt.s32.totalorder %s16, 1
        %s155 = scalar_select %p154, %s16, 1
        %p156 = scmp.lt.s32.totalorder %s153, 53
        %s157 = scalar_select %p156, %s153, 53
        %s158 = smul.addr %s155, 162
        %s159 = sadd.s32 %s157, %s158
        %s160 = smul.addr %s159, 4
        %s161 = scalar_lea.vmem %s0, %s160
        %s162 = smul.u32 54, %s17
      $region20: #{_lambda_.1} parent=15 // pred_fallthru
        _
      // Predicated region
      $region21: #{_lambda_.1} parent=15 // pred_check
        %p163 = pneg %p71
      $region22: #{_lambda_.1} parent=15 // pred_check_branch
        %165 = sbr.rel (%p163) target = $region24
      $region23: #{_lambda_.1} parent=15 // pred_region
        %s166 = smul.u32 54, %s17
        %p167 = scmp.lt.s32.totalorder %s16, 1
        %s168 = scalar_select %p167, %s16, 1
        %p169 = scmp.lt.s32.totalorder %s166, 53
        %s170 = scalar_select %p169, %s166, 53
        %s171 = smul.addr %s168, 54
        %s172 = sadd.s32 %s170, %s171
        %s173 = smul.addr %s172, 4
        %s174 = scalar_lea.vmem %s1, %s173
        %s175 = smul.u32 54, %s17
      $region24: #{_lambda_.1} parent=15 // pred_fallthru
        _
      // Predicated region
      $region25: #{_lambda_.1} parent=15 // pred_check
        %p176 = pneg %p97
      $region26: #{_lambda_.1} parent=15 // pred_check_branch
        %178 = sbr.rel (%p176) target = $region28
      $region27: #{_lambda_.1} parent=15 // pred_region
        %p179 = scmp.lt.s32.totalorder %s16, 1
        %s180 = scalar_select %p179, %s16, 1
        %s181 = smul.addr %s180, 2
        %s182 = smul.addr %s181, 8
        %s183 = scalar_lea.vmem %s2, %s182
      $region28: #{_lambda_.1} parent=15 // pred_fallthru
        _
    $region16: #{_lambda_.1} parent=5 // pred_fallthru
      _
    %p184 = scmp.le.s32.totalorder 1, %s9
    %p185 = scmp.lt.s32.totalorder %s9, 3
    %p186 = pnand %p184, %p185
    %p187 = pneg %p186
    // Predicated region
    $region29: #{_lambda_.1} parent=5 // pred_check
      _
    $region30: #{_lambda_.1} parent=5 // pred_check_branch
      %189 = sbr.rel (%p186) target = $region32
    $region31: #{_lambda_.1} parent=5 // pred_region
      %s190 = ssub.s32 %s9, 1
      %s191 = smul.u32 54, %s19
      %p192 = scmp.lt.s32.totalorder %s18, 1
      %s193 = scalar_select %p192, %s18, 1
      %p194 = scmp.lt.s32.totalorder %s191, 53
      %s195 = scalar_select %p194, %s191, 53
      %s196 = smul.addr %s193, 162
      %s197 = sadd.s32 %s195, %s196
      %s198 = smul.addr %s197, 4
      %s199 = scalar_lea.vmem %s0, %s198
      %p200 = pneg %p49
      %p201 = pneg %p46
      %s202 = smul.u32 54, %s19
      %p203 = scmp.lt.s32.totalorder %s18, 1
      %s204 = scalar_select %p203, %s18, 1
      %p205 = scmp.lt.s32.totalorder %s202, 53
      %s206 = scalar_select %p205, %s202, 53
      %s207 = smul.addr %s204, 54
      %s208 = sadd.s32 %s206, %s207
      %s209 = smul.addr %s208, 4
      %s210 = scalar_lea.vmem %s1, %s209
      %p211 = pneg %p77
      %p212 = pneg %p74
      %p213 = scmp.lt.s32.totalorder %s18, 1
      %s214 = scalar_select %p213, %s18, 1
      %s215 = smul.addr %s214, 2
      %s216 = smul.addr %s215, 8
      %s217 = scalar_lea.vmem %s2, %s216
      %p218 = pneg %p103
      %p219 = pneg %p100
      %p220 = pneg %p131
      %p221 = pneg %p128
      %s222 = smul.u32 54, %s19
      %p223 = scmp.lt.s32.totalorder %s18, 1
      %s224 = scalar_select %p223, %s18, 1
      %p225 = scmp.lt.s32.totalorder %s222, 53
      %s226 = scalar_select %p225, %s222, 53
      %s227 = smul.addr %s224, 54
      %s228 = sadd.s32 %s226, %s227
      %s229 = smul.addr %s228, 4
      %s230 = scalar_lea.vmem %s3, %s229
      %s231 = smul.u32 54, %s19
      %p232 = scmp.lt.s32.totalorder %s18, 1
      %s233 = scalar_select %p232, %s18, 1
      %p234 = scmp.lt.s32.totalorder %s231, 53
      %s235 = scalar_select %p234, %s231, 53
      %s236 = smul.addr %s233, 162
      %s237 = sadd.s32 %s235, %s236
      %s238 = smul.addr %s237, 4
      %s239 = scalar_lea.vmem %s0, %s238
      %s240 = smul.u32 54, %s19
      %s241 = smul.u32 54, %s19
      %p242 = scmp.lt.s32.totalorder %s18, 1
      %s243 = scalar_select %p242, %s18, 1
      %p244 = scmp.lt.s32.totalorder %s241, 53
      %s245 = scalar_select %p244, %s241, 53
      %s246 = smul.addr %s243, 54
      %s247 = sadd.s32 %s245, %s246
      %s248 = smul.addr %s247, 4
      %s249 = scalar_lea.vmem %s1, %s248
      %s250 = smul.u32 54, %s19
      %p251 = scmp.lt.s32.totalorder %s18, 1
      %s252 = scalar_select %p251, %s18, 1
      %s253 = smul.addr %s252, 2
      %s254 = smul.addr %s253, 8
      %s255 = scalar_lea.vmem %s2, %s254
      %s256 = smul.u32 54, %s19
      %p257 = scmp.lt.s32.totalorder %s18, 1
      %s258 = scalar_select %p257, %s18, 1
      %p259 = scmp.lt.s32.totalorder %s256, 53
      %s260 = scalar_select %p259, %s256, 53
      %s261 = smul.addr %s258, 54
      %s262 = sadd.s32 %s260, %s261
      %s263 = smul.addr %s262, 4
      %s264 = scalar_lea.vmem %s3, %s263
      %s265 = smul.u32 54, %s19
      %v266 = vld [vmem:[%s239] sm:$0xff]
      %v267 = vld [vmem:[%s239 + $0x8] sm:$0xff]
      %v268 = vld [vmem:[%s239 + $0x10] sm:$0xff]
      %v269 = vld [vmem:[%s239 + $0x18] sm:$0xff]
      %v270 = vld [vmem:[%s239 + $0x20] sm:$0xff]
      %v271 = vld [vmem:[%s239 + $0x28] sm:$0xff]
      %v272 = vld [vmem:[%s239 + $0x30] sm:$0xff]
      %v273 = vld [vmem:[%s239 + $0x38] sm:$0xff]
      %v274 = vld [vmem:[%s239 + $0x40] sm:$0xff]
      %v275 = vld [vmem:[%s239 + $0x48] sm:$0xff]
      %v276 = vld [vmem:[%s239 + $0x50] sm:$0xff]
      %v277 = vld [vmem:[%s239 + $0x58] sm:$0xff]
      %v278 = vld [vmem:[%s239 + $0x60] sm:$0xff]
      %v279 = vld [vmem:[%s239 + $0x68] sm:$0xff]
      %v280 = vld [vmem:[%s239 + $0x70] sm:$0xff]
      %v281 = vld [vmem:[%s239 + $0x78] sm:$0xff]
      %v282 = vld [vmem:[%s239 + $0x80] sm:$0xff]
      %v283 = vld [vmem:[%s239 + $0x88] sm:$0xff]
      %v284 = vld [vmem:[%s239 + $0x90] sm:$0xff]
      %v285 = vld [vmem:[%s239 + $0x98] sm:$0xff]
      %v286 = vld [vmem:[%s239 + $0xa0] sm:$0xff]
      %v287 = vld [vmem:[%s239 + $0xa8] sm:$0xff]
      %v288 = vld [vmem:[%s239 + $0xb0] sm:$0xff]
      %v289 = vld [vmem:[%s239 + $0xb8] sm:$0xff]
      %v290 = vld [vmem:[%s239 + $0xc0] sm:$0xff]
      %v291 = vld [vmem:[%s239 + $0xc8] sm:$0xff]
      %v292 = vld [vmem:[%s239 + $0xd0] sm:$0xff]
      %v293 = vld [vmem:[%s239 + $0xd8] sm:$0xff]
      %v294 = vld [vmem:[%s239 + $0xe0] sm:$0xff]
      %v295 = vld [vmem:[%s239 + $0xe8] sm:$0xff]
      %v296 = vld [vmem:[%s239 + $0xf0] sm:$0xff]
      %v297 = vld [vmem:[%s239 + $0xf8] sm:$0xff]
      %v298 = vld [vmem:[%s239 + $0x100] sm:$0xff]
      %v299 = vld [vmem:[%s239 + $0x108] sm:$0xff]
      %v300 = vld [vmem:[%s239 + $0x110] sm:$0xff]
      %v301 = vld [vmem:[%s239 + $0x118] sm:$0xff]
      %v302 = vld [vmem:[%s239 + $0x120] sm:$0xff]
      %v303 = vld [vmem:[%s239 + $0x128] sm:$0xff]
      %v304 = vld [vmem:[%s239 + $0x130] sm:$0xff]
      %v305 = vld [vmem:[%s239 + $0x138] sm:$0xff]
      %v306 = vld [vmem:[%s239 + $0x140] sm:$0xff]
      %v307 = vld [vmem:[%s239 + $0x148] sm:$0xff]
      %v308 = vld [vmem:[%s239 + $0x150] sm:$0xff]
      %v309 = vld [vmem:[%s239 + $0x158] sm:$0xff]
      %v310 = vld [vmem:[%s239 + $0x160] sm:$0xff]
      %v311 = vld [vmem:[%s239 + $0x168] sm:$0xff]
      %v312 = vld [vmem:[%s239 + $0x170] sm:$0xff]
      %v313 = vld [vmem:[%s239 + $0x178] sm:$0xff]
      %v314 = vld [vmem:[%s239 + $0x180] sm:$0xff]
      %v315 = vld [vmem:[%s239 + $0x188] sm:$0xff]
      %v316 = vld [vmem:[%s239 + $0x190] sm:$0xff]
      %v317 = vld [vmem:[%s239 + $0x198] sm:$0xff]
      %v318 = vld [vmem:[%s239 + $0x1a0] sm:$0xff]
      %v319 = vld [vmem:[%s239 + $0x1a8] sm:$0xff]
      %v320 = vld [vmem:[%s239 + $0x1b0] sm:$0xff]
      %v321 = vld [vmem:[%s239 + $0x1b8] sm:$0xff]
      %v322 = vld [vmem:[%s239 + $0x1c0] sm:$0xff]
      %v323 = vld [vmem:[%s239 + $0x1c8] sm:$0xff]
      %v324 = vld [vmem:[%s239 + $0x1d0] sm:$0xff]
      %v325 = vld [vmem:[%s239 + $0x1d8] sm:$0xff]
      %v326 = vld [vmem:[%s239 + $0x1e0] sm:$0xff]
      %v327 = vld [vmem:[%s239 + $0x1e8] sm:$0xff]
      %v328 = vld [vmem:[%s239 + $0x1f0] sm:$0xff]
      %v329 = vld [vmem:[%s239 + $0x1f8] sm:$0xff]
      %v330 = vld [vmem:[%s239 + $0x200] sm:$0xff]
      %v331 = vld [vmem:[%s239 + $0x208] sm:$0xff]
      %v332 = vld [vmem:[%s239 + $0x210] sm:$0xff]
      %v333 = vld [vmem:[%s239 + $0x218] sm:$0xff]
      %v334 = vld [vmem:[%s239 + $0x220] sm:$0xff]
      %v335 = vld [vmem:[%s239 + $0x228] sm:$0xff]
      %v336 = vld [vmem:[%s239 + $0x230] sm:$0xff]
      %v337 = vld [vmem:[%s239 + $0x238] sm:$0xff]
      %v338 = vld [vmem:[%s239 + $0x240] sm:$0xff]
      %v339 = vld [vmem:[%s239 + $0x248] sm:$0xff]
      %v340 = vld [vmem:[%s239 + $0x250] sm:$0xff]
      %v341 = vld [vmem:[%s239 + $0x258] sm:$0xff]
      %v342 = vld [vmem:[%s239 + $0x260] sm:$0xff]
      %v343 = vld [vmem:[%s239 + $0x268] sm:$0xff]
      %v344 = vld [vmem:[%s239 + $0x270] sm:$0xff]
      %v345 = vld [vmem:[%s239 + $0x278] sm:$0xff]
      %v346 = vld [vmem:[%s239 + $0x280] sm:$0xff]
      %v347 = vunpack.c.l.bf16 %v266
      %v348 = vunpack.c.h.bf16 %v266
      %v349 = vunpack.c.l.bf16 %v267
      %v350 = vunpack.c.h.bf16 %v267
      %v351 = vunpack.c.l.bf16 %v268
      %v352 = vunpack.c.h.bf16 %v268
      %v353 = vunpack.c.l.bf16 %v269
      %v354 = vunpack.c.h.bf16 %v269
      %v355 = vunpack.c.l.bf16 %v270
      %v356 = vunpack.c.h.bf16 %v270
      %v357 = vunpack.c.l.bf16 %v271
      %v358 = vunpack.c.h.bf16 %v271
      %v359 = vunpack.c.l.bf16 %v272
      %v360 = vunpack.c.h.bf16 %v272
      %v361 = vunpack.c.l.bf16 %v273
      %v362 = vunpack.c.h.bf16 %v273
      %v363 = vunpack.c.l.bf16 %v274
      %v364 = vunpack.c.h.bf16 %v274
      %v365 = vunpack.c.l.bf16 %v275
      %v366 = vunpack.c.h.bf16 %v275
      %v367 = vunpack.c.l.bf16 %v276
      %v368 = vunpack.c.h.bf16 %v276
      %v369 = vunpack.c.l.bf16 %v277
      %v370 = vunpack.c.h.bf16 %v277
      %v371 = vunpack.c.l.bf16 %v278
      %v372 = vunpack.c.h.bf16 %v278
      %v373 = vunpack.c.l.bf16 %v279
      %v374 = vunpack.c.h.bf16 %v279
      %v375 = vunpack.c.l.bf16 %v280
      %v376 = vunpack.c.h.bf16 %v280
      %v377 = vunpack.c.l.bf16 %v281
      %v378 = vunpack.c.h.bf16 %v281
      %v379 = vunpack.c.l.bf16 %v282
      %v380 = vunpack.c.h.bf16 %v282
      %v381 = vunpack.c.l.bf16 %v283
      %v382 = vunpack.c.h.bf16 %v283
      %v383 = vunpack.c.l.bf16 %v284
      %v384 = vunpack.c.h.bf16 %v284
      %v385 = vunpack.c.l.bf16 %v285
      %v386 = vunpack.c.h.bf16 %v285
      %v387 = vunpack.c.l.bf16 %v286
      %v388 = vunpack.c.h.bf16 %v286
      %v389 = vunpack.c.l.bf16 %v287
      %v390 = vunpack.c.h.bf16 %v287
      %v391 = vunpack.c.l.bf16 %v288
      %v392 = vunpack.c.h.bf16 %v288
      %v393 = vunpack.c.l.bf16 %v289
      %v394 = vunpack.c.h.bf16 %v289
      %v395 = vunpack.c.l.bf16 %v290
      %v396 = vunpack.c.h.bf16 %v290
      %v397 = vunpack.c.l.bf16 %v291
      %v398 = vunpack.c.h.bf16 %v291
      %v399 = vunpack.c.l.bf16 %v292
      %v400 = vunpack.c.h.bf16 %v292
      %v401 = vunpack.c.l.bf16 %v293
      %v402 = vunpack.c.h.bf16 %v293
      %v403 = vunpack.c.l.bf16 %v294
      %v404 = vunpack.c.h.bf16 %v294
      %v405 = vunpack.c.l.bf16 %v295
      %v406 = vunpack.c.h.bf16 %v295
      %v407 = vunpack.c.l.bf16 %v296
      %v408 = vunpack.c.h.bf16 %v296
      %v409 = vunpack.c.l.bf16 %v297
      %v410 = vunpack.c.h.bf16 %v297
      %v411 = vunpack.c.l.bf16 %v298
      %v412 = vunpack.c.h.bf16 %v298
      %v413 = vunpack.c.l.bf16 %v299
      %v414 = vunpack.c.h.bf16 %v299
      %v415 = vunpack.c.l.bf16 %v300
      %v416 = vunpack.c.h.bf16 %v300
      %v417 = vunpack.c.l.bf16 %v301
      %v418 = vunpack.c.h.bf16 %v301
      %v419 = vunpack.c.l.bf16 %v302
      %v420 = vunpack.c.h.bf16 %v302
      %v421 = vunpack.c.l.bf16 %v303
      %v422 = vunpack.c.h.bf16 %v303
      %v423 = vunpack.c.l.bf16 %v304
      %v424 = vunpack.c.h.bf16 %v304
      %v425 = vunpack.c.l.bf16 %v305
      %v426 = vunpack.c.h.bf16 %v305
      %v427 = vunpack.c.l.bf16 %v306
      %v428 = vunpack.c.h.bf16 %v306
      %v429 = vunpack.c.l.bf16 %v307
      %v430 = vunpack.c.h.bf16 %v307
      %v431 = vunpack.c.l.bf16 %v308
      %v432 = vunpack.c.h.bf16 %v308
      %v433 = vunpack.c.l.bf16 %v309
      %v434 = vunpack.c.h.bf16 %v309
      %v435 = vunpack.c.l.bf16 %v310
      %v436 = vunpack.c.h.bf16 %v310
      %v437 = vunpack.c.l.bf16 %v311
      %v438 = vunpack.c.h.bf16 %v311
      %v439 = vunpack.c.l.bf16 %v312
      %v440 = vunpack.c.h.bf16 %v312
      %v441 = vunpack.c.l.bf16 %v313
      %v442 = vunpack.c.h.bf16 %v313
      %v443 = vunpack.c.l.bf16 %v314
      %v444 = vunpack.c.h.bf16 %v314
      %v445 = vunpack.c.l.bf16 %v315
      %v446 = vunpack.c.h.bf16 %v315
      %v447 = vunpack.c.l.bf16 %v316
      %v448 = vunpack.c.h.bf16 %v316
      %v449 = vunpack.c.l.bf16 %v317
      %v450 = vunpack.c.h.bf16 %v317
      %v451 = vunpack.c.l.bf16 %v318
      %v452 = vunpack.c.h.bf16 %v318
      %v453 = vunpack.c.l.bf16 %v319
      %v454 = vunpack.c.h.bf16 %v319
      %v455 = vunpack.c.l.bf16 %v320
      %v456 = vunpack.c.h.bf16 %v320
      %v457 = vunpack.c.l.bf16 %v321
      %v458 = vunpack.c.h.bf16 %v321
      %v459 = vunpack.c.l.bf16 %v322
      %v460 = vunpack.c.h.bf16 %v322
      %v461 = vunpack.c.l.bf16 %v323
      %v462 = vunpack.c.h.bf16 %v323
      %v463 = vunpack.c.l.bf16 %v324
      %v464 = vunpack.c.h.bf16 %v324
      %v465 = vunpack.c.l.bf16 %v325
      %v466 = vunpack.c.h.bf16 %v325
      %v467 = vunpack.c.l.bf16 %v326
      %v468 = vunpack.c.h.bf16 %v326
      %v469 = vunpack.c.l.bf16 %v327
      %v470 = vunpack.c.h.bf16 %v327
      %v471 = vunpack.c.l.bf16 %v328
      %v472 = vunpack.c.h.bf16 %v328
      %v473 = vunpack.c.l.bf16 %v329
      %v474 = vunpack.c.h.bf16 %v329
      %v475 = vunpack.c.l.bf16 %v330
      %v476 = vunpack.c.h.bf16 %v330
      %v477 = vunpack.c.l.bf16 %v331
      %v478 = vunpack.c.h.bf16 %v331
      %v479 = vunpack.c.l.bf16 %v332
      %v480 = vunpack.c.h.bf16 %v332
      %v481 = vunpack.c.l.bf16 %v333
      %v482 = vunpack.c.h.bf16 %v333
      %v483 = vunpack.c.l.bf16 %v334
      %v484 = vunpack.c.h.bf16 %v334
      %v485 = vunpack.c.l.bf16 %v335
      %v486 = vunpack.c.h.bf16 %v335
      %v487 = vunpack.c.l.bf16 %v336
      %v488 = vunpack.c.h.bf16 %v336
      %v489 = vunpack.c.l.bf16 %v337
      %v490 = vunpack.c.h.bf16 %v337
      %v491 = vunpack.c.l.bf16 %v338
      %v492 = vunpack.c.h.bf16 %v338
      %v493 = vunpack.c.l.bf16 %v339
      %v494 = vunpack.c.h.bf16 %v339
      %v495 = vunpack.c.l.bf16 %v340
      %v496 = vunpack.c.h.bf16 %v340
      %v497 = vunpack.c.l.bf16 %v341
      %v498 = vunpack.c.h.bf16 %v341
      %v499 = vunpack.c.l.bf16 %v342
      %v500 = vunpack.c.h.bf16 %v342
      %v501 = vunpack.c.l.bf16 %v343
      %v502 = vunpack.c.h.bf16 %v343
      %v503 = vunpack.c.l.bf16 %v344
      %v504 = vunpack.c.h.bf16 %v344
      %v505 = vunpack.c.l.bf16 %v345
      %v506 = vunpack.c.h.bf16 %v345
      %v507 = vunpack.c.l.bf16 %v346
      %v508 = vunpack.c.h.bf16 %v346
      %v509 = vld [vmem:[%s249] sm:$0xff]
      %v510 = vld [vmem:[%s249 + $0x8] sm:$0xff]
      %v511 = vld [vmem:[%s249 + $0x10] sm:$0xff]
      %v512 = vld [vmem:[%s249 + $0x18] sm:$0xff]
      %v513 = vld [vmem:[%s249 + $0x20] sm:$0xff]
      %v514 = vld [vmem:[%s249 + $0x28] sm:$0xff]
      %v515 = vld [vmem:[%s249 + $0x30] sm:$0xff]
      %v516 = vld [vmem:[%s249 + $0x38] sm:$0xff]
      %v517 = vld [vmem:[%s249 + $0x40] sm:$0xff]
      %v518 = vld [vmem:[%s249 + $0x48] sm:$0xff]
      %v519 = vld [vmem:[%s249 + $0x50] sm:$0xff]
      %v520 = vld [vmem:[%s249 + $0x58] sm:$0xff]
      %v521 = vld [vmem:[%s249 + $0x60] sm:$0xff]
      %v522 = vld [vmem:[%s249 + $0x68] sm:$0xff]
      %v523 = vld [vmem:[%s249 + $0x70] sm:$0xff]
      %v524 = vld [vmem:[%s249 + $0x78] sm:$0xff]
      %v525 = vld [vmem:[%s249 + $0x80] sm:$0xff]
      %v526 = vld [vmem:[%s249 + $0x88] sm:$0xff]
      %v527 = vld [vmem:[%s249 + $0x90] sm:$0xff]
      %v528 = vld [vmem:[%s249 + $0x98] sm:$0xff]
      %v529 = vld [vmem:[%s249 + $0xa0] sm:$0xff]
      %v530 = vld [vmem:[%s249 + $0xa8] sm:$0xff]
      %v531 = vld [vmem:[%s249 + $0xb0] sm:$0xff]
      %v532 = vld [vmem:[%s249 + $0xb8] sm:$0xff]
      %v533 = vld [vmem:[%s249 + $0xc0] sm:$0xff]
      %v534 = vld [vmem:[%s249 + $0xc8] sm:$0xff]
      %v535 = vld [vmem:[%s249 + $0xd0] sm:$0xff]
      %v536 = vld [vmem:[%s255] sm:$0xff]
      %v537 = vld [vmem:[%s255 + $0x8] sm:$0xff]
      %vm538 = vcmask 195584
      %v540 = vsel %vm538, %v536, 0
      %v543 = vsel %vm538, %v537, 0
      %545 = vmatpush.msra.mxu0 0.0
      %546 = vmatpush.msra.mxu0 0.0
      %547 = vmatpush.msra.mxu0 0.0
      %548 = vmatpush.msra.mxu0 0.0
      %549 = vmatpush.msra.mxu0 0.0
      %550 = vmatpush.msra.mxu0 0.0
      %551 = vmatpush.msra.mxu0 0.0
      %552 = vmatpush.msra.mxu0 0.0
      %553 = vmatpush.msra.mxu0 0.0
      %554 = vmatpush.msra.mxu0 0.0
      %555 = vmatpush.msra.mxu0 0.0
      %556 = vmatpush.msra.mxu0 0.0
      %557 = vmatpush.msra.mxu0 0.0
      %558 = vmatpush.msra.mxu0 %v455
      %559 = vmatpush.msra.mxu0 %v401
      %560 = vmatpush.msra.mxu0 %v347
      %561 = vmatmul.f32.gmra.mxu0 %v540
      %v562 = vpop.f32.mrf.mxu0
      %v563 = vadd.f32 0.0, %v562
      %564 = vmatmul.f32.gmra.mxu0 %v543
      %v565 = vpop.f32.mrf.mxu0
      %v566 = vadd.f32 0.0, %v565
      %567 = vdwg.mxu0
      %568 = vmatpush.msra.mxu0 0.0
      %569 = vmatpush.msra.mxu0 0.0
      %570 = vmatpush.msra.mxu0 0.0
      %571 = vmatpush.msra.mxu0 0.0
      %572 = vmatpush.msra.mxu0 0.0
      %573 = vmatpush.msra.mxu0 0.0
      %574 = vmatpush.msra.mxu0 0.0
      %575 = vmatpush.msra.mxu0 0.0
      %576 = vmatpush.msra.mxu0 0.0
      %577 = vmatpush.msra.mxu0 0.0
      %578 = vmatpush.msra.mxu0 0.0
      %579 = vmatpush.msra.mxu0 0.0
      %580 = vmatpush.msra.mxu0 0.0
      %581 = vmatpush.msra.mxu0 %v456
      %582 = vmatpush.msra.mxu0 %v402
      %583 = vmatpush.msra.mxu0 %v348
      %584 = vmatmul.f32.gmra.mxu0 %v540
      %v585 = vpop.f32.mrf.mxu0
      %v586 = vadd.f32 0.0, %v585
      %587 = vmatmul.f32.gmra.mxu0 %v543
      %v588 = vpop.f32.mrf.mxu0
      %v589 = vadd.f32 0.0, %v588
      %590 = vdwg.mxu0
      %591 = vmatpush.msra.mxu0 0.0
      %592 = vmatpush.msra.mxu0 0.0
      %593 = vmatpush.msra.mxu0 0.0
      %594 = vmatpush.msra.mxu0 0.0
      %595 = vmatpush.msra.mxu0 0.0
      %596 = vmatpush.msra.mxu0 0.0
      %597 = vmatpush.msra.mxu0 0.0
      %598 = vmatpush.msra.mxu0 0.0
      %599 = vmatpush.msra.mxu0 0.0
      %600 = vmatpush.msra.mxu0 0.0
      %601 = vmatpush.msra.mxu0 0.0
      %602 = vmatpush.msra.mxu0 0.0
      %603 = vmatpush.msra.mxu0 0.0
      %604 = vmatpush.msra.mxu0 %v457
      %605 = vmatpush.msra.mxu0 %v403
      %606 = vmatpush.msra.mxu0 %v349
      %607 = vmatmul.f32.gmra.mxu0 %v540
      %v608 = vpop.f32.mrf.mxu0
      %v609 = vadd.f32 0.0, %v608
      %610 = vmatmul.f32.gmra.mxu0 %v543
      %v611 = vpop.f32.mrf.mxu0
      %v612 = vadd.f32 0.0, %v611
      %613 = vdwg.mxu0
      %614 = vmatpush.msra.mxu0 0.0
      %615 = vmatpush.msra.mxu0 0.0
      %616 = vmatpush.msra.mxu0 0.0
      %617 = vmatpush.msra.mxu0 0.0
      %618 = vmatpush.msra.mxu0 0.0
      %619 = vmatpush.msra.mxu0 0.0
      %620 = vmatpush.msra.mxu0 0.0
      %621 = vmatpush.msra.mxu0 0.0
      %622 = vmatpush.msra.mxu0 0.0
      %623 = vmatpush.msra.mxu0 0.0
      %624 = vmatpush.msra.mxu0 0.0
      %625 = vmatpush.msra.mxu0 0.0
      %626 = vmatpush.msra.mxu0 0.0
      %627 = vmatpush.msra.mxu0 %v458
      %628 = vmatpush.msra.mxu0 %v404
      %629 = vmatpush.msra.mxu0 %v350
      %630 = vmatmul.f32.gmra.mxu0 %v540
      %v631 = vpop.f32.mrf.mxu0
      %v632 = vadd.f32 0.0, %v631
      %633 = vmatmul.f32.gmra.mxu0 %v543
      %v634 = vpop.f32.mrf.mxu0
      %v635 = vadd.f32 0.0, %v634
      %636 = vdwg.mxu0
      %637 = vmatpush.msra.mxu0 0.0
      %638 = vmatpush.msra.mxu0 0.0
      %639 = vmatpush.msra.mxu0 0.0
      %640 = vmatpush.msra.mxu0 0.0
      %641 = vmatpush.msra.mxu0 0.0
      %642 = vmatpush.msra.mxu0 0.0
      %643 = vmatpush.msra.mxu0 0.0
      %644 = vmatpush.msra.mxu0 0.0
      %645 = vmatpush.msra.mxu0 0.0
      %646 = vmatpush.msra.mxu0 0.0
      %647 = vmatpush.msra.mxu0 0.0
      %648 = vmatpush.msra.mxu0 0.0
      %649 = vmatpush.msra.mxu0 0.0
      %650 = vmatpush.msra.mxu0 %v459
      %651 = vmatpush.msra.mxu0 %v405
      %652 = vmatpush.msra.mxu0 %v351
      %653 = vmatmul.f32.gmra.mxu0 %v540
      %v654 = vpop.f32.mrf.mxu0
      %v655 = vadd.f32 0.0, %v654
      %656 = vmatmul.f32.gmra.mxu0 %v543
      %v657 = vpop.f32.mrf.mxu0
      %v658 = vadd.f32 0.0, %v657
      %659 = vdwg.mxu0
      %660 = vmatpush.msra.mxu0 0.0
      %661 = vmatpush.msra.mxu0 0.0
      %662 = vmatpush.msra.mxu0 0.0
      %663 = vmatpush.msra.mxu0 0.0
      %664 = vmatpush.msra.mxu0 0.0
      %665 = vmatpush.msra.mxu0 0.0
      %666 = vmatpush.msra.mxu0 0.0
      %667 = vmatpush.msra.mxu0 0.0
      %668 = vmatpush.msra.mxu0 0.0
      %669 = vmatpush.msra.mxu0 0.0
      %670 = vmatpush.msra.mxu0 0.0
      %671 = vmatpush.msra.mxu0 0.0
      %672 = vmatpush.msra.mxu0 0.0
      %673 = vmatpush.msra.mxu0 %v460
      %674 = vmatpush.msra.mxu0 %v406
      %675 = vmatpush.msra.mxu0 %v352
      %676 = vmatmul.f32.gmra.mxu0 %v540
      %v677 = vpop.f32.mrf.mxu0
      %v678 = vadd.f32 0.0, %v677
      %679 = vmatmul.f32.gmra.mxu0 %v543
      %v680 = vpop.f32.mrf.mxu0
      %v681 = vadd.f32 0.0, %v680
      %682 = vdwg.mxu0
      %683 = vmatpush.msra.mxu0 0.0
      %684 = vmatpush.msra.mxu0 0.0
      %685 = vmatpush.msra.mxu0 0.0
      %686 = vmatpush.msra.mxu0 0.0
      %687 = vmatpush.msra.mxu0 0.0
      %688 = vmatpush.msra.mxu0 0.0
      %689 = vmatpush.msra.mxu0 0.0
      %690 = vmatpush.msra.mxu0 0.0
      %691 = vmatpush.msra.mxu0 0.0
      %692 = vmatpush.msra.mxu0 0.0
      %693 = vmatpush.msra.mxu0 0.0
      %694 = vmatpush.msra.mxu0 0.0
      %695 = vmatpush.msra.mxu0 0.0
      %696 = vmatpush.msra.mxu0 %v461
      %697 = vmatpush.msra.mxu0 %v407
      %698 = vmatpush.msra.mxu0 %v353
      %699 = vmatmul.f32.gmra.mxu0 %v540
      %v700 = vpop.f32.mrf.mxu0
      %v701 = vadd.f32 0.0, %v700
      %702 = vmatmul.f32.gmra.mxu0 %v543
      %v703 = vpop.f32.mrf.mxu0
      %v704 = vadd.f32 0.0, %v703
      %705 = vdwg.mxu0
      %706 = vmatpush.msra.mxu0 0.0
      %707 = vmatpush.msra.mxu0 0.0
      %708 = vmatpush.msra.mxu0 0.0
      %709 = vmatpush.msra.mxu0 0.0
      %710 = vmatpush.msra.mxu0 0.0
      %711 = vmatpush.msra.mxu0 0.0
      %712 = vmatpush.msra.mxu0 0.0
      %713 = vmatpush.msra.mxu0 0.0
      %714 = vmatpush.msra.mxu0 0.0
      %715 = vmatpush.msra.mxu0 0.0
      %716 = vmatpush.msra.mxu0 0.0
      %717 = vmatpush.msra.mxu0 0.0
      %718 = vmatpush.msra.mxu0 0.0
      %719 = vmatpush.msra.mxu0 %v462
      %720 = vmatpush.msra.mxu0 %v408
      %721 = vmatpush.msra.mxu0 %v354
      %722 = vmatmul.f32.gmra.mxu0 %v540
      %v723 = vpop.f32.mrf.mxu0
      %v724 = vadd.f32 0.0, %v723
      %725 = vmatmul.f32.gmra.mxu0 %v543
      %v726 = vpop.f32.mrf.mxu0
      %v727 = vadd.f32 0.0, %v726
      %728 = vdwg.mxu0
      %729 = vmatpush.msra.mxu0 0.0
      %730 = vmatpush.msra.mxu0 0.0
      %731 = vmatpush.msra.mxu0 0.0
      %732 = vmatpush.msra.mxu0 0.0
      %733 = vmatpush.msra.mxu0 0.0
      %734 = vmatpush.msra.mxu0 0.0
      %735 = vmatpush.msra.mxu0 0.0
      %736 = vmatpush.msra.mxu0 0.0
      %737 = vmatpush.msra.mxu0 0.0
      %738 = vmatpush.msra.mxu0 0.0
      %739 = vmatpush.msra.mxu0 0.0
      %740 = vmatpush.msra.mxu0 0.0
      %741 = vmatpush.msra.mxu0 0.0
      %742 = vmatpush.msra.mxu0 %v463
      %743 = vmatpush.msra.mxu0 %v409
      %744 = vmatpush.msra.mxu0 %v355
      %745 = vmatmul.f32.gmra.mxu0 %v540
      %v746 = vpop.f32.mrf.mxu0
      %v747 = vadd.f32 0.0, %v746
      %748 = vmatmul.f32.gmra.mxu0 %v543
      %v749 = vpop.f32.mrf.mxu0
      %v750 = vadd.f32 0.0, %v749
      %751 = vdwg.mxu0
      %752 = vmatpush.msra.mxu0 0.0
      %753 = vmatpush.msra.mxu0 0.0
      %754 = vmatpush.msra.mxu0 0.0
      %755 = vmatpush.msra.mxu0 0.0
      %756 = vmatpush.msra.mxu0 0.0
      %757 = vmatpush.msra.mxu0 0.0
      %758 = vmatpush.msra.mxu0 0.0
      %759 = vmatpush.msra.mxu0 0.0
      %760 = vmatpush.msra.mxu0 0.0
      %761 = vmatpush.msra.mxu0 0.0
      %762 = vmatpush.msra.mxu0 0.0
      %763 = vmatpush.msra.mxu0 0.0
      %764 = vmatpush.msra.mxu0 0.0
      %765 = vmatpush.msra.mxu0 %v464
      %766 = vmatpush.msra.mxu0 %v410
      %767 = vmatpush.msra.mxu0 %v356
      %768 = vmatmul.f32.gmra.mxu0 %v540
      %v769 = vpop.f32.mrf.mxu0
      %v770 = vadd.f32 0.0, %v769
      %771 = vmatmul.f32.gmra.mxu0 %v543
      %v772 = vpop.f32.mrf.mxu0
      %v773 = vadd.f32 0.0, %v772
      %774 = vdwg.mxu0
      %775 = vmatpush.msra.mxu0 0.0
      %776 = vmatpush.msra.mxu0 0.0
      %777 = vmatpush.msra.mxu0 0.0
      %778 = vmatpush.msra.mxu0 0.0
      %779 = vmatpush.msra.mxu0 0.0
      %780 = vmatpush.msra.mxu0 0.0
      %781 = vmatpush.msra.mxu0 0.0
      %782 = vmatpush.msra.mxu0 0.0
      %783 = vmatpush.msra.mxu0 0.0
      %784 = vmatpush.msra.mxu0 0.0
      %785 = vmatpush.msra.mxu0 0.0
      %786 = vmatpush.msra.mxu0 0.0
      %787 = vmatpush.msra.mxu0 0.0
      %788 = vmatpush.msra.mxu0 %v465
      %789 = vmatpush.msra.mxu0 %v411
      %790 = vmatpush.msra.mxu0 %v357
      %791 = vmatmul.f32.gmra.mxu0 %v540
      %v792 = vpop.f32.mrf.mxu0
      %v793 = vadd.f32 0.0, %v792
      %794 = vmatmul.f32.gmra.mxu0 %v543
      %v795 = vpop.f32.mrf.mxu0
      %v796 = vadd.f32 0.0, %v795
      %797 = vdwg.mxu0
      %798 = vmatpush.msra.mxu0 0.0
      %799 = vmatpush.msra.mxu0 0.0
      %800 = vmatpush.msra.mxu0 0.0
      %801 = vmatpush.msra.mxu0 0.0
      %802 = vmatpush.msra.mxu0 0.0
      %803 = vmatpush.msra.mxu0 0.0
      %804 = vmatpush.msra.mxu0 0.0
      %805 = vmatpush.msra.mxu0 0.0
      %806 = vmatpush.msra.mxu0 0.0
      %807 = vmatpush.msra.mxu0 0.0
      %808 = vmatpush.msra.mxu0 0.0
      %809 = vmatpush.msra.mxu0 0.0
      %810 = vmatpush.msra.mxu0 0.0
      %811 = vmatpush.msra.mxu0 %v466
      %812 = vmatpush.msra.mxu0 %v412
      %813 = vmatpush.msra.mxu0 %v358
      %814 = vmatmul.f32.gmra.mxu0 %v540
      %v815 = vpop.f32.mrf.mxu0
      %v816 = vadd.f32 0.0, %v815
      %817 = vmatmul.f32.gmra.mxu0 %v543
      %v818 = vpop.f32.mrf.mxu0
      %v819 = vadd.f32 0.0, %v818
      %820 = vdwg.mxu0
      %821 = vmatpush.msra.mxu0 0.0
      %822 = vmatpush.msra.mxu0 0.0
      %823 = vmatpush.msra.mxu0 0.0
      %824 = vmatpush.msra.mxu0 0.0
      %825 = vmatpush.msra.mxu0 0.0
      %826 = vmatpush.msra.mxu0 0.0
      %827 = vmatpush.msra.mxu0 0.0
      %828 = vmatpush.msra.mxu0 0.0
      %829 = vmatpush.msra.mxu0 0.0
      %830 = vmatpush.msra.mxu0 0.0
      %831 = vmatpush.msra.mxu0 0.0
      %832 = vmatpush.msra.mxu0 0.0
      %833 = vmatpush.msra.mxu0 0.0
      %834 = vmatpush.msra.mxu0 %v467
      %835 = vmatpush.msra.mxu0 %v413
      %836 = vmatpush.msra.mxu0 %v359
      %837 = vmatmul.f32.gmra.mxu0 %v540
      %v838 = vpop.f32.mrf.mxu0
      %v839 = vadd.f32 0.0, %v838
      %840 = vmatmul.f32.gmra.mxu0 %v543
      %v841 = vpop.f32.mrf.mxu0
      %v842 = vadd.f32 0.0, %v841
      %843 = vdwg.mxu0
      %844 = vmatpush.msra.mxu0 0.0
      %845 = vmatpush.msra.mxu0 0.0
      %846 = vmatpush.msra.mxu0 0.0
      %847 = vmatpush.msra.mxu0 0.0
      %848 = vmatpush.msra.mxu0 0.0
      %849 = vmatpush.msra.mxu0 0.0
      %850 = vmatpush.msra.mxu0 0.0
      %851 = vmatpush.msra.mxu0 0.0
      %852 = vmatpush.msra.mxu0 0.0
      %853 = vmatpush.msra.mxu0 0.0
      %854 = vmatpush.msra.mxu0 0.0
      %855 = vmatpush.msra.mxu0 0.0
      %856 = vmatpush.msra.mxu0 0.0
      %857 = vmatpush.msra.mxu0 %v468
      %858 = vmatpush.msra.mxu0 %v414
      %859 = vmatpush.msra.mxu0 %v360
      %860 = vmatmul.f32.gmra.mxu0 %v540
      %v861 = vpop.f32.mrf.mxu0
      %v862 = vadd.f32 0.0, %v861
      %863 = vmatmul.f32.gmra.mxu0 %v543
      %v864 = vpop.f32.mrf.mxu0
      %v865 = vadd.f32 0.0, %v864
      %866 = vdwg.mxu0
      %867 = vmatpush.msra.mxu0 0.0
      %868 = vmatpush.msra.mxu0 0.0
      %869 = vmatpush.msra.mxu0 0.0
      %870 = vmatpush.msra.mxu0 0.0
      %871 = vmatpush.msra.mxu0 0.0
      %872 = vmatpush.msra.mxu0 0.0
      %873 = vmatpush.msra.mxu0 0.0
      %874 = vmatpush.msra.mxu0 0.0
      %875 = vmatpush.msra.mxu0 0.0
      %876 = vmatpush.msra.mxu0 0.0
      %877 = vmatpush.msra.mxu0 0.0
      %878 = vmatpush.msra.mxu0 0.0
      %879 = vmatpush.msra.mxu0 0.0
      %880 = vmatpush.msra.mxu0 %v469
      %881 = vmatpush.msra.mxu0 %v415
      %882 = vmatpush.msra.mxu0 %v361
      %883 = vmatmul.f32.gmra.mxu0 %v540
      %v884 = vpop.f32.mrf.mxu0
      %v885 = vadd.f32 0.0, %v884
      %886 = vmatmul.f32.gmra.mxu0 %v543
      %v887 = vpop.f32.mrf.mxu0
      %v888 = vadd.f32 0.0, %v887
      %889 = vdwg.mxu0
      %890 = vmatpush.msra.mxu0 0.0
      %891 = vmatpush.msra.mxu0 0.0
      %892 = vmatpush.msra.mxu0 0.0
      %893 = vmatpush.msra.mxu0 0.0
      %894 = vmatpush.msra.mxu0 0.0
      %895 = vmatpush.msra.mxu0 0.0
      %896 = vmatpush.msra.mxu0 0.0
      %897 = vmatpush.msra.mxu0 0.0
      %898 = vmatpush.msra.mxu0 0.0
      %899 = vmatpush.msra.mxu0 0.0
      %900 = vmatpush.msra.mxu0 0.0
      %901 = vmatpush.msra.mxu0 0.0
      %902 = vmatpush.msra.mxu0 0.0
      %903 = vmatpush.msra.mxu0 %v470
      %904 = vmatpush.msra.mxu0 %v416
      %905 = vmatpush.msra.mxu0 %v362
      %906 = vmatmul.f32.gmra.mxu0 %v540
      %v907 = vpop.f32.mrf.mxu0
      %v908 = vadd.f32 0.0, %v907
      %909 = vmatmul.f32.gmra.mxu0 %v543
      %v910 = vpop.f32.mrf.mxu0
      %v911 = vadd.f32 0.0, %v910
      %912 = vdwg.mxu0
      %913 = vmatpush.msra.mxu0 0.0
      %914 = vmatpush.msra.mxu0 0.0
      %915 = vmatpush.msra.mxu0 0.0
      %916 = vmatpush.msra.mxu0 0.0
      %917 = vmatpush.msra.mxu0 0.0
      %918 = vmatpush.msra.mxu0 0.0
      %919 = vmatpush.msra.mxu0 0.0
      %920 = vmatpush.msra.mxu0 0.0
      %921 = vmatpush.msra.mxu0 0.0
      %922 = vmatpush.msra.mxu0 0.0
      %923 = vmatpush.msra.mxu0 0.0
      %924 = vmatpush.msra.mxu0 0.0
      %925 = vmatpush.msra.mxu0 0.0
      %926 = vmatpush.msra.mxu0 %v471
      %927 = vmatpush.msra.mxu0 %v417
      %928 = vmatpush.msra.mxu0 %v363
      %929 = vmatmul.f32.gmra.mxu0 %v540
      %v930 = vpop.f32.mrf.mxu0
      %v931 = vadd.f32 0.0, %v930
      %932 = vmatmul.f32.gmra.mxu0 %v543
      %v933 = vpop.f32.mrf.mxu0
      %v934 = vadd.f32 0.0, %v933
      %935 = vdwg.mxu0
      %936 = vmatpush.msra.mxu0 0.0
      %937 = vmatpush.msra.mxu0 0.0
      %938 = vmatpush.msra.mxu0 0.0
      %939 = vmatpush.msra.mxu0 0.0
      %940 = vmatpush.msra.mxu0 0.0
      %941 = vmatpush.msra.mxu0 0.0
      %942 = vmatpush.msra.mxu0 0.0
      %943 = vmatpush.msra.mxu0 0.0
      %944 = vmatpush.msra.mxu0 0.0
      %945 = vmatpush.msra.mxu0 0.0
      %946 = vmatpush.msra.mxu0 0.0
      %947 = vmatpush.msra.mxu0 0.0
      %948 = vmatpush.msra.mxu0 0.0
      %949 = vmatpush.msra.mxu0 %v472
      %950 = vmatpush.msra.mxu0 %v418
      %951 = vmatpush.msra.mxu0 %v364
      %952 = vmatmul.f32.gmra.mxu0 %v540
      %v953 = vpop.f32.mrf.mxu0
      %v954 = vadd.f32 0.0, %v953
      %955 = vmatmul.f32.gmra.mxu0 %v543
      %v956 = vpop.f32.mrf.mxu0
      %v957 = vadd.f32 0.0, %v956
      %958 = vdwg.mxu0
      %959 = vmatpush.msra.mxu0 0.0
      %960 = vmatpush.msra.mxu0 0.0
      %961 = vmatpush.msra.mxu0 0.0
      %962 = vmatpush.msra.mxu0 0.0
      %963 = vmatpush.msra.mxu0 0.0
      %964 = vmatpush.msra.mxu0 0.0
      %965 = vmatpush.msra.mxu0 0.0
      %966 = vmatpush.msra.mxu0 0.0
      %967 = vmatpush.msra.mxu0 0.0
      %968 = vmatpush.msra.mxu0 0.0
      %969 = vmatpush.msra.mxu0 0.0
      %970 = vmatpush.msra.mxu0 0.0
      %971 = vmatpush.msra.mxu0 0.0
      %972 = vmatpush.msra.mxu0 %v473
      %973 = vmatpush.msra.mxu0 %v419
      %974 = vmatpush.msra.mxu0 %v365
      %975 = vmatmul.f32.gmra.mxu0 %v540
      %v976 = vpop.f32.mrf.mxu0
      %v977 = vadd.f32 0.0, %v976
      %978 = vmatmul.f32.gmra.mxu0 %v543
      %v979 = vpop.f32.mrf.mxu0
      %v980 = vadd.f32 0.0, %v979
      %981 = vdwg.mxu0
      %982 = vmatpush.msra.mxu0 0.0
      %983 = vmatpush.msra.mxu0 0.0
      %984 = vmatpush.msra.mxu0 0.0
      %985 = vmatpush.msra.mxu0 0.0
      %986 = vmatpush.msra.mxu0 0.0
      %987 = vmatpush.msra.mxu0 0.0
      %988 = vmatpush.msra.mxu0 0.0
      %989 = vmatpush.msra.mxu0 0.0
      %990 = vmatpush.msra.mxu0 0.0
      %991 = vmatpush.msra.mxu0 0.0
      %992 = vmatpush.msra.mxu0 0.0
      %993 = vmatpush.msra.mxu0 0.0
      %994 = vmatpush.msra.mxu0 0.0
      %995 = vmatpush.msra.mxu0 %v474
      %996 = vmatpush.msra.mxu0 %v420
      %997 = vmatpush.msra.mxu0 %v366
      %998 = vmatmul.f32.gmra.mxu0 %v540
      %v999 = vpop.f32.mrf.mxu0
      %v1000 = vadd.f32 0.0, %v999
      %1001 = vmatmul.f32.gmra.mxu0 %v543
      %v1002 = vpop.f32.mrf.mxu0
      %v1003 = vadd.f32 0.0, %v1002
      %1004 = vdwg.mxu0
      %1005 = vmatpush.msra.mxu0 0.0
      %1006 = vmatpush.msra.mxu0 0.0
      %1007 = vmatpush.msra.mxu0 0.0
      %1008 = vmatpush.msra.mxu0 0.0
      %1009 = vmatpush.msra.mxu0 0.0
      %1010 = vmatpush.msra.mxu0 0.0
      %1011 = vmatpush.msra.mxu0 0.0
      %1012 = vmatpush.msra.mxu0 0.0
      %1013 = vmatpush.msra.mxu0 0.0
      %1014 = vmatpush.msra.mxu0 0.0
      %1015 = vmatpush.msra.mxu0 0.0
      %1016 = vmatpush.msra.mxu0 0.0
      %1017 = vmatpush.msra.mxu0 0.0
      %1018 = vmatpush.msra.mxu0 %v475
      %1019 = vmatpush.msra.mxu0 %v421
      %1020 = vmatpush.msra.mxu0 %v367
      %1021 = vmatmul.f32.gmra.mxu0 %v540
      %v1022 = vpop.f32.mrf.mxu0
      %v1023 = vadd.f32 0.0, %v1022
      %1024 = vmatmul.f32.gmra.mxu0 %v543
      %v1025 = vpop.f32.mrf.mxu0
      %v1026 = vadd.f32 0.0, %v1025
      %1027 = vdwg.mxu0
      %1028 = vmatpush.msra.mxu0 0.0
      %1029 = vmatpush.msra.mxu0 0.0
      %1030 = vmatpush.msra.mxu0 0.0
      %1031 = vmatpush.msra.mxu0 0.0
      %1032 = vmatpush.msra.mxu0 0.0
      %1033 = vmatpush.msra.mxu0 0.0
      %1034 = vmatpush.msra.mxu0 0.0
      %1035 = vmatpush.msra.mxu0 0.0
      %1036 = vmatpush.msra.mxu0 0.0
      %1037 = vmatpush.msra.mxu0 0.0
      %1038 = vmatpush.msra.mxu0 0.0
      %1039 = vmatpush.msra.mxu0 0.0
      %1040 = vmatpush.msra.mxu0 0.0
      %1041 = vmatpush.msra.mxu0 %v476
      %1042 = vmatpush.msra.mxu0 %v422
      %1043 = vmatpush.msra.mxu0 %v368
      %1044 = vmatmul.f32.gmra.mxu0 %v540
      %v1045 = vpop.f32.mrf.mxu0
      %v1046 = vadd.f32 0.0, %v1045
      %1047 = vmatmul.f32.gmra.mxu0 %v543
      %v1048 = vpop.f32.mrf.mxu0
      %v1049 = vadd.f32 0.0, %v1048
      %1050 = vdwg.mxu0
      %1051 = vmatpush.msra.mxu0 0.0
      %1052 = vmatpush.msra.mxu0 0.0
      %1053 = vmatpush.msra.mxu0 0.0
      %1054 = vmatpush.msra.mxu0 0.0
      %1055 = vmatpush.msra.mxu0 0.0
      %1056 = vmatpush.msra.mxu0 0.0
      %1057 = vmatpush.msra.mxu0 0.0
      %1058 = vmatpush.msra.mxu0 0.0
      %1059 = vmatpush.msra.mxu0 0.0
      %1060 = vmatpush.msra.mxu0 0.0
      %1061 = vmatpush.msra.mxu0 0.0
      %1062 = vmatpush.msra.mxu0 0.0
      %1063 = vmatpush.msra.mxu0 0.0
      %1064 = vmatpush.msra.mxu0 %v477
      %1065 = vmatpush.msra.mxu0 %v423
      %1066 = vmatpush.msra.mxu0 %v369
      %1067 = vmatmul.f32.gmra.mxu0 %v540
      %v1068 = vpop.f32.mrf.mxu0
      %v1069 = vadd.f32 0.0, %v1068
      %1070 = vmatmul.f32.gmra.mxu0 %v543
      %v1071 = vpop.f32.mrf.mxu0
      %v1072 = vadd.f32 0.0, %v1071
      %1073 = vdwg.mxu0
      %1074 = vmatpush.msra.mxu0 0.0
      %1075 = vmatpush.msra.mxu0 0.0
      %1076 = vmatpush.msra.mxu0 0.0
      %1077 = vmatpush.msra.mxu0 0.0
      %1078 = vmatpush.msra.mxu0 0.0
      %1079 = vmatpush.msra.mxu0 0.0
      %1080 = vmatpush.msra.mxu0 0.0
      %1081 = vmatpush.msra.mxu0 0.0
      %1082 = vmatpush.msra.mxu0 0.0
      %1083 = vmatpush.msra.mxu0 0.0
      %1084 = vmatpush.msra.mxu0 0.0
      %1085 = vmatpush.msra.mxu0 0.0
      %1086 = vmatpush.msra.mxu0 0.0
      %1087 = vmatpush.msra.mxu0 %v478
      %1088 = vmatpush.msra.mxu0 %v424
      %1089 = vmatpush.msra.mxu0 %v370
      %1090 = vmatmul.f32.gmra.mxu0 %v540
      %v1091 = vpop.f32.mrf.mxu0
      %v1092 = vadd.f32 0.0, %v1091
      %1093 = vmatmul.f32.gmra.mxu0 %v543
      %v1094 = vpop.f32.mrf.mxu0
      %v1095 = vadd.f32 0.0, %v1094
      %1096 = vdwg.mxu0
      %1097 = vmatpush.msra.mxu0 0.0
      %1098 = vmatpush.msra.mxu0 0.0
      %1099 = vmatpush.msra.mxu0 0.0
      %1100 = vmatpush.msra.mxu0 0.0
      %1101 = vmatpush.msra.mxu0 0.0
      %1102 = vmatpush.msra.mxu0 0.0
      %1103 = vmatpush.msra.mxu0 0.0
      %1104 = vmatpush.msra.mxu0 0.0
      %1105 = vmatpush.msra.mxu0 0.0
      %1106 = vmatpush.msra.mxu0 0.0
      %1107 = vmatpush.msra.mxu0 0.0
      %1108 = vmatpush.msra.mxu0 0.0
      %1109 = vmatpush.msra.mxu0 0.0
      %1110 = vmatpush.msra.mxu0 %v479
      %1111 = vmatpush.msra.mxu0 %v425
      %1112 = vmatpush.msra.mxu0 %v371
      %1113 = vmatmul.f32.gmra.mxu0 %v540
      %v1114 = vpop.f32.mrf.mxu0
      %v1115 = vadd.f32 0.0, %v1114
      %1116 = vmatmul.f32.gmra.mxu0 %v543
      %v1117 = vpop.f32.mrf.mxu0
      %v1118 = vadd.f32 0.0, %v1117
      %1119 = vdwg.mxu0
      %1120 = vmatpush.msra.mxu0 0.0
      %1121 = vmatpush.msra.mxu0 0.0
      %1122 = vmatpush.msra.mxu0 0.0
      %1123 = vmatpush.msra.mxu0 0.0
      %1124 = vmatpush.msra.mxu0 0.0
      %1125 = vmatpush.msra.mxu0 0.0
      %1126 = vmatpush.msra.mxu0 0.0
      %1127 = vmatpush.msra.mxu0 0.0
      %1128 = vmatpush.msra.mxu0 0.0
      %1129 = vmatpush.msra.mxu0 0.0
      %1130 = vmatpush.msra.mxu0 0.0
      %1131 = vmatpush.msra.mxu0 0.0
      %1132 = vmatpush.msra.mxu0 0.0
      %1133 = vmatpush.msra.mxu0 %v480
      %1134 = vmatpush.msra.mxu0 %v426
      %1135 = vmatpush.msra.mxu0 %v372
      %1136 = vmatmul.f32.gmra.mxu0 %v540
      %v1137 = vpop.f32.mrf.mxu0
      %v1138 = vadd.f32 0.0, %v1137
      %1139 = vmatmul.f32.gmra.mxu0 %v543
      %v1140 = vpop.f32.mrf.mxu0
      %v1141 = vadd.f32 0.0, %v1140
      %1142 = vdwg.mxu0
      %1143 = vmatpush.msra.mxu0 0.0
      %1144 = vmatpush.msra.mxu0 0.0
      %1145 = vmatpush.msra.mxu0 0.0
      %1146 = vmatpush.msra.mxu0 0.0
      %1147 = vmatpush.msra.mxu0 0.0
      %1148 = vmatpush.msra.mxu0 0.0
      %1149 = vmatpush.msra.mxu0 0.0
      %1150 = vmatpush.msra.mxu0 0.0
      %1151 = vmatpush.msra.mxu0 0.0
      %1152 = vmatpush.msra.mxu0 0.0
      %1153 = vmatpush.msra.mxu0 0.0
      %1154 = vmatpush.msra.mxu0 0.0
      %1155 = vmatpush.msra.mxu0 0.0
      %1156 = vmatpush.msra.mxu0 %v481
      %1157 = vmatpush.msra.mxu0 %v427
      %1158 = vmatpush.msra.mxu0 %v373
      %1159 = vmatmul.f32.gmra.mxu0 %v540
      %v1160 = vpop.f32.mrf.mxu0
      %v1161 = vadd.f32 0.0, %v1160
      %1162 = vmatmul.f32.gmra.mxu0 %v543
      %v1163 = vpop.f32.mrf.mxu0
      %v1164 = vadd.f32 0.0, %v1163
      %1165 = vdwg.mxu0
      %1166 = vmatpush.msra.mxu0 0.0
      %1167 = vmatpush.msra.mxu0 0.0
      %1168 = vmatpush.msra.mxu0 0.0
      %1169 = vmatpush.msra.mxu0 0.0
      %1170 = vmatpush.msra.mxu0 0.0
      %1171 = vmatpush.msra.mxu0 0.0
      %1172 = vmatpush.msra.mxu0 0.0
      %1173 = vmatpush.msra.mxu0 0.0
      %1174 = vmatpush.msra.mxu0 0.0
      %1175 = vmatpush.msra.mxu0 0.0
      %1176 = vmatpush.msra.mxu0 0.0
      %1177 = vmatpush.msra.mxu0 0.0
      %1178 = vmatpush.msra.mxu0 0.0
      %1179 = vmatpush.msra.mxu0 %v482
      %1180 = vmatpush.msra.mxu0 %v428
      %1181 = vmatpush.msra.mxu0 %v374
      %1182 = vmatmul.f32.gmra.mxu0 %v540
      %v1183 = vpop.f32.mrf.mxu0
      %v1184 = vadd.f32 0.0, %v1183
      %1185 = vmatmul.f32.gmra.mxu0 %v543
      %v1186 = vpop.f32.mrf.mxu0
      %v1187 = vadd.f32 0.0, %v1186
      %1188 = vdwg.mxu0
      %1189 = vmatpush.msra.mxu0 0.0
      %1190 = vmatpush.msra.mxu0 0.0
      %1191 = vmatpush.msra.mxu0 0.0
      %1192 = vmatpush.msra.mxu0 0.0
      %1193 = vmatpush.msra.mxu0 0.0
      %1194 = vmatpush.msra.mxu0 0.0
      %1195 = vmatpush.msra.mxu0 0.0
      %1196 = vmatpush.msra.mxu0 0.0
      %1197 = vmatpush.msra.mxu0 0.0
      %1198 = vmatpush.msra.mxu0 0.0
      %1199 = vmatpush.msra.mxu0 0.0
      %1200 = vmatpush.msra.mxu0 0.0
      %1201 = vmatpush.msra.mxu0 0.0
      %1202 = vmatpush.msra.mxu0 %v483
      %1203 = vmatpush.msra.mxu0 %v429
      %1204 = vmatpush.msra.mxu0 %v375
      %1205 = vmatmul.f32.gmra.mxu0 %v540
      %v1206 = vpop.f32.mrf.mxu0
      %v1207 = vadd.f32 0.0, %v1206
      %1208 = vmatmul.f32.gmra.mxu0 %v543
      %v1209 = vpop.f32.mrf.mxu0
      %v1210 = vadd.f32 0.0, %v1209
      %1211 = vdwg.mxu0
      %1212 = vmatpush.msra.mxu0 0.0
      %1213 = vmatpush.msra.mxu0 0.0
      %1214 = vmatpush.msra.mxu0 0.0
      %1215 = vmatpush.msra.mxu0 0.0
      %1216 = vmatpush.msra.mxu0 0.0
      %1217 = vmatpush.msra.mxu0 0.0
      %1218 = vmatpush.msra.mxu0 0.0
      %1219 = vmatpush.msra.mxu0 0.0
      %1220 = vmatpush.msra.mxu0 0.0
      %1221 = vmatpush.msra.mxu0 0.0
      %1222 = vmatpush.msra.mxu0 0.0
      %1223 = vmatpush.msra.mxu0 0.0
      %1224 = vmatpush.msra.mxu0 0.0
      %1225 = vmatpush.msra.mxu0 %v484
      %1226 = vmatpush.msra.mxu0 %v430
      %1227 = vmatpush.msra.mxu0 %v376
      %1228 = vmatmul.f32.gmra.mxu0 %v540
      %v1229 = vpop.f32.mrf.mxu0
      %v1230 = vadd.f32 0.0, %v1229
      %1231 = vmatmul.f32.gmra.mxu0 %v543
      %v1232 = vpop.f32.mrf.mxu0
      %v1233 = vadd.f32 0.0, %v1232
      %1234 = vdwg.mxu0
      %1235 = vmatpush.msra.mxu0 0.0
      %1236 = vmatpush.msra.mxu0 0.0
      %1237 = vmatpush.msra.mxu0 0.0
      %1238 = vmatpush.msra.mxu0 0.0
      %1239 = vmatpush.msra.mxu0 0.0
      %1240 = vmatpush.msra.mxu0 0.0
      %1241 = vmatpush.msra.mxu0 0.0
      %1242 = vmatpush.msra.mxu0 0.0
      %1243 = vmatpush.msra.mxu0 0.0
      %1244 = vmatpush.msra.mxu0 0.0
      %1245 = vmatpush.msra.mxu0 0.0
      %1246 = vmatpush.msra.mxu0 0.0
      %1247 = vmatpush.msra.mxu0 0.0
      %1248 = vmatpush.msra.mxu0 %v485
      %1249 = vmatpush.msra.mxu0 %v431
      %1250 = vmatpush.msra.mxu0 %v377
      %1251 = vmatmul.f32.gmra.mxu0 %v540
      %v1252 = vpop.f32.mrf.mxu0
      %v1253 = vadd.f32 0.0, %v1252
      %1254 = vmatmul.f32.gmra.mxu0 %v543
      %v1255 = vpop.f32.mrf.mxu0
      %v1256 = vadd.f32 0.0, %v1255
      %1257 = vdwg.mxu0
      %1258 = vmatpush.msra.mxu0 0.0
      %1259 = vmatpush.msra.mxu0 0.0
      %1260 = vmatpush.msra.mxu0 0.0
      %1261 = vmatpush.msra.mxu0 0.0
      %1262 = vmatpush.msra.mxu0 0.0
      %1263 = vmatpush.msra.mxu0 0.0
      %1264 = vmatpush.msra.mxu0 0.0
      %1265 = vmatpush.msra.mxu0 0.0
      %1266 = vmatpush.msra.mxu0 0.0
      %1267 = vmatpush.msra.mxu0 0.0
      %1268 = vmatpush.msra.mxu0 0.0
      %1269 = vmatpush.msra.mxu0 0.0
      %1270 = vmatpush.msra.mxu0 0.0
      %1271 = vmatpush.msra.mxu0 %v486
      %1272 = vmatpush.msra.mxu0 %v432
      %1273 = vmatpush.msra.mxu0 %v378
      %1274 = vmatmul.f32.gmra.mxu0 %v540
      %v1275 = vpop.f32.mrf.mxu0
      %v1276 = vadd.f32 0.0, %v1275
      %1277 = vmatmul.f32.gmra.mxu0 %v543
      %v1278 = vpop.f32.mrf.mxu0
      %v1279 = vadd.f32 0.0, %v1278
      %1280 = vdwg.mxu0
      %1281 = vmatpush.msra.mxu0 0.0
      %1282 = vmatpush.msra.mxu0 0.0
      %1283 = vmatpush.msra.mxu0 0.0
      %1284 = vmatpush.msra.mxu0 0.0
      %1285 = vmatpush.msra.mxu0 0.0
      %1286 = vmatpush.msra.mxu0 0.0
      %1287 = vmatpush.msra.mxu0 0.0
      %1288 = vmatpush.msra.mxu0 0.0
      %1289 = vmatpush.msra.mxu0 0.0
      %1290 = vmatpush.msra.mxu0 0.0
      %1291 = vmatpush.msra.mxu0 0.0
      %1292 = vmatpush.msra.mxu0 0.0
      %1293 = vmatpush.msra.mxu0 0.0
      %1294 = vmatpush.msra.mxu0 %v487
      %1295 = vmatpush.msra.mxu0 %v433
      %1296 = vmatpush.msra.mxu0 %v379
      %1297 = vmatmul.f32.gmra.mxu0 %v540
      %v1298 = vpop.f32.mrf.mxu0
      %v1299 = vadd.f32 0.0, %v1298
      %1300 = vmatmul.f32.gmra.mxu0 %v543
      %v1301 = vpop.f32.mrf.mxu0
      %v1302 = vadd.f32 0.0, %v1301
      %1303 = vdwg.mxu0
      %1304 = vmatpush.msra.mxu0 0.0
      %1305 = vmatpush.msra.mxu0 0.0
      %1306 = vmatpush.msra.mxu0 0.0
      %1307 = vmatpush.msra.mxu0 0.0
      %1308 = vmatpush.msra.mxu0 0.0
      %1309 = vmatpush.msra.mxu0 0.0
      %1310 = vmatpush.msra.mxu0 0.0
      %1311 = vmatpush.msra.mxu0 0.0
      %1312 = vmatpush.msra.mxu0 0.0
      %1313 = vmatpush.msra.mxu0 0.0
      %1314 = vmatpush.msra.mxu0 0.0
      %1315 = vmatpush.msra.mxu0 0.0
      %1316 = vmatpush.msra.mxu0 0.0
      %1317 = vmatpush.msra.mxu0 %v488
      %1318 = vmatpush.msra.mxu0 %v434
      %1319 = vmatpush.msra.mxu0 %v380
      %1320 = vmatmul.f32.gmra.mxu0 %v540
      %v1321 = vpop.f32.mrf.mxu0
      %v1322 = vadd.f32 0.0, %v1321
      %1323 = vmatmul.f32.gmra.mxu0 %v543
      %v1324 = vpop.f32.mrf.mxu0
      %v1325 = vadd.f32 0.0, %v1324
      %1326 = vdwg.mxu0
      %1327 = vmatpush.msra.mxu0 0.0
      %1328 = vmatpush.msra.mxu0 0.0
      %1329 = vmatpush.msra.mxu0 0.0
      %1330 = vmatpush.msra.mxu0 0.0
      %1331 = vmatpush.msra.mxu0 0.0
      %1332 = vmatpush.msra.mxu0 0.0
      %1333 = vmatpush.msra.mxu0 0.0
      %1334 = vmatpush.msra.mxu0 0.0
      %1335 = vmatpush.msra.mxu0 0.0
      %1336 = vmatpush.msra.mxu0 0.0
      %1337 = vmatpush.msra.mxu0 0.0
      %1338 = vmatpush.msra.mxu0 0.0
      %1339 = vmatpush.msra.mxu0 0.0
      %1340 = vmatpush.msra.mxu0 %v489
      %1341 = vmatpush.msra.mxu0 %v435
      %1342 = vmatpush.msra.mxu0 %v381
      %1343 = vmatmul.f32.gmra.mxu0 %v540
      %v1344 = vpop.f32.mrf.mxu0
      %v1345 = vadd.f32 0.0, %v1344
      %1346 = vmatmul.f32.gmra.mxu0 %v543
      %v1347 = vpop.f32.mrf.mxu0
      %v1348 = vadd.f32 0.0, %v1347
      %1349 = vdwg.mxu0
      %1350 = vmatpush.msra.mxu0 0.0
      %1351 = vmatpush.msra.mxu0 0.0
      %1352 = vmatpush.msra.mxu0 0.0
      %1353 = vmatpush.msra.mxu0 0.0
      %1354 = vmatpush.msra.mxu0 0.0
      %1355 = vmatpush.msra.mxu0 0.0
      %1356 = vmatpush.msra.mxu0 0.0
      %1357 = vmatpush.msra.mxu0 0.0
      %1358 = vmatpush.msra.mxu0 0.0
      %1359 = vmatpush.msra.mxu0 0.0
      %1360 = vmatpush.msra.mxu0 0.0
      %1361 = vmatpush.msra.mxu0 0.0
      %1362 = vmatpush.msra.mxu0 0.0
      %1363 = vmatpush.msra.mxu0 %v490
      %1364 = vmatpush.msra.mxu0 %v436
      %1365 = vmatpush.msra.mxu0 %v382
      %1366 = vmatmul.f32.gmra.mxu0 %v540
      %v1367 = vpop.f32.mrf.mxu0
      %v1368 = vadd.f32 0.0, %v1367
      %1369 = vmatmul.f32.gmra.mxu0 %v543
      %v1370 = vpop.f32.mrf.mxu0
      %v1371 = vadd.f32 0.0, %v1370
      %1372 = vdwg.mxu0
      %1373 = vmatpush.msra.mxu0 0.0
      %1374 = vmatpush.msra.mxu0 0.0
      %1375 = vmatpush.msra.mxu0 0.0
      %1376 = vmatpush.msra.mxu0 0.0
      %1377 = vmatpush.msra.mxu0 0.0
      %1378 = vmatpush.msra.mxu0 0.0
      %1379 = vmatpush.msra.mxu0 0.0
      %1380 = vmatpush.msra.mxu0 0.0
      %1381 = vmatpush.msra.mxu0 0.0
      %1382 = vmatpush.msra.mxu0 0.0
      %1383 = vmatpush.msra.mxu0 0.0
      %1384 = vmatpush.msra.mxu0 0.0
      %1385 = vmatpush.msra.mxu0 0.0
      %1386 = vmatpush.msra.mxu0 %v491
      %1387 = vmatpush.msra.mxu0 %v437
      %1388 = vmatpush.msra.mxu0 %v383
      %1389 = vmatmul.f32.gmra.mxu0 %v540
      %v1390 = vpop.f32.mrf.mxu0
      %v1391 = vadd.f32 0.0, %v1390
      %1392 = vmatmul.f32.gmra.mxu0 %v543
      %v1393 = vpop.f32.mrf.mxu0
      %v1394 = vadd.f32 0.0, %v1393
      %1395 = vdwg.mxu0
      %1396 = vmatpush.msra.mxu0 0.0
      %1397 = vmatpush.msra.mxu0 0.0
      %1398 = vmatpush.msra.mxu0 0.0
      %1399 = vmatpush.msra.mxu0 0.0
      %1400 = vmatpush.msra.mxu0 0.0
      %1401 = vmatpush.msra.mxu0 0.0
      %1402 = vmatpush.msra.mxu0 0.0
      %1403 = vmatpush.msra.mxu0 0.0
      %1404 = vmatpush.msra.mxu0 0.0
      %1405 = vmatpush.msra.mxu0 0.0
      %1406 = vmatpush.msra.mxu0 0.0
      %1407 = vmatpush.msra.mxu0 0.0
      %1408 = vmatpush.msra.mxu0 0.0
      %1409 = vmatpush.msra.mxu0 %v492
      %1410 = vmatpush.msra.mxu0 %v438
      %1411 = vmatpush.msra.mxu0 %v384
      %1412 = vmatmul.f32.gmra.mxu0 %v540
      %v1413 = vpop.f32.mrf.mxu0
      %v1414 = vadd.f32 0.0, %v1413
      %1415 = vmatmul.f32.gmra.mxu0 %v543
      %v1416 = vpop.f32.mrf.mxu0
      %v1417 = vadd.f32 0.0, %v1416
      %1418 = vdwg.mxu0
      %1419 = vmatpush.msra.mxu0 0.0
      %1420 = vmatpush.msra.mxu0 0.0
      %1421 = vmatpush.msra.mxu0 0.0
      %1422 = vmatpush.msra.mxu0 0.0
      %1423 = vmatpush.msra.mxu0 0.0
      %1424 = vmatpush.msra.mxu0 0.0
      %1425 = vmatpush.msra.mxu0 0.0
      %1426 = vmatpush.msra.mxu0 0.0
      %1427 = vmatpush.msra.mxu0 0.0
      %1428 = vmatpush.msra.mxu0 0.0
      %1429 = vmatpush.msra.mxu0 0.0
      %1430 = vmatpush.msra.mxu0 0.0
      %1431 = vmatpush.msra.mxu0 0.0
      %1432 = vmatpush.msra.mxu0 %v493
      %1433 = vmatpush.msra.mxu0 %v439
      %1434 = vmatpush.msra.mxu0 %v385
      %1435 = vmatmul.f32.gmra.mxu0 %v540
      %v1436 = vpop.f32.mrf.mxu0
      %v1437 = vadd.f32 0.0, %v1436
      %1438 = vmatmul.f32.gmra.mxu0 %v543
      %v1439 = vpop.f32.mrf.mxu0
      %v1440 = vadd.f32 0.0, %v1439
      %1441 = vdwg.mxu0
      %1442 = vmatpush.msra.mxu0 0.0
      %1443 = vmatpush.msra.mxu0 0.0
      %1444 = vmatpush.msra.mxu0 0.0
      %1445 = vmatpush.msra.mxu0 0.0
      %1446 = vmatpush.msra.mxu0 0.0
      %1447 = vmatpush.msra.mxu0 0.0
      %1448 = vmatpush.msra.mxu0 0.0
      %1449 = vmatpush.msra.mxu0 0.0
      %1450 = vmatpush.msra.mxu0 0.0
      %1451 = vmatpush.msra.mxu0 0.0
      %1452 = vmatpush.msra.mxu0 0.0
      %1453 = vmatpush.msra.mxu0 0.0
      %1454 = vmatpush.msra.mxu0 0.0
      %1455 = vmatpush.msra.mxu0 %v494
      %1456 = vmatpush.msra.mxu0 %v440
      %1457 = vmatpush.msra.mxu0 %v386
      %1458 = vmatmul.f32.gmra.mxu0 %v540
      %v1459 = vpop.f32.mrf.mxu0
      %v1460 = vadd.f32 0.0, %v1459
      %1461 = vmatmul.f32.gmra.mxu0 %v543
      %v1462 = vpop.f32.mrf.mxu0
      %v1463 = vadd.f32 0.0, %v1462
      %1464 = vdwg.mxu0
      %1465 = vmatpush.msra.mxu0 0.0
      %1466 = vmatpush.msra.mxu0 0.0
      %1467 = vmatpush.msra.mxu0 0.0
      %1468 = vmatpush.msra.mxu0 0.0
      %1469 = vmatpush.msra.mxu0 0.0
      %1470 = vmatpush.msra.mxu0 0.0
      %1471 = vmatpush.msra.mxu0 0.0
      %1472 = vmatpush.msra.mxu0 0.0
      %1473 = vmatpush.msra.mxu0 0.0
      %1474 = vmatpush.msra.mxu0 0.0
      %1475 = vmatpush.msra.mxu0 0.0
      %1476 = vmatpush.msra.mxu0 0.0
      %1477 = vmatpush.msra.mxu0 0.0
      %1478 = vmatpush.msra.mxu0 %v495
      %1479 = vmatpush.msra.mxu0 %v441
      %1480 = vmatpush.msra.mxu0 %v387
      %1481 = vmatmul.f32.gmra.mxu0 %v540
      %v1482 = vpop.f32.mrf.mxu0
      %v1483 = vadd.f32 0.0, %v1482
      %1484 = vmatmul.f32.gmra.mxu0 %v543
      %v1485 = vpop.f32.mrf.mxu0
      %v1486 = vadd.f32 0.0, %v1485
      %1487 = vdwg.mxu0
      %1488 = vmatpush.msra.mxu0 0.0
      %1489 = vmatpush.msra.mxu0 0.0
      %1490 = vmatpush.msra.mxu0 0.0
      %1491 = vmatpush.msra.mxu0 0.0
      %1492 = vmatpush.msra.mxu0 0.0
      %1493 = vmatpush.msra.mxu0 0.0
      %1494 = vmatpush.msra.mxu0 0.0
      %1495 = vmatpush.msra.mxu0 0.0
      %1496 = vmatpush.msra.mxu0 0.0
      %1497 = vmatpush.msra.mxu0 0.0
      %1498 = vmatpush.msra.mxu0 0.0
      %1499 = vmatpush.msra.mxu0 0.0
      %1500 = vmatpush.msra.mxu0 0.0
      %1501 = vmatpush.msra.mxu0 %v496
      %1502 = vmatpush.msra.mxu0 %v442
      %1503 = vmatpush.msra.mxu0 %v388
      %1504 = vmatmul.f32.gmra.mxu0 %v540
      %v1505 = vpop.f32.mrf.mxu0
      %v1506 = vadd.f32 0.0, %v1505
      %1507 = vmatmul.f32.gmra.mxu0 %v543
      %v1508 = vpop.f32.mrf.mxu0
      %v1509 = vadd.f32 0.0, %v1508
      %1510 = vdwg.mxu0
      %1511 = vmatpush.msra.mxu0 0.0
      %1512 = vmatpush.msra.mxu0 0.0
      %1513 = vmatpush.msra.mxu0 0.0
      %1514 = vmatpush.msra.mxu0 0.0
      %1515 = vmatpush.msra.mxu0 0.0
      %1516 = vmatpush.msra.mxu0 0.0
      %1517 = vmatpush.msra.mxu0 0.0
      %1518 = vmatpush.msra.mxu0 0.0
      %1519 = vmatpush.msra.mxu0 0.0
      %1520 = vmatpush.msra.mxu0 0.0
      %1521 = vmatpush.msra.mxu0 0.0
      %1522 = vmatpush.msra.mxu0 0.0
      %1523 = vmatpush.msra.mxu0 0.0
      %1524 = vmatpush.msra.mxu0 %v497
      %1525 = vmatpush.msra.mxu0 %v443
      %1526 = vmatpush.msra.mxu0 %v389
      %1527 = vmatmul.f32.gmra.mxu0 %v540
      %v1528 = vpop.f32.mrf.mxu0
      %v1529 = vadd.f32 0.0, %v1528
      %1530 = vmatmul.f32.gmra.mxu0 %v543
      %v1531 = vpop.f32.mrf.mxu0
      %v1532 = vadd.f32 0.0, %v1531
      %1533 = vdwg.mxu0
      %1534 = vmatpush.msra.mxu0 0.0
      %1535 = vmatpush.msra.mxu0 0.0
      %1536 = vmatpush.msra.mxu0 0.0
      %1537 = vmatpush.msra.mxu0 0.0
      %1538 = vmatpush.msra.mxu0 0.0
      %1539 = vmatpush.msra.mxu0 0.0
      %1540 = vmatpush.msra.mxu0 0.0
      %1541 = vmatpush.msra.mxu0 0.0
      %1542 = vmatpush.msra.mxu0 0.0
      %1543 = vmatpush.msra.mxu0 0.0
      %1544 = vmatpush.msra.mxu0 0.0
      %1545 = vmatpush.msra.mxu0 0.0
      %1546 = vmatpush.msra.mxu0 0.0
      %1547 = vmatpush.msra.mxu0 %v498
      %1548 = vmatpush.msra.mxu0 %v444
      %1549 = vmatpush.msra.mxu0 %v390
      %1550 = vmatmul.f32.gmra.mxu0 %v540
      %v1551 = vpop.f32.mrf.mxu0
      %v1552 = vadd.f32 0.0, %v1551
      %1553 = vmatmul.f32.gmra.mxu0 %v543
      %v1554 = vpop.f32.mrf.mxu0
      %v1555 = vadd.f32 0.0, %v1554
      %1556 = vdwg.mxu0
      %1557 = vmatpush.msra.mxu0 0.0
      %1558 = vmatpush.msra.mxu0 0.0
      %1559 = vmatpush.msra.mxu0 0.0
      %1560 = vmatpush.msra.mxu0 0.0
      %1561 = vmatpush.msra.mxu0 0.0
      %1562 = vmatpush.msra.mxu0 0.0
      %1563 = vmatpush.msra.mxu0 0.0
      %1564 = vmatpush.msra.mxu0 0.0
      %1565 = vmatpush.msra.mxu0 0.0
      %1566 = vmatpush.msra.mxu0 0.0
      %1567 = vmatpush.msra.mxu0 0.0
      %1568 = vmatpush.msra.mxu0 0.0
      %1569 = vmatpush.msra.mxu0 0.0
      %1570 = vmatpush.msra.mxu0 %v499
      %1571 = vmatpush.msra.mxu0 %v445
      %1572 = vmatpush.msra.mxu0 %v391
      %1573 = vmatmul.f32.gmra.mxu0 %v540
      %v1574 = vpop.f32.mrf.mxu0
      %v1575 = vadd.f32 0.0, %v1574
      %1576 = vmatmul.f32.gmra.mxu0 %v543
      %v1577 = vpop.f32.mrf.mxu0
      %v1578 = vadd.f32 0.0, %v1577
      %1579 = vdwg.mxu0
      %1580 = vmatpush.msra.mxu0 0.0
      %1581 = vmatpush.msra.mxu0 0.0
      %1582 = vmatpush.msra.mxu0 0.0
      %1583 = vmatpush.msra.mxu0 0.0
      %1584 = vmatpush.msra.mxu0 0.0
      %1585 = vmatpush.msra.mxu0 0.0
      %1586 = vmatpush.msra.mxu0 0.0
      %1587 = vmatpush.msra.mxu0 0.0
      %1588 = vmatpush.msra.mxu0 0.0
      %1589 = vmatpush.msra.mxu0 0.0
      %1590 = vmatpush.msra.mxu0 0.0
      %1591 = vmatpush.msra.mxu0 0.0
      %1592 = vmatpush.msra.mxu0 0.0
      %1593 = vmatpush.msra.mxu0 %v500
      %1594 = vmatpush.msra.mxu0 %v446
      %1595 = vmatpush.msra.mxu0 %v392
      %1596 = vmatmul.f32.gmra.mxu0 %v540
      %v1597 = vpop.f32.mrf.mxu0
      %v1598 = vadd.f32 0.0, %v1597
      %1599 = vmatmul.f32.gmra.mxu0 %v543
      %v1600 = vpop.f32.mrf.mxu0
      %v1601 = vadd.f32 0.0, %v1600
      %1602 = vdwg.mxu0
      %1603 = vmatpush.msra.mxu0 0.0
      %1604 = vmatpush.msra.mxu0 0.0
      %1605 = vmatpush.msra.mxu0 0.0
      %1606 = vmatpush.msra.mxu0 0.0
      %1607 = vmatpush.msra.mxu0 0.0
      %1608 = vmatpush.msra.mxu0 0.0
      %1609 = vmatpush.msra.mxu0 0.0
      %1610 = vmatpush.msra.mxu0 0.0
      %1611 = vmatpush.msra.mxu0 0.0
      %1612 = vmatpush.msra.mxu0 0.0
      %1613 = vmatpush.msra.mxu0 0.0
      %1614 = vmatpush.msra.mxu0 0.0
      %1615 = vmatpush.msra.mxu0 0.0
      %1616 = vmatpush.msra.mxu0 %v501
      %1617 = vmatpush.msra.mxu0 %v447
      %1618 = vmatpush.msra.mxu0 %v393
      %1619 = vmatmul.f32.gmra.mxu0 %v540
      %v1620 = vpop.f32.mrf.mxu0
      %v1621 = vadd.f32 0.0, %v1620
      %1622 = vmatmul.f32.gmra.mxu0 %v543
      %v1623 = vpop.f32.mrf.mxu0
      %v1624 = vadd.f32 0.0, %v1623
      %1625 = vdwg.mxu0
      %1626 = vmatpush.msra.mxu0 0.0
      %1627 = vmatpush.msra.mxu0 0.0
      %1628 = vmatpush.msra.mxu0 0.0
      %1629 = vmatpush.msra.mxu0 0.0
      %1630 = vmatpush.msra.mxu0 0.0
      %1631 = vmatpush.msra.mxu0 0.0
      %1632 = vmatpush.msra.mxu0 0.0
      %1633 = vmatpush.msra.mxu0 0.0
      %1634 = vmatpush.msra.mxu0 0.0
      %1635 = vmatpush.msra.mxu0 0.0
      %1636 = vmatpush.msra.mxu0 0.0
      %1637 = vmatpush.msra.mxu0 0.0
      %1638 = vmatpush.msra.mxu0 0.0
      %1639 = vmatpush.msra.mxu0 %v502
      %1640 = vmatpush.msra.mxu0 %v448
      %1641 = vmatpush.msra.mxu0 %v394
      %1642 = vmatmul.f32.gmra.mxu0 %v540
      %v1643 = vpop.f32.mrf.mxu0
      %v1644 = vadd.f32 0.0, %v1643
      %1645 = vmatmul.f32.gmra.mxu0 %v543
      %v1646 = vpop.f32.mrf.mxu0
      %v1647 = vadd.f32 0.0, %v1646
      %1648 = vdwg.mxu0
      %1649 = vmatpush.msra.mxu0 0.0
      %1650 = vmatpush.msra.mxu0 0.0
      %1651 = vmatpush.msra.mxu0 0.0
      %1652 = vmatpush.msra.mxu0 0.0
      %1653 = vmatpush.msra.mxu0 0.0
      %1654 = vmatpush.msra.mxu0 0.0
      %1655 = vmatpush.msra.mxu0 0.0
      %1656 = vmatpush.msra.mxu0 0.0
      %1657 = vmatpush.msra.mxu0 0.0
      %1658 = vmatpush.msra.mxu0 0.0
      %1659 = vmatpush.msra.mxu0 0.0
      %1660 = vmatpush.msra.mxu0 0.0
      %1661 = vmatpush.msra.mxu0 0.0
      %1662 = vmatpush.msra.mxu0 %v503
      %1663 = vmatpush.msra.mxu0 %v449
      %1664 = vmatpush.msra.mxu0 %v395
      %1665 = vmatmul.f32.gmra.mxu0 %v540
      %v1666 = vpop.f32.mrf.mxu0
      %v1667 = vadd.f32 0.0, %v1666
      %1668 = vmatmul.f32.gmra.mxu0 %v543
      %v1669 = vpop.f32.mrf.mxu0
      %v1670 = vadd.f32 0.0, %v1669
      %1671 = vdwg.mxu0
      %1672 = vmatpush.msra.mxu0 0.0
      %1673 = vmatpush.msra.mxu0 0.0
      %1674 = vmatpush.msra.mxu0 0.0
      %1675 = vmatpush.msra.mxu0 0.0
      %1676 = vmatpush.msra.mxu0 0.0
      %1677 = vmatpush.msra.mxu0 0.0
      %1678 = vmatpush.msra.mxu0 0.0
      %1679 = vmatpush.msra.mxu0 0.0
      %1680 = vmatpush.msra.mxu0 0.0
      %1681 = vmatpush.msra.mxu0 0.0
      %1682 = vmatpush.msra.mxu0 0.0
      %1683 = vmatpush.msra.mxu0 0.0
      %1684 = vmatpush.msra.mxu0 0.0
      %1685 = vmatpush.msra.mxu0 %v504
      %1686 = vmatpush.msra.mxu0 %v450
      %1687 = vmatpush.msra.mxu0 %v396
      %1688 = vmatmul.f32.gmra.mxu0 %v540
      %v1689 = vpop.f32.mrf.mxu0
      %v1690 = vadd.f32 0.0, %v1689
      %1691 = vmatmul.f32.gmra.mxu0 %v543
      %v1692 = vpop.f32.mrf.mxu0
      %v1693 = vadd.f32 0.0, %v1692
      %1694 = vdwg.mxu0
      %1695 = vmatpush.msra.mxu0 0.0
      %1696 = vmatpush.msra.mxu0 0.0
      %1697 = vmatpush.msra.mxu0 0.0
      %1698 = vmatpush.msra.mxu0 0.0
      %1699 = vmatpush.msra.mxu0 0.0
      %1700 = vmatpush.msra.mxu0 0.0
      %1701 = vmatpush.msra.mxu0 0.0
      %1702 = vmatpush.msra.mxu0 0.0
      %1703 = vmatpush.msra.mxu0 0.0
      %1704 = vmatpush.msra.mxu0 0.0
      %1705 = vmatpush.msra.mxu0 0.0
      %1706 = vmatpush.msra.mxu0 0.0
      %1707 = vmatpush.msra.mxu0 0.0
      %1708 = vmatpush.msra.mxu0 %v505
      %1709 = vmatpush.msra.mxu0 %v451
      %1710 = vmatpush.msra.mxu0 %v397
      %1711 = vmatmul.f32.gmra.mxu0 %v540
      %v1712 = vpop.f32.mrf.mxu0
      %v1713 = vadd.f32 0.0, %v1712
      %1714 = vmatmul.f32.gmra.mxu0 %v543
      %v1715 = vpop.f32.mrf.mxu0
      %v1716 = vadd.f32 0.0, %v1715
      %1717 = vdwg.mxu0
      %1718 = vmatpush.msra.mxu0 0.0
      %1719 = vmatpush.msra.mxu0 0.0
      %1720 = vmatpush.msra.mxu0 0.0
      %1721 = vmatpush.msra.mxu0 0.0
      %1722 = vmatpush.msra.mxu0 0.0
      %1723 = vmatpush.msra.mxu0 0.0
      %1724 = vmatpush.msra.mxu0 0.0
      %1725 = vmatpush.msra.mxu0 0.0
      %1726 = vmatpush.msra.mxu0 0.0
      %1727 = vmatpush.msra.mxu0 0.0
      %1728 = vmatpush.msra.mxu0 0.0
      %1729 = vmatpush.msra.mxu0 0.0
      %1730 = vmatpush.msra.mxu0 0.0
      %1731 = vmatpush.msra.mxu0 %v506
      %1732 = vmatpush.msra.mxu0 %v452
      %1733 = vmatpush.msra.mxu0 %v398
      %1734 = vmatmul.f32.gmra.mxu0 %v540
      %v1735 = vpop.f32.mrf.mxu0
      %v1736 = vadd.f32 0.0, %v1735
      %1737 = vmatmul.f32.gmra.mxu0 %v543
      %v1738 = vpop.f32.mrf.mxu0
      %v1739 = vadd.f32 0.0, %v1738
      %1740 = vdwg.mxu0
      %1741 = vmatpush.msra.mxu0 0.0
      %1742 = vmatpush.msra.mxu0 0.0
      %1743 = vmatpush.msra.mxu0 0.0
      %1744 = vmatpush.msra.mxu0 0.0
      %1745 = vmatpush.msra.mxu0 0.0
      %1746 = vmatpush.msra.mxu0 0.0
      %1747 = vmatpush.msra.mxu0 0.0
      %1748 = vmatpush.msra.mxu0 0.0
      %1749 = vmatpush.msra.mxu0 0.0
      %1750 = vmatpush.msra.mxu0 0.0
      %1751 = vmatpush.msra.mxu0 0.0
      %1752 = vmatpush.msra.mxu0 0.0
      %1753 = vmatpush.msra.mxu0 0.0
      %1754 = vmatpush.msra.mxu0 %v507
      %1755 = vmatpush.msra.mxu0 %v453
      %1756 = vmatpush.msra.mxu0 %v399
      %1757 = vmatmul.f32.gmra.mxu0 %v540
      %v1758 = vpop.f32.mrf.mxu0
      %v1759 = vadd.f32 0.0, %v1758
      %1760 = vmatmul.f32.gmra.mxu0 %v543
      %v1761 = vpop.f32.mrf.mxu0
      %v1762 = vadd.f32 0.0, %v1761
      %1763 = vdwg.mxu0
      %1764 = vmatpush.msra.mxu0 0.0
      %1765 = vmatpush.msra.mxu0 0.0
      %1766 = vmatpush.msra.mxu0 0.0
      %1767 = vmatpush.msra.mxu0 0.0
      %1768 = vmatpush.msra.mxu0 0.0
      %1769 = vmatpush.msra.mxu0 0.0
      %1770 = vmatpush.msra.mxu0 0.0
      %1771 = vmatpush.msra.mxu0 0.0
      %1772 = vmatpush.msra.mxu0 0.0
      %1773 = vmatpush.msra.mxu0 0.0
      %1774 = vmatpush.msra.mxu0 0.0
      %1775 = vmatpush.msra.mxu0 0.0
      %1776 = vmatpush.msra.mxu0 0.0
      %1777 = vmatpush.msra.mxu0 %v508
      %1778 = vmatpush.msra.mxu0 %v454
      %1779 = vmatpush.msra.mxu0 %v400
      %1780 = vmatmul.f32.gmra.mxu0 %v540
      %v1781 = vpop.f32.mrf.mxu0
      %v1782 = vadd.f32 0.0, %v1781
      %1783 = vmatmul.f32.gmra.mxu0 %v543
      %v1784 = vpop.f32.mrf.mxu0
      %v1785 = vadd.f32 0.0, %v1784
      %1786 = vdwg.mxu0
      %v1814 = vperm.slane %v509, 0
      %v1815 = vperm.slane %v509, 4
      %v1816 = vperm.slane %v510, 0
      %v1817 = vperm.slane %v510, 4
      %v1818 = vperm.slane %v511, 0
      %v1819 = vperm.slane %v511, 4
      %v1820 = vperm.slane %v512, 0
      %v1821 = vperm.slane %v512, 4
      %v1822 = vperm.slane %v513, 0
      %v1823 = vperm.slane %v513, 4
      %v1824 = vperm.slane %v514, 0
      %v1825 = vperm.slane %v514, 4
      %v1826 = vperm.slane %v515, 0
      %v1827 = vperm.slane %v515, 4
      %v1828 = vperm.slane %v516, 0
      %v1829 = vperm.slane %v516, 4
      %v1830 = vperm.slane %v517, 0
      %v1831 = vperm.slane %v517, 4
      %v1832 = vperm.slane %v518, 0
      %v1833 = vperm.slane %v518, 4
      %v1834 = vperm.slane %v519, 0
      %v1835 = vperm.slane %v519, 4
      %v1836 = vperm.slane %v520, 0
      %v1837 = vperm.slane %v520, 4
      %v1838 = vperm.slane %v521, 0
      %v1839 = vperm.slane %v521, 4
      %v1840 = vperm.slane %v522, 0
      %v1841 = vperm.slane %v522, 4
      %v1842 = vperm.slane %v523, 0
      %v1843 = vperm.slane %v523, 4
      %v1844 = vperm.slane %v524, 0
      %v1845 = vperm.slane %v524, 4
      %v1846 = vperm.slane %v525, 0
      %v1847 = vperm.slane %v525, 4
      %v1848 = vperm.slane %v526, 0
      %v1849 = vperm.slane %v526, 4
      %v1850 = vperm.slane %v527, 0
      %v1851 = vperm.slane %v527, 4
      %v1852 = vperm.slane %v528, 0
      %v1853 = vperm.slane %v528, 4
      %v1854 = vperm.slane %v529, 0
      %v1855 = vperm.slane %v529, 4
      %v1856 = vperm.slane %v530, 0
      %v1857 = vperm.slane %v530, 4
      %v1858 = vperm.slane %v531, 0
      %v1859 = vperm.slane %v531, 4
      %v1860 = vperm.slane %v532, 0
      %v1861 = vperm.slane %v532, 4
      %v1862 = vperm.slane %v533, 0
      %v1863 = vperm.slane %v533, 4
      %v1864 = vperm.slane %v534, 0
      %v1865 = vperm.slane %v534, 4
      %v1866 = vperm.slane %v535, 0
      %v1867 = vperm.slane %v535, 4
      %v1922 = vmul.f32 %v563, %v1814
      %v1923 = vmul.f32 %v586, %v1815
      %v1924 = vmul.f32 %v609, %v1816
      %v1925 = vmul.f32 %v632, %v1817
      %v1926 = vmul.f32 %v655, %v1818
      %v1927 = vmul.f32 %v678, %v1819
      %v1928 = vmul.f32 %v701, %v1820
      %v1929 = vmul.f32 %v724, %v1821
      %v1930 = vmul.f32 %v747, %v1822
      %v1931 = vmul.f32 %v770, %v1823
      %v1932 = vmul.f32 %v793, %v1824
      %v1933 = vmul.f32 %v816, %v1825
      %v1934 = vmul.f32 %v839, %v1826
      %v1935 = vmul.f32 %v862, %v1827
      %v1936 = vmul.f32 %v885, %v1828
      %v1937 = vmul.f32 %v908, %v1829
      %v1938 = vmul.f32 %v931, %v1830
      %v1939 = vmul.f32 %v954, %v1831
      %v1940 = vmul.f32 %v977, %v1832
      %v1941 = vmul.f32 %v1000, %v1833
      %v1942 = vmul.f32 %v1023, %v1834
      %v1943 = vmul.f32 %v1046, %v1835
      %v1944 = vmul.f32 %v1069, %v1836
      %v1945 = vmul.f32 %v1092, %v1837
      %v1946 = vmul.f32 %v1115, %v1838
      %v1947 = vmul.f32 %v1138, %v1839
      %v1948 = vmul.f32 %v1161, %v1840
      %v1949 = vmul.f32 %v1184, %v1841
      %v1950 = vmul.f32 %v1207, %v1842
      %v1951 = vmul.f32 %v1230, %v1843
      %v1952 = vmul.f32 %v1253, %v1844
      %v1953 = vmul.f32 %v1276, %v1845
      %v1954 = vmul.f32 %v1299, %v1846
      %v1955 = vmul.f32 %v1322, %v1847
      %v1956 = vmul.f32 %v1345, %v1848
      %v1957 = vmul.f32 %v1368, %v1849
      %v1958 = vmul.f32 %v1391, %v1850
      %v1959 = vmul.f32 %v1414, %v1851
      %v1960 = vmul.f32 %v1437, %v1852
      %v1961 = vmul.f32 %v1460, %v1853
      %v1962 = vmul.f32 %v1483, %v1854
      %v1963 = vmul.f32 %v1506, %v1855
      %v1964 = vmul.f32 %v1529, %v1856
      %v1965 = vmul.f32 %v1552, %v1857
      %v1966 = vmul.f32 %v1575, %v1858
      %v1967 = vmul.f32 %v1598, %v1859
      %v1968 = vmul.f32 %v1621, %v1860
      %v1969 = vmul.f32 %v1644, %v1861
      %v1970 = vmul.f32 %v1667, %v1862
      %v1971 = vmul.f32 %v1690, %v1863
      %v1972 = vmul.f32 %v1713, %v1864
      %v1973 = vmul.f32 %v1736, %v1865
      %v1974 = vmul.f32 %v1759, %v1866
      %v1975 = vmul.f32 %v1782, %v1867
      %v1976 = vperm.slane %v509, 1
      %v1977 = vperm.slane %v509, 5
      %v1978 = vperm.slane %v510, 1
      %v1979 = vperm.slane %v510, 5
      %v1980 = vperm.slane %v511, 1
      %v1981 = vperm.slane %v511, 5
      %v1982 = vperm.slane %v512, 1
      %v1983 = vperm.slane %v512, 5
      %v1984 = vperm.slane %v513, 1
      %v1985 = vperm.slane %v513, 5
      %v1986 = vperm.slane %v514, 1
      %v1987 = vperm.slane %v514, 5
      %v1988 = vperm.slane %v515, 1
      %v1989 = vperm.slane %v515, 5
      %v1990 = vperm.slane %v516, 1
      %v1991 = vperm.slane %v516, 5
      %v1992 = vperm.slane %v517, 1
      %v1993 = vperm.slane %v517, 5
      %v1994 = vperm.slane %v518, 1
      %v1995 = vperm.slane %v518, 5
      %v1996 = vperm.slane %v519, 1
      %v1997 = vperm.slane %v519, 5
      %v1998 = vperm.slane %v520, 1
      %v1999 = vperm.slane %v520, 5
      %v2000 = vperm.slane %v521, 1
      %v2001 = vperm.slane %v521, 5
      %v2002 = vperm.slane %v522, 1
      %v2003 = vperm.slane %v522, 5
      %v2004 = vperm.slane %v523, 1
      %v2005 = vperm.slane %v523, 5
      %v2006 = vperm.slane %v524, 1
      %v2007 = vperm.slane %v524, 5
      %v2008 = vperm.slane %v525, 1
      %v2009 = vperm.slane %v525, 5
      %v2010 = vperm.slane %v526, 1
      %v2011 = vperm.slane %v526, 5
      %v2012 = vperm.slane %v527, 1
      %v2013 = vperm.slane %v527, 5
      %v2014 = vperm.slane %v528, 1
      %v2015 = vperm.slane %v528, 5
      %v2016 = vperm.slane %v529, 1
      %v2017 = vperm.slane %v529, 5
      %v2018 = vperm.slane %v530, 1
      %v2019 = vperm.slane %v530, 5
      %v2020 = vperm.slane %v531, 1
      %v2021 = vperm.slane %v531, 5
      %v2022 = vperm.slane %v532, 1
      %v2023 = vperm.slane %v532, 5
      %v2024 = vperm.slane %v533, 1
      %v2025 = vperm.slane %v533, 5
      %v2026 = vperm.slane %v534, 1
      %v2027 = vperm.slane %v534, 5
      %v2028 = vperm.slane %v535, 1
      %v2029 = vperm.slane %v535, 5
      %v2084 = vmul.f32 %v563, %v1976
      %v2085 = vmul.f32 %v586, %v1977
      %v2086 = vmul.f32 %v609, %v1978
      %v2087 = vmul.f32 %v632, %v1979
      %v2088 = vmul.f32 %v655, %v1980
      %v2089 = vmul.f32 %v678, %v1981
      %v2090 = vmul.f32 %v701, %v1982
      %v2091 = vmul.f32 %v724, %v1983
      %v2092 = vmul.f32 %v747, %v1984
      %v2093 = vmul.f32 %v770, %v1985
      %v2094 = vmul.f32 %v793, %v1986
      %v2095 = vmul.f32 %v816, %v1987
      %v2096 = vmul.f32 %v839, %v1988
      %v2097 = vmul.f32 %v862, %v1989
      %v2098 = vmul.f32 %v885, %v1990
      %v2099 = vmul.f32 %v908, %v1991
      %v2100 = vmul.f32 %v931, %v1992
      %v2101 = vmul.f32 %v954, %v1993
      %v2102 = vmul.f32 %v977, %v1994
      %v2103 = vmul.f32 %v1000, %v1995
      %v2104 = vmul.f32 %v1023, %v1996
      %v2105 = vmul.f32 %v1046, %v1997
      %v2106 = vmul.f32 %v1069, %v1998
      %v2107 = vmul.f32 %v1092, %v1999
      %v2108 = vmul.f32 %v1115, %v2000
      %v2109 = vmul.f32 %v1138, %v2001
      %v2110 = vmul.f32 %v1161, %v2002
      %v2111 = vmul.f32 %v1184, %v2003
      %v2112 = vmul.f32 %v1207, %v2004
      %v2113 = vmul.f32 %v1230, %v2005
      %v2114 = vmul.f32 %v1253, %v2006
      %v2115 = vmul.f32 %v1276, %v2007
      %v2116 = vmul.f32 %v1299, %v2008
      %v2117 = vmul.f32 %v1322, %v2009
      %v2118 = vmul.f32 %v1345, %v2010
      %v2119 = vmul.f32 %v1368, %v2011
      %v2120 = vmul.f32 %v1391, %v2012
      %v2121 = vmul.f32 %v1414, %v2013
      %v2122 = vmul.f32 %v1437, %v2014
      %v2123 = vmul.f32 %v1460, %v2015
      %v2124 = vmul.f32 %v1483, %v2016
      %v2125 = vmul.f32 %v1506, %v2017
      %v2126 = vmul.f32 %v1529, %v2018
      %v2127 = vmul.f32 %v1552, %v2019
      %v2128 = vmul.f32 %v1575, %v2020
      %v2129 = vmul.f32 %v1598, %v2021
      %v2130 = vmul.f32 %v1621, %v2022
      %v2131 = vmul.f32 %v1644, %v2023
      %v2132 = vmul.f32 %v1667, %v2024
      %v2133 = vmul.f32 %v1690, %v2025
      %v2134 = vmul.f32 %v1713, %v2026
      %v2135 = vmul.f32 %v1736, %v2027
      %v2136 = vmul.f32 %v1759, %v2028
      %v2137 = vmul.f32 %v1782, %v2029
      %v2192 = vrot.slane %v2084, 1
      %v2193 = vrot.slane %v2085, 1
      %v2194 = vrot.slane %v2086, 1
      %v2195 = vrot.slane %v2087, 1
      %v2196 = vrot.slane %v2088, 1
      %v2197 = vrot.slane %v2089, 1
      %v2198 = vrot.slane %v2090, 1
      %v2199 = vrot.slane %v2091, 1
      %v2200 = vrot.slane %v2092, 1
      %v2201 = vrot.slane %v2093, 1
      %v2202 = vrot.slane %v2094, 1
      %v2203 = vrot.slane %v2095, 1
      %v2204 = vrot.slane %v2096, 1
      %v2205 = vrot.slane %v2097, 1
      %v2206 = vrot.slane %v2098, 1
      %v2207 = vrot.slane %v2099, 1
      %v2208 = vrot.slane %v2100, 1
      %v2209 = vrot.slane %v2101, 1
      %v2210 = vrot.slane %v2102, 1
      %v2211 = vrot.slane %v2103, 1
      %v2212 = vrot.slane %v2104, 1
      %v2213 = vrot.slane %v2105, 1
      %v2214 = vrot.slane %v2106, 1
      %v2215 = vrot.slane %v2107, 1
      %v2216 = vrot.slane %v2108, 1
      %v2217 = vrot.slane %v2109, 1
      %v2218 = vrot.slane %v2110, 1
      %v2219 = vrot.slane %v2111, 1
      %v2220 = vrot.slane %v2112, 1
      %v2221 = vrot.slane %v2113, 1
      %v2222 = vrot.slane %v2114, 1
      %v2223 = vrot.slane %v2115, 1
      %v2224 = vrot.slane %v2116, 1
      %v2225 = vrot.slane %v2117, 1
      %v2226 = vrot.slane %v2118, 1
      %v2227 = vrot.slane %v2119, 1
      %v2228 = vrot.slane %v2120, 1
      %v2229 = vrot.slane %v2121, 1
      %v2230 = vrot.slane %v2122, 1
      %v2231 = vrot.slane %v2123, 1
      %v2232 = vrot.slane %v2124, 1
      %v2233 = vrot.slane %v2125, 1
      %v2234 = vrot.slane %v2126, 1
      %v2235 = vrot.slane %v2127, 1
      %v2236 = vrot.slane %v2128, 1
      %v2237 = vrot.slane %v2129, 1
      %v2238 = vrot.slane %v2130, 1
      %v2239 = vrot.slane %v2131, 1
      %v2240 = vrot.slane %v2132, 1
      %v2241 = vrot.slane %v2133, 1
      %v2242 = vrot.slane %v2134, 1
      %v2243 = vrot.slane %v2135, 1
      %v2244 = vrot.slane %v2136, 1
      %v2245 = vrot.slane %v2137, 1
      %v2300 = vadd.f32 %v1922, %v2192
      %v2301 = vadd.f32 %v1923, %v2193
      %v2302 = vadd.f32 %v1924, %v2194
      %v2303 = vadd.f32 %v1925, %v2195
      %v2304 = vadd.f32 %v1926, %v2196
      %v2305 = vadd.f32 %v1927, %v2197
      %v2306 = vadd.f32 %v1928, %v2198
      %v2307 = vadd.f32 %v1929, %v2199
      %v2308 = vadd.f32 %v1930, %v2200
      %v2309 = vadd.f32 %v1931, %v2201
      %v2310 = vadd.f32 %v1932, %v2202
      %v2311 = vadd.f32 %v1933, %v2203
      %v2312 = vadd.f32 %v1934, %v2204
      %v2313 = vadd.f32 %v1935, %v2205
      %v2314 = vadd.f32 %v1936, %v2206
      %v2315 = vadd.f32 %v1937, %v2207
      %v2316 = vadd.f32 %v1938, %v2208
      %v2317 = vadd.f32 %v1939, %v2209
      %v2318 = vadd.f32 %v1940, %v2210
      %v2319 = vadd.f32 %v1941, %v2211
      %v2320 = vadd.f32 %v1942, %v2212
      %v2321 = vadd.f32 %v1943, %v2213
      %v2322 = vadd.f32 %v1944, %v2214
      %v2323 = vadd.f32 %v1945, %v2215
      %v2324 = vadd.f32 %v1946, %v2216
      %v2325 = vadd.f32 %v1947, %v2217
      %v2326 = vadd.f32 %v1948, %v2218
      %v2327 = vadd.f32 %v1949, %v2219
      %v2328 = vadd.f32 %v1950, %v2220
      %v2329 = vadd.f32 %v1951, %v2221
      %v2330 = vadd.f32 %v1952, %v2222
      %v2331 = vadd.f32 %v1953, %v2223
      %v2332 = vadd.f32 %v1954, %v2224
      %v2333 = vadd.f32 %v1955, %v2225
      %v2334 = vadd.f32 %v1956, %v2226
      %v2335 = vadd.f32 %v1957, %v2227
      %v2336 = vadd.f32 %v1958, %v2228
      %v2337 = vadd.f32 %v1959, %v2229
      %v2338 = vadd.f32 %v1960, %v2230
      %v2339 = vadd.f32 %v1961, %v2231
      %v2340 = vadd.f32 %v1962, %v2232
      %v2341 = vadd.f32 %v1963, %v2233
      %v2342 = vadd.f32 %v1964, %v2234
      %v2343 = vadd.f32 %v1965, %v2235
      %v2344 = vadd.f32 %v1966, %v2236
      %v2345 = vadd.f32 %v1967, %v2237
      %v2346 = vadd.f32 %v1968, %v2238
      %v2347 = vadd.f32 %v1969, %v2239
      %v2348 = vadd.f32 %v1970, %v2240
      %v2349 = vadd.f32 %v1971, %v2241
      %v2350 = vadd.f32 %v1972, %v2242
      %v2351 = vadd.f32 %v1973, %v2243
      %v2352 = vadd.f32 %v1974, %v2244
      %v2353 = vadd.f32 %v1975, %v2245
      %v2354 = vperm.slane %v509, 2
      %v2355 = vperm.slane %v509, 6
      %v2356 = vperm.slane %v510, 2
      %v2357 = vperm.slane %v510, 6
      %v2358 = vperm.slane %v511, 2
      %v2359 = vperm.slane %v511, 6
      %v2360 = vperm.slane %v512, 2
      %v2361 = vperm.slane %v512, 6
      %v2362 = vperm.slane %v513, 2
      %v2363 = vperm.slane %v513, 6
      %v2364 = vperm.slane %v514, 2
      %v2365 = vperm.slane %v514, 6
      %v2366 = vperm.slane %v515, 2
      %v2367 = vperm.slane %v515, 6
      %v2368 = vperm.slane %v516, 2
      %v2369 = vperm.slane %v516, 6
      %v2370 = vperm.slane %v517, 2
      %v2371 = vperm.slane %v517, 6
      %v2372 = vperm.slane %v518, 2
      %v2373 = vperm.slane %v518, 6
      %v2374 = vperm.slane %v519, 2
      %v2375 = vperm.slane %v519, 6
      %v2376 = vperm.slane %v520, 2
      %v2377 = vperm.slane %v520, 6
      %v2378 = vperm.slane %v521, 2
      %v2379 = vperm.slane %v521, 6
      %v2380 = vperm.slane %v522, 2
      %v2381 = vperm.slane %v522, 6
      %v2382 = vperm.slane %v523, 2
      %v2383 = vperm.slane %v523, 6
      %v2384 = vperm.slane %v524, 2
      %v2385 = vperm.slane %v524, 6
      %v2386 = vperm.slane %v525, 2
      %v2387 = vperm.slane %v525, 6
      %v2388 = vperm.slane %v526, 2
      %v2389 = vperm.slane %v526, 6
      %v2390 = vperm.slane %v527, 2
      %v2391 = vperm.slane %v527, 6
      %v2392 = vperm.slane %v528, 2
      %v2393 = vperm.slane %v528, 6
      %v2394 = vperm.slane %v529, 2
      %v2395 = vperm.slane %v529, 6
      %v2396 = vperm.slane %v530, 2
      %v2397 = vperm.slane %v530, 6
      %v2398 = vperm.slane %v531, 2
      %v2399 = vperm.slane %v531, 6
      %v2400 = vperm.slane %v532, 2
      %v2401 = vperm.slane %v532, 6
      %v2402 = vperm.slane %v533, 2
      %v2403 = vperm.slane %v533, 6
      %v2404 = vperm.slane %v534, 2
      %v2405 = vperm.slane %v534, 6
      %v2406 = vperm.slane %v535, 2
      %v2407 = vperm.slane %v535, 6
      %v2462 = vmul.f32 %v563, %v2354
      %v2463 = vmul.f32 %v586, %v2355
      %v2464 = vmul.f32 %v609, %v2356
      %v2465 = vmul.f32 %v632, %v2357
      %v2466 = vmul.f32 %v655, %v2358
      %v2467 = vmul.f32 %v678, %v2359
      %v2468 = vmul.f32 %v701, %v2360
      %v2469 = vmul.f32 %v724, %v2361
      %v2470 = vmul.f32 %v747, %v2362
      %v2471 = vmul.f32 %v770, %v2363
      %v2472 = vmul.f32 %v793, %v2364
      %v2473 = vmul.f32 %v816, %v2365
      %v2474 = vmul.f32 %v839, %v2366
      %v2475 = vmul.f32 %v862, %v2367
      %v2476 = vmul.f32 %v885, %v2368
      %v2477 = vmul.f32 %v908, %v2369
      %v2478 = vmul.f32 %v931, %v2370
      %v2479 = vmul.f32 %v954, %v2371
      %v2480 = vmul.f32 %v977, %v2372
      %v2481 = vmul.f32 %v1000, %v2373
      %v2482 = vmul.f32 %v1023, %v2374
      %v2483 = vmul.f32 %v1046, %v2375
      %v2484 = vmul.f32 %v1069, %v2376
      %v2485 = vmul.f32 %v1092, %v2377
      %v2486 = vmul.f32 %v1115, %v2378
      %v2487 = vmul.f32 %v1138, %v2379
      %v2488 = vmul.f32 %v1161, %v2380
      %v2489 = vmul.f32 %v1184, %v2381
      %v2490 = vmul.f32 %v1207, %v2382
      %v2491 = vmul.f32 %v1230, %v2383
      %v2492 = vmul.f32 %v1253, %v2384
      %v2493 = vmul.f32 %v1276, %v2385
      %v2494 = vmul.f32 %v1299, %v2386
      %v2495 = vmul.f32 %v1322, %v2387
      %v2496 = vmul.f32 %v1345, %v2388
      %v2497 = vmul.f32 %v1368, %v2389
      %v2498 = vmul.f32 %v1391, %v2390
      %v2499 = vmul.f32 %v1414, %v2391
      %v2500 = vmul.f32 %v1437, %v2392
      %v2501 = vmul.f32 %v1460, %v2393
      %v2502 = vmul.f32 %v1483, %v2394
      %v2503 = vmul.f32 %v1506, %v2395
      %v2504 = vmul.f32 %v1529, %v2396
      %v2505 = vmul.f32 %v1552, %v2397
      %v2506 = vmul.f32 %v1575, %v2398
      %v2507 = vmul.f32 %v1598, %v2399
      %v2508 = vmul.f32 %v1621, %v2400
      %v2509 = vmul.f32 %v1644, %v2401
      %v2510 = vmul.f32 %v1667, %v2402
      %v2511 = vmul.f32 %v1690, %v2403
      %v2512 = vmul.f32 %v1713, %v2404
      %v2513 = vmul.f32 %v1736, %v2405
      %v2514 = vmul.f32 %v1759, %v2406
      %v2515 = vmul.f32 %v1782, %v2407
      %v2570 = vrot.slane %v2462, 2
      %v2571 = vrot.slane %v2463, 2
      %v2572 = vrot.slane %v2464, 2
      %v2573 = vrot.slane %v2465, 2
      %v2574 = vrot.slane %v2466, 2
      %v2575 = vrot.slane %v2467, 2
      %v2576 = vrot.slane %v2468, 2
      %v2577 = vrot.slane %v2469, 2
      %v2578 = vrot.slane %v2470, 2
      %v2579 = vrot.slane %v2471, 2
      %v2580 = vrot.slane %v2472, 2
      %v2581 = vrot.slane %v2473, 2
      %v2582 = vrot.slane %v2474, 2
      %v2583 = vrot.slane %v2475, 2
      %v2584 = vrot.slane %v2476, 2
      %v2585 = vrot.slane %v2477, 2
      %v2586 = vrot.slane %v2478, 2
      %v2587 = vrot.slane %v2479, 2
      %v2588 = vrot.slane %v2480, 2
      %v2589 = vrot.slane %v2481, 2
      %v2590 = vrot.slane %v2482, 2
      %v2591 = vrot.slane %v2483, 2
      %v2592 = vrot.slane %v2484, 2
      %v2593 = vrot.slane %v2485, 2
      %v2594 = vrot.slane %v2486, 2
      %v2595 = vrot.slane %v2487, 2
      %v2596 = vrot.slane %v2488, 2
      %v2597 = vrot.slane %v2489, 2
      %v2598 = vrot.slane %v2490, 2
      %v2599 = vrot.slane %v2491, 2
      %v2600 = vrot.slane %v2492, 2
      %v2601 = vrot.slane %v2493, 2
      %v2602 = vrot.slane %v2494, 2
      %v2603 = vrot.slane %v2495, 2
      %v2604 = vrot.slane %v2496, 2
      %v2605 = vrot.slane %v2497, 2
      %v2606 = vrot.slane %v2498, 2
      %v2607 = vrot.slane %v2499, 2
      %v2608 = vrot.slane %v2500, 2
      %v2609 = vrot.slane %v2501, 2
      %v2610 = vrot.slane %v2502, 2
      %v2611 = vrot.slane %v2503, 2
      %v2612 = vrot.slane %v2504, 2
      %v2613 = vrot.slane %v2505, 2
      %v2614 = vrot.slane %v2506, 2
      %v2615 = vrot.slane %v2507, 2
      %v2616 = vrot.slane %v2508, 2
      %v2617 = vrot.slane %v2509, 2
      %v2618 = vrot.slane %v2510, 2
      %v2619 = vrot.slane %v2511, 2
      %v2620 = vrot.slane %v2512, 2
      %v2621 = vrot.slane %v2513, 2
      %v2622 = vrot.slane %v2514, 2
      %v2623 = vrot.slane %v2515, 2
      %v2678 = vadd.f32 %v2300, %v2570
      %v2679 = vadd.f32 %v2301, %v2571
      %v2680 = vadd.f32 %v2302, %v2572
      %v2681 = vadd.f32 %v2303, %v2573
      %v2682 = vadd.f32 %v2304, %v2574
      %v2683 = vadd.f32 %v2305, %v2575
      %v2684 = vadd.f32 %v2306, %v2576
      %v2685 = vadd.f32 %v2307, %v2577
      %v2686 = vadd.f32 %v2308, %v2578
      %v2687 = vadd.f32 %v2309, %v2579
      %v2688 = vadd.f32 %v2310, %v2580
      %v2689 = vadd.f32 %v2311, %v2581
      %v2690 = vadd.f32 %v2312, %v2582
      %v2691 = vadd.f32 %v2313, %v2583
      %v2692 = vadd.f32 %v2314, %v2584
      %v2693 = vadd.f32 %v2315, %v2585
      %v2694 = vadd.f32 %v2316, %v2586
      %v2695 = vadd.f32 %v2317, %v2587
      %v2696 = vadd.f32 %v2318, %v2588
      %v2697 = vadd.f32 %v2319, %v2589
      %v2698 = vadd.f32 %v2320, %v2590
      %v2699 = vadd.f32 %v2321, %v2591
      %v2700 = vadd.f32 %v2322, %v2592
      %v2701 = vadd.f32 %v2323, %v2593
      %v2702 = vadd.f32 %v2324, %v2594
      %v2703 = vadd.f32 %v2325, %v2595
      %v2704 = vadd.f32 %v2326, %v2596
      %v2705 = vadd.f32 %v2327, %v2597
      %v2706 = vadd.f32 %v2328, %v2598
      %v2707 = vadd.f32 %v2329, %v2599
      %v2708 = vadd.f32 %v2330, %v2600
      %v2709 = vadd.f32 %v2331, %v2601
      %v2710 = vadd.f32 %v2332, %v2602
      %v2711 = vadd.f32 %v2333, %v2603
      %v2712 = vadd.f32 %v2334, %v2604
      %v2713 = vadd.f32 %v2335, %v2605
      %v2714 = vadd.f32 %v2336, %v2606
      %v2715 = vadd.f32 %v2337, %v2607
      %v2716 = vadd.f32 %v2338, %v2608
      %v2717 = vadd.f32 %v2339, %v2609
      %v2718 = vadd.f32 %v2340, %v2610
      %v2719 = vadd.f32 %v2341, %v2611
      %v2720 = vadd.f32 %v2342, %v2612
      %v2721 = vadd.f32 %v2343, %v2613
      %v2722 = vadd.f32 %v2344, %v2614
      %v2723 = vadd.f32 %v2345, %v2615
      %v2724 = vadd.f32 %v2346, %v2616
      %v2725 = vadd.f32 %v2347, %v2617
      %v2726 = vadd.f32 %v2348, %v2618
      %v2727 = vadd.f32 %v2349, %v2619
      %v2728 = vadd.f32 %v2350, %v2620
      %v2729 = vadd.f32 %v2351, %v2621
      %v2730 = vadd.f32 %v2352, %v2622
      %v2731 = vadd.f32 %v2353, %v2623
      %v2786 = vrot.slane %v563, 3
      %v2787 = vrot.slane %v586, 3
      %v2788 = vrot.slane %v609, 3
      %v2789 = vrot.slane %v632, 3
      %v2790 = vrot.slane %v655, 3
      %v2791 = vrot.slane %v678, 3
      %v2792 = vrot.slane %v701, 3
      %v2793 = vrot.slane %v724, 3
      %v2794 = vrot.slane %v747, 3
      %v2795 = vrot.slane %v770, 3
      %v2796 = vrot.slane %v793, 3
      %v2797 = vrot.slane %v816, 3
      %v2798 = vrot.slane %v839, 3
      %v2799 = vrot.slane %v862, 3
      %v2800 = vrot.slane %v885, 3
      %v2801 = vrot.slane %v908, 3
      %v2802 = vrot.slane %v931, 3
      %v2803 = vrot.slane %v954, 3
      %v2804 = vrot.slane %v977, 3
      %v2805 = vrot.slane %v1000, 3
      %v2806 = vrot.slane %v1023, 3
      %v2807 = vrot.slane %v1046, 3
      %v2808 = vrot.slane %v1069, 3
      %v2809 = vrot.slane %v1092, 3
      %v2810 = vrot.slane %v1115, 3
      %v2811 = vrot.slane %v1138, 3
      %v2812 = vrot.slane %v1161, 3
      %v2813 = vrot.slane %v1184, 3
      %v2814 = vrot.slane %v1207, 3
      %v2815 = vrot.slane %v1230, 3
      %v2816 = vrot.slane %v1253, 3
      %v2817 = vrot.slane %v1276, 3
      %v2818 = vrot.slane %v1299, 3
      %v2819 = vrot.slane %v1322, 3
      %v2820 = vrot.slane %v1345, 3
      %v2821 = vrot.slane %v1368, 3
      %v2822 = vrot.slane %v1391, 3
      %v2823 = vrot.slane %v1414, 3
      %v2824 = vrot.slane %v1437, 3
      %v2825 = vrot.slane %v1460, 3
      %v2826 = vrot.slane %v1483, 3
      %v2827 = vrot.slane %v1506, 3
      %v2828 = vrot.slane %v1529, 3
      %v2829 = vrot.slane %v1552, 3
      %v2830 = vrot.slane %v1575, 3
      %v2831 = vrot.slane %v1598, 3
      %v2832 = vrot.slane %v1621, 3
      %v2833 = vrot.slane %v1644, 3
      %v2834 = vrot.slane %v1667, 3
      %v2835 = vrot.slane %v1690, 3
      %v2836 = vrot.slane %v1713, 3
      %v2837 = vrot.slane %v1736, 3
      %v2838 = vrot.slane %v1759, 3
      %v2839 = vrot.slane %v1782, 3
      %v2894 = vadd.f32 %v2678, %v2786
      %v2895 = vadd.f32 %v2679, %v2787
      %v2896 = vadd.f32 %v2680, %v2788
      %v2897 = vadd.f32 %v2681, %v2789
      %v2898 = vadd.f32 %v2682, %v2790
      %v2899 = vadd.f32 %v2683, %v2791
      %v2900 = vadd.f32 %v2684, %v2792
      %v2901 = vadd.f32 %v2685, %v2793
      %v2902 = vadd.f32 %v2686, %v2794
      %v2903 = vadd.f32 %v2687, %v2795
      %v2904 = vadd.f32 %v2688, %v2796
      %v2905 = vadd.f32 %v2689, %v2797
      %v2906 = vadd.f32 %v2690, %v2798
      %v2907 = vadd.f32 %v2691, %v2799
      %v2908 = vadd.f32 %v2692, %v2800
      %v2909 = vadd.f32 %v2693, %v2801
      %v2910 = vadd.f32 %v2694, %v2802
      %v2911 = vadd.f32 %v2695, %v2803
      %v2912 = vadd.f32 %v2696, %v2804
      %v2913 = vadd.f32 %v2697, %v2805
      %v2914 = vadd.f32 %v2698, %v2806
      %v2915 = vadd.f32 %v2699, %v2807
      %v2916 = vadd.f32 %v2700, %v2808
      %v2917 = vadd.f32 %v2701, %v2809
      %v2918 = vadd.f32 %v2702, %v2810
      %v2919 = vadd.f32 %v2703, %v2811
      %v2920 = vadd.f32 %v2704, %v2812
      %v2921 = vadd.f32 %v2705, %v2813
      %v2922 = vadd.f32 %v2706, %v2814
      %v2923 = vadd.f32 %v2707, %v2815
      %v2924 = vadd.f32 %v2708, %v2816
      %v2925 = vadd.f32 %v2709, %v2817
      %v2926 = vadd.f32 %v2710, %v2818
      %v2927 = vadd.f32 %v2711, %v2819
      %v2928 = vadd.f32 %v2712, %v2820
      %v2929 = vadd.f32 %v2713, %v2821
      %v2930 = vadd.f32 %v2714, %v2822
      %v2931 = vadd.f32 %v2715, %v2823
      %v2932 = vadd.f32 %v2716, %v2824
      %v2933 = vadd.f32 %v2717, %v2825
      %v2934 = vadd.f32 %v2718, %v2826
      %v2935 = vadd.f32 %v2719, %v2827
      %v2936 = vadd.f32 %v2720, %v2828
      %v2937 = vadd.f32 %v2721, %v2829
      %v2938 = vadd.f32 %v2722, %v2830
      %v2939 = vadd.f32 %v2723, %v2831
      %v2940 = vadd.f32 %v2724, %v2832
      %v2941 = vadd.f32 %v2725, %v2833
      %v2942 = vadd.f32 %v2726, %v2834
      %v2943 = vadd.f32 %v2727, %v2835
      %v2944 = vadd.f32 %v2728, %v2836
      %v2945 = vadd.f32 %v2729, %v2837
      %v2946 = vadd.f32 %v2730, %v2838
      %v2947 = vadd.f32 %v2731, %v2839
      %v2948 = vmul.f32 %v566, %v1814
      %v2949 = vmul.f32 %v589, %v1815
      %v2950 = vmul.f32 %v612, %v1816
      %v2951 = vmul.f32 %v635, %v1817
      %v2952 = vmul.f32 %v658, %v1818
      %v2953 = vmul.f32 %v681, %v1819
      %v2954 = vmul.f32 %v704, %v1820
      %v2955 = vmul.f32 %v727, %v1821
      %v2956 = vmul.f32 %v750, %v1822
      %v2957 = vmul.f32 %v773, %v1823
      %v2958 = vmul.f32 %v796, %v1824
      %v2959 = vmul.f32 %v819, %v1825
      %v2960 = vmul.f32 %v842, %v1826
      %v2961 = vmul.f32 %v865, %v1827
      %v2962 = vmul.f32 %v888, %v1828
      %v2963 = vmul.f32 %v911, %v1829
      %v2964 = vmul.f32 %v934, %v1830
      %v2965 = vmul.f32 %v957, %v1831
      %v2966 = vmul.f32 %v980, %v1832
      %v2967 = vmul.f32 %v1003, %v1833
      %v2968 = vmul.f32 %v1026, %v1834
      %v2969 = vmul.f32 %v1049, %v1835
      %v2970 = vmul.f32 %v1072, %v1836
      %v2971 = vmul.f32 %v1095, %v1837
      %v2972 = vmul.f32 %v1118, %v1838
      %v2973 = vmul.f32 %v1141, %v1839
      %v2974 = vmul.f32 %v1164, %v1840
      %v2975 = vmul.f32 %v1187, %v1841
      %v2976 = vmul.f32 %v1210, %v1842
      %v2977 = vmul.f32 %v1233, %v1843
      %v2978 = vmul.f32 %v1256, %v1844
      %v2979 = vmul.f32 %v1279, %v1845
      %v2980 = vmul.f32 %v1302, %v1846
      %v2981 = vmul.f32 %v1325, %v1847
      %v2982 = vmul.f32 %v1348, %v1848
      %v2983 = vmul.f32 %v1371, %v1849
      %v2984 = vmul.f32 %v1394, %v1850
      %v2985 = vmul.f32 %v1417, %v1851
      %v2986 = vmul.f32 %v1440, %v1852
      %v2987 = vmul.f32 %v1463, %v1853
      %v2988 = vmul.f32 %v1486, %v1854
      %v2989 = vmul.f32 %v1509, %v1855
      %v2990 = vmul.f32 %v1532, %v1856
      %v2991 = vmul.f32 %v1555, %v1857
      %v2992 = vmul.f32 %v1578, %v1858
      %v2993 = vmul.f32 %v1601, %v1859
      %v2994 = vmul.f32 %v1624, %v1860
      %v2995 = vmul.f32 %v1647, %v1861
      %v2996 = vmul.f32 %v1670, %v1862
      %v2997 = vmul.f32 %v1693, %v1863
      %v2998 = vmul.f32 %v1716, %v1864
      %v2999 = vmul.f32 %v1739, %v1865
      %v3000 = vmul.f32 %v1762, %v1866
      %v3001 = vmul.f32 %v1785, %v1867
      %v3002 = vmul.f32 %v566, %v1976
      %v3003 = vmul.f32 %v589, %v1977
      %v3004 = vmul.f32 %v612, %v1978
      %v3005 = vmul.f32 %v635, %v1979
      %v3006 = vmul.f32 %v658, %v1980
      %v3007 = vmul.f32 %v681, %v1981
      %v3008 = vmul.f32 %v704, %v1982
      %v3009 = vmul.f32 %v727, %v1983
      %v3010 = vmul.f32 %v750, %v1984
      %v3011 = vmul.f32 %v773, %v1985
      %v3012 = vmul.f32 %v796, %v1986
      %v3013 = vmul.f32 %v819, %v1987
      %v3014 = vmul.f32 %v842, %v1988
      %v3015 = vmul.f32 %v865, %v1989
      %v3016 = vmul.f32 %v888, %v1990
      %v3017 = vmul.f32 %v911, %v1991
      %v3018 = vmul.f32 %v934, %v1992
      %v3019 = vmul.f32 %v957, %v1993
      %v3020 = vmul.f32 %v980, %v1994
      %v3021 = vmul.f32 %v1003, %v1995
      %v3022 = vmul.f32 %v1026, %v1996
      %v3023 = vmul.f32 %v1049, %v1997
      %v3024 = vmul.f32 %v1072, %v1998
      %v3025 = vmul.f32 %v1095, %v1999
      %v3026 = vmul.f32 %v1118, %v2000
      %v3027 = vmul.f32 %v1141, %v2001
      %v3028 = vmul.f32 %v1164, %v2002
      %v3029 = vmul.f32 %v1187, %v2003
      %v3030 = vmul.f32 %v1210, %v2004
      %v3031 = vmul.f32 %v1233, %v2005
      %v3032 = vmul.f32 %v1256, %v2006
      %v3033 = vmul.f32 %v1279, %v2007
      %v3034 = vmul.f32 %v1302, %v2008
      %v3035 = vmul.f32 %v1325, %v2009
      %v3036 = vmul.f32 %v1348, %v2010
      %v3037 = vmul.f32 %v1371, %v2011
      %v3038 = vmul.f32 %v1394, %v2012
      %v3039 = vmul.f32 %v1417, %v2013
      %v3040 = vmul.f32 %v1440, %v2014
      %v3041 = vmul.f32 %v1463, %v2015
      %v3042 = vmul.f32 %v1486, %v2016
      %v3043 = vmul.f32 %v1509, %v2017
      %v3044 = vmul.f32 %v1532, %v2018
      %v3045 = vmul.f32 %v1555, %v2019
      %v3046 = vmul.f32 %v1578, %v2020
      %v3047 = vmul.f32 %v1601, %v2021
      %v3048 = vmul.f32 %v1624, %v2022
      %v3049 = vmul.f32 %v1647, %v2023
      %v3050 = vmul.f32 %v1670, %v2024
      %v3051 = vmul.f32 %v1693, %v2025
      %v3052 = vmul.f32 %v1716, %v2026
      %v3053 = vmul.f32 %v1739, %v2027
      %v3054 = vmul.f32 %v1762, %v2028
      %v3055 = vmul.f32 %v1785, %v2029
      %v3110 = vrot.slane %v3002, 1
      %v3111 = vrot.slane %v3003, 1
      %v3112 = vrot.slane %v3004, 1
      %v3113 = vrot.slane %v3005, 1
      %v3114 = vrot.slane %v3006, 1
      %v3115 = vrot.slane %v3007, 1
      %v3116 = vrot.slane %v3008, 1
      %v3117 = vrot.slane %v3009, 1
      %v3118 = vrot.slane %v3010, 1
      %v3119 = vrot.slane %v3011, 1
      %v3120 = vrot.slane %v3012, 1
      %v3121 = vrot.slane %v3013, 1
      %v3122 = vrot.slane %v3014, 1
      %v3123 = vrot.slane %v3015, 1
      %v3124 = vrot.slane %v3016, 1
      %v3125 = vrot.slane %v3017, 1
      %v3126 = vrot.slane %v3018, 1
      %v3127 = vrot.slane %v3019, 1
      %v3128 = vrot.slane %v3020, 1
      %v3129 = vrot.slane %v3021, 1
      %v3130 = vrot.slane %v3022, 1
      %v3131 = vrot.slane %v3023, 1
      %v3132 = vrot.slane %v3024, 1
      %v3133 = vrot.slane %v3025, 1
      %v3134 = vrot.slane %v3026, 1
      %v3135 = vrot.slane %v3027, 1
      %v3136 = vrot.slane %v3028, 1
      %v3137 = vrot.slane %v3029, 1
      %v3138 = vrot.slane %v3030, 1
      %v3139 = vrot.slane %v3031, 1
      %v3140 = vrot.slane %v3032, 1
      %v3141 = vrot.slane %v3033, 1
      %v3142 = vrot.slane %v3034, 1
      %v3143 = vrot.slane %v3035, 1
      %v3144 = vrot.slane %v3036, 1
      %v3145 = vrot.slane %v3037, 1
      %v3146 = vrot.slane %v3038, 1
      %v3147 = vrot.slane %v3039, 1
      %v3148 = vrot.slane %v3040, 1
      %v3149 = vrot.slane %v3041, 1
      %v3150 = vrot.slane %v3042, 1
      %v3151 = vrot.slane %v3043, 1
      %v3152 = vrot.slane %v3044, 1
      %v3153 = vrot.slane %v3045, 1
      %v3154 = vrot.slane %v3046, 1
      %v3155 = vrot.slane %v3047, 1
      %v3156 = vrot.slane %v3048, 1
      %v3157 = vrot.slane %v3049, 1
      %v3158 = vrot.slane %v3050, 1
      %v3159 = vrot.slane %v3051, 1
      %v3160 = vrot.slane %v3052, 1
      %v3161 = vrot.slane %v3053, 1
      %v3162 = vrot.slane %v3054, 1
      %v3163 = vrot.slane %v3055, 1
      %v3218 = vadd.f32 %v2948, %v3110
      %v3219 = vadd.f32 %v2949, %v3111
      %v3220 = vadd.f32 %v2950, %v3112
      %v3221 = vadd.f32 %v2951, %v3113
      %v3222 = vadd.f32 %v2952, %v3114
      %v3223 = vadd.f32 %v2953, %v3115
      %v3224 = vadd.f32 %v2954, %v3116
      %v3225 = vadd.f32 %v2955, %v3117
      %v3226 = vadd.f32 %v2956, %v3118
      %v3227 = vadd.f32 %v2957, %v3119
      %v3228 = vadd.f32 %v2958, %v3120
      %v3229 = vadd.f32 %v2959, %v3121
      %v3230 = vadd.f32 %v2960, %v3122
      %v3231 = vadd.f32 %v2961, %v3123
      %v3232 = vadd.f32 %v2962, %v3124
      %v3233 = vadd.f32 %v2963, %v3125
      %v3234 = vadd.f32 %v2964, %v3126
      %v3235 = vadd.f32 %v2965, %v3127
      %v3236 = vadd.f32 %v2966, %v3128
      %v3237 = vadd.f32 %v2967, %v3129
      %v3238 = vadd.f32 %v2968, %v3130
      %v3239 = vadd.f32 %v2969, %v3131
      %v3240 = vadd.f32 %v2970, %v3132
      %v3241 = vadd.f32 %v2971, %v3133
      %v3242 = vadd.f32 %v2972, %v3134
      %v3243 = vadd.f32 %v2973, %v3135
      %v3244 = vadd.f32 %v2974, %v3136
      %v3245 = vadd.f32 %v2975, %v3137
      %v3246 = vadd.f32 %v2976, %v3138
      %v3247 = vadd.f32 %v2977, %v3139
      %v3248 = vadd.f32 %v2978, %v3140
      %v3249 = vadd.f32 %v2979, %v3141
      %v3250 = vadd.f32 %v2980, %v3142
      %v3251 = vadd.f32 %v2981, %v3143
      %v3252 = vadd.f32 %v2982, %v3144
      %v3253 = vadd.f32 %v2983, %v3145
      %v3254 = vadd.f32 %v2984, %v3146
      %v3255 = vadd.f32 %v2985, %v3147
      %v3256 = vadd.f32 %v2986, %v3148
      %v3257 = vadd.f32 %v2987, %v3149
      %v3258 = vadd.f32 %v2988, %v3150
      %v3259 = vadd.f32 %v2989, %v3151
      %v3260 = vadd.f32 %v2990, %v3152
      %v3261 = vadd.f32 %v2991, %v3153
      %v3262 = vadd.f32 %v2992, %v3154
      %v3263 = vadd.f32 %v2993, %v3155
      %v3264 = vadd.f32 %v2994, %v3156
      %v3265 = vadd.f32 %v2995, %v3157
      %v3266 = vadd.f32 %v2996, %v3158
      %v3267 = vadd.f32 %v2997, %v3159
      %v3268 = vadd.f32 %v2998, %v3160
      %v3269 = vadd.f32 %v2999, %v3161
      %v3270 = vadd.f32 %v3000, %v3162
      %v3271 = vadd.f32 %v3001, %v3163
      %v3272 = vmul.f32 %v566, %v2354
      %v3273 = vmul.f32 %v589, %v2355
      %v3274 = vmul.f32 %v612, %v2356
      %v3275 = vmul.f32 %v635, %v2357
      %v3276 = vmul.f32 %v658, %v2358
      %v3277 = vmul.f32 %v681, %v2359
      %v3278 = vmul.f32 %v704, %v2360
      %v3279 = vmul.f32 %v727, %v2361
      %v3280 = vmul.f32 %v750, %v2362
      %v3281 = vmul.f32 %v773, %v2363
      %v3282 = vmul.f32 %v796, %v2364
      %v3283 = vmul.f32 %v819, %v2365
      %v3284 = vmul.f32 %v842, %v2366
      %v3285 = vmul.f32 %v865, %v2367
      %v3286 = vmul.f32 %v888, %v2368
      %v3287 = vmul.f32 %v911, %v2369
      %v3288 = vmul.f32 %v934, %v2370
      %v3289 = vmul.f32 %v957, %v2371
      %v3290 = vmul.f32 %v980, %v2372
      %v3291 = vmul.f32 %v1003, %v2373
      %v3292 = vmul.f32 %v1026, %v2374
      %v3293 = vmul.f32 %v1049, %v2375
      %v3294 = vmul.f32 %v1072, %v2376
      %v3295 = vmul.f32 %v1095, %v2377
      %v3296 = vmul.f32 %v1118, %v2378
      %v3297 = vmul.f32 %v1141, %v2379
      %v3298 = vmul.f32 %v1164, %v2380
      %v3299 = vmul.f32 %v1187, %v2381
      %v3300 = vmul.f32 %v1210, %v2382
      %v3301 = vmul.f32 %v1233, %v2383
      %v3302 = vmul.f32 %v1256, %v2384
      %v3303 = vmul.f32 %v1279, %v2385
      %v3304 = vmul.f32 %v1302, %v2386
      %v3305 = vmul.f32 %v1325, %v2387
      %v3306 = vmul.f32 %v1348, %v2388
      %v3307 = vmul.f32 %v1371, %v2389
      %v3308 = vmul.f32 %v1394, %v2390
      %v3309 = vmul.f32 %v1417, %v2391
      %v3310 = vmul.f32 %v1440, %v2392
      %v3311 = vmul.f32 %v1463, %v2393
      %v3312 = vmul.f32 %v1486, %v2394
      %v3313 = vmul.f32 %v1509, %v2395
      %v3314 = vmul.f32 %v1532, %v2396
      %v3315 = vmul.f32 %v1555, %v2397
      %v3316 = vmul.f32 %v1578, %v2398
      %v3317 = vmul.f32 %v1601, %v2399
      %v3318 = vmul.f32 %v1624, %v2400
      %v3319 = vmul.f32 %v1647, %v2401
      %v3320 = vmul.f32 %v1670, %v2402
      %v3321 = vmul.f32 %v1693, %v2403
      %v3322 = vmul.f32 %v1716, %v2404
      %v3323 = vmul.f32 %v1739, %v2405
      %v3324 = vmul.f32 %v1762, %v2406
      %v3325 = vmul.f32 %v1785, %v2407
      %v3380 = vrot.slane %v3272, 2
      %v3381 = vrot.slane %v3273, 2
      %v3382 = vrot.slane %v3274, 2
      %v3383 = vrot.slane %v3275, 2
      %v3384 = vrot.slane %v3276, 2
      %v3385 = vrot.slane %v3277, 2
      %v3386 = vrot.slane %v3278, 2
      %v3387 = vrot.slane %v3279, 2
      %v3388 = vrot.slane %v3280, 2
      %v3389 = vrot.slane %v3281, 2
      %v3390 = vrot.slane %v3282, 2
      %v3391 = vrot.slane %v3283, 2
      %v3392 = vrot.slane %v3284, 2
      %v3393 = vrot.slane %v3285, 2
      %v3394 = vrot.slane %v3286, 2
      %v3395 = vrot.slane %v3287, 2
      %v3396 = vrot.slane %v3288, 2
      %v3397 = vrot.slane %v3289, 2
      %v3398 = vrot.slane %v3290, 2
      %v3399 = vrot.slane %v3291, 2
      %v3400 = vrot.slane %v3292, 2
      %v3401 = vrot.slane %v3293, 2
      %v3402 = vrot.slane %v3294, 2
      %v3403 = vrot.slane %v3295, 2
      %v3404 = vrot.slane %v3296, 2
      %v3405 = vrot.slane %v3297, 2
      %v3406 = vrot.slane %v3298, 2
      %v3407 = vrot.slane %v3299, 2
      %v3408 = vrot.slane %v3300, 2
      %v3409 = vrot.slane %v3301, 2
      %v3410 = vrot.slane %v3302, 2
      %v3411 = vrot.slane %v3303, 2
      %v3412 = vrot.slane %v3304, 2
      %v3413 = vrot.slane %v3305, 2
      %v3414 = vrot.slane %v3306, 2
      %v3415 = vrot.slane %v3307, 2
      %v3416 = vrot.slane %v3308, 2
      %v3417 = vrot.slane %v3309, 2
      %v3418 = vrot.slane %v3310, 2
      %v3419 = vrot.slane %v3311, 2
      %v3420 = vrot.slane %v3312, 2
      %v3421 = vrot.slane %v3313, 2
      %v3422 = vrot.slane %v3314, 2
      %v3423 = vrot.slane %v3315, 2
      %v3424 = vrot.slane %v3316, 2
      %v3425 = vrot.slane %v3317, 2
      %v3426 = vrot.slane %v3318, 2
      %v3427 = vrot.slane %v3319, 2
      %v3428 = vrot.slane %v3320, 2
      %v3429 = vrot.slane %v3321, 2
      %v3430 = vrot.slane %v3322, 2
      %v3431 = vrot.slane %v3323, 2
      %v3432 = vrot.slane %v3324, 2
      %v3433 = vrot.slane %v3325, 2
      %v3488 = vadd.f32 %v3218, %v3380
      %v3489 = vadd.f32 %v3219, %v3381
      %v3490 = vadd.f32 %v3220, %v3382
      %v3491 = vadd.f32 %v3221, %v3383
      %v3492 = vadd.f32 %v3222, %v3384
      %v3493 = vadd.f32 %v3223, %v3385
      %v3494 = vadd.f32 %v3224, %v3386
      %v3495 = vadd.f32 %v3225, %v3387
      %v3496 = vadd.f32 %v3226, %v3388
      %v3497 = vadd.f32 %v3227, %v3389
      %v3498 = vadd.f32 %v3228, %v3390
      %v3499 = vadd.f32 %v3229, %v3391
      %v3500 = vadd.f32 %v3230, %v3392
      %v3501 = vadd.f32 %v3231, %v3393
      %v3502 = vadd.f32 %v3232, %v3394
      %v3503 = vadd.f32 %v3233, %v3395
      %v3504 = vadd.f32 %v3234, %v3396
      %v3505 = vadd.f32 %v3235, %v3397
      %v3506 = vadd.f32 %v3236, %v3398
      %v3507 = vadd.f32 %v3237, %v3399
      %v3508 = vadd.f32 %v3238, %v3400
      %v3509 = vadd.f32 %v3239, %v3401
      %v3510 = vadd.f32 %v3240, %v3402
      %v3511 = vadd.f32 %v3241, %v3403
      %v3512 = vadd.f32 %v3242, %v3404
      %v3513 = vadd.f32 %v3243, %v3405
      %v3514 = vadd.f32 %v3244, %v3406
      %v3515 = vadd.f32 %v3245, %v3407
      %v3516 = vadd.f32 %v3246, %v3408
      %v3517 = vadd.f32 %v3247, %v3409
      %v3518 = vadd.f32 %v3248, %v3410
      %v3519 = vadd.f32 %v3249, %v3411
      %v3520 = vadd.f32 %v3250, %v3412
      %v3521 = vadd.f32 %v3251, %v3413
      %v3522 = vadd.f32 %v3252, %v3414
      %v3523 = vadd.f32 %v3253, %v3415
      %v3524 = vadd.f32 %v3254, %v3416
      %v3525 = vadd.f32 %v3255, %v3417
      %v3526 = vadd.f32 %v3256, %v3418
      %v3527 = vadd.f32 %v3257, %v3419
      %v3528 = vadd.f32 %v3258, %v3420
      %v3529 = vadd.f32 %v3259, %v3421
      %v3530 = vadd.f32 %v3260, %v3422
      %v3531 = vadd.f32 %v3261, %v3423
      %v3532 = vadd.f32 %v3262, %v3424
      %v3533 = vadd.f32 %v3263, %v3425
      %v3534 = vadd.f32 %v3264, %v3426
      %v3535 = vadd.f32 %v3265, %v3427
      %v3536 = vadd.f32 %v3266, %v3428
      %v3537 = vadd.f32 %v3267, %v3429
      %v3538 = vadd.f32 %v3268, %v3430
      %v3539 = vadd.f32 %v3269, %v3431
      %v3540 = vadd.f32 %v3270, %v3432
      %v3541 = vadd.f32 %v3271, %v3433
      %v3596 = vrot.slane %v566, 3
      %v3597 = vrot.slane %v589, 3
      %v3598 = vrot.slane %v612, 3
      %v3599 = vrot.slane %v635, 3
      %v3600 = vrot.slane %v658, 3
      %v3601 = vrot.slane %v681, 3
      %v3602 = vrot.slane %v704, 3
      %v3603 = vrot.slane %v727, 3
      %v3604 = vrot.slane %v750, 3
      %v3605 = vrot.slane %v773, 3
      %v3606 = vrot.slane %v796, 3
      %v3607 = vrot.slane %v819, 3
      %v3608 = vrot.slane %v842, 3
      %v3609 = vrot.slane %v865, 3
      %v3610 = vrot.slane %v888, 3
      %v3611 = vrot.slane %v911, 3
      %v3612 = vrot.slane %v934, 3
      %v3613 = vrot.slane %v957, 3
      %v3614 = vrot.slane %v980, 3
      %v3615 = vrot.slane %v1003, 3
      %v3616 = vrot.slane %v1026, 3
      %v3617 = vrot.slane %v1049, 3
      %v3618 = vrot.slane %v1072, 3
      %v3619 = vrot.slane %v1095, 3
      %v3620 = vrot.slane %v1118, 3
      %v3621 = vrot.slane %v1141, 3
      %v3622 = vrot.slane %v1164, 3
      %v3623 = vrot.slane %v1187, 3
      %v3624 = vrot.slane %v1210, 3
      %v3625 = vrot.slane %v1233, 3
      %v3626 = vrot.slane %v1256, 3
      %v3627 = vrot.slane %v1279, 3
      %v3628 = vrot.slane %v1302, 3
      %v3629 = vrot.slane %v1325, 3
      %v3630 = vrot.slane %v1348, 3
      %v3631 = vrot.slane %v1371, 3
      %v3632 = vrot.slane %v1394, 3
      %v3633 = vrot.slane %v1417, 3
      %v3634 = vrot.slane %v1440, 3
      %v3635 = vrot.slane %v1463, 3
      %v3636 = vrot.slane %v1486, 3
      %v3637 = vrot.slane %v1509, 3
      %v3638 = vrot.slane %v1532, 3
      %v3639 = vrot.slane %v1555, 3
      %v3640 = vrot.slane %v1578, 3
      %v3641 = vrot.slane %v1601, 3
      %v3642 = vrot.slane %v1624, 3
      %v3643 = vrot.slane %v1647, 3
      %v3644 = vrot.slane %v1670, 3
      %v3645 = vrot.slane %v1693, 3
      %v3646 = vrot.slane %v1716, 3
      %v3647 = vrot.slane %v1739, 3
      %v3648 = vrot.slane %v1762, 3
      %v3649 = vrot.slane %v1785, 3
      %v3704 = vadd.f32 %v3488, %v3596
      %v3705 = vadd.f32 %v3489, %v3597
      %v3706 = vadd.f32 %v3490, %v3598
      %v3707 = vadd.f32 %v3491, %v3599
      %v3708 = vadd.f32 %v3492, %v3600
      %v3709 = vadd.f32 %v3493, %v3601
      %v3710 = vadd.f32 %v3494, %v3602
      %v3711 = vadd.f32 %v3495, %v3603
      %v3712 = vadd.f32 %v3496, %v3604
      %v3713 = vadd.f32 %v3497, %v3605
      %v3714 = vadd.f32 %v3498, %v3606
      %v3715 = vadd.f32 %v3499, %v3607
      %v3716 = vadd.f32 %v3500, %v3608
      %v3717 = vadd.f32 %v3501, %v3609
      %v3718 = vadd.f32 %v3502, %v3610
      %v3719 = vadd.f32 %v3503, %v3611
      %v3720 = vadd.f32 %v3504, %v3612
      %v3721 = vadd.f32 %v3505, %v3613
      %v3722 = vadd.f32 %v3506, %v3614
      %v3723 = vadd.f32 %v3507, %v3615
      %v3724 = vadd.f32 %v3508, %v3616
      %v3725 = vadd.f32 %v3509, %v3617
      %v3726 = vadd.f32 %v3510, %v3618
      %v3727 = vadd.f32 %v3511, %v3619
      %v3728 = vadd.f32 %v3512, %v3620
      %v3729 = vadd.f32 %v3513, %v3621
      %v3730 = vadd.f32 %v3514, %v3622
      %v3731 = vadd.f32 %v3515, %v3623
      %v3732 = vadd.f32 %v3516, %v3624
      %v3733 = vadd.f32 %v3517, %v3625
      %v3734 = vadd.f32 %v3518, %v3626
      %v3735 = vadd.f32 %v3519, %v3627
      %v3736 = vadd.f32 %v3520, %v3628
      %v3737 = vadd.f32 %v3521, %v3629
      %v3738 = vadd.f32 %v3522, %v3630
      %v3739 = vadd.f32 %v3523, %v3631
      %v3740 = vadd.f32 %v3524, %v3632
      %v3741 = vadd.f32 %v3525, %v3633
      %v3742 = vadd.f32 %v3526, %v3634
      %v3743 = vadd.f32 %v3527, %v3635
      %v3744 = vadd.f32 %v3528, %v3636
      %v3745 = vadd.f32 %v3529, %v3637
      %v3746 = vadd.f32 %v3530, %v3638
      %v3747 = vadd.f32 %v3531, %v3639
      %v3748 = vadd.f32 %v3532, %v3640
      %v3749 = vadd.f32 %v3533, %v3641
      %v3750 = vadd.f32 %v3534, %v3642
      %v3751 = vadd.f32 %v3535, %v3643
      %v3752 = vadd.f32 %v3536, %v3644
      %v3753 = vadd.f32 %v3537, %v3645
      %v3754 = vadd.f32 %v3538, %v3646
      %v3755 = vadd.f32 %v3539, %v3647
      %v3756 = vadd.f32 %v3540, %v3648
      %v3757 = vadd.f32 %v3541, %v3649
      %v3812 = vrot.slane %v2894, 3
      %v3813 = vrot.slane %v2895, 3
      %v3814 = vrot.slane %v2896, 3
      %v3815 = vrot.slane %v2897, 3
      %v3816 = vrot.slane %v2898, 3
      %v3817 = vrot.slane %v2899, 3
      %v3818 = vrot.slane %v2900, 3
      %v3819 = vrot.slane %v2901, 3
      %v3820 = vrot.slane %v2902, 3
      %v3821 = vrot.slane %v2903, 3
      %v3822 = vrot.slane %v2904, 3
      %v3823 = vrot.slane %v2905, 3
      %v3824 = vrot.slane %v2906, 3
      %v3825 = vrot.slane %v2907, 3
      %v3826 = vrot.slane %v2908, 3
      %v3827 = vrot.slane %v2909, 3
      %v3828 = vrot.slane %v2910, 3
      %v3829 = vrot.slane %v2911, 3
      %v3830 = vrot.slane %v2912, 3
      %v3831 = vrot.slane %v2913, 3
      %v3832 = vrot.slane %v2914, 3
      %v3833 = vrot.slane %v2915, 3
      %v3834 = vrot.slane %v2916, 3
      %v3835 = vrot.slane %v2917, 3
      %v3836 = vrot.slane %v2918, 3
      %v3837 = vrot.slane %v2919, 3
      %v3838 = vrot.slane %v2920, 3
      %v3839 = vrot.slane %v2921, 3
      %v3840 = vrot.slane %v2922, 3
      %v3841 = vrot.slane %v2923, 3
      %v3842 = vrot.slane %v2924, 3
      %v3843 = vrot.slane %v2925, 3
      %v3844 = vrot.slane %v2926, 3
      %v3845 = vrot.slane %v2927, 3
      %v3846 = vrot.slane %v2928, 3
      %v3847 = vrot.slane %v2929, 3
      %v3848 = vrot.slane %v2930, 3
      %v3849 = vrot.slane %v2931, 3
      %v3850 = vrot.slane %v2932, 3
      %v3851 = vrot.slane %v2933, 3
      %v3852 = vrot.slane %v2934, 3
      %v3853 = vrot.slane %v2935, 3
      %v3854 = vrot.slane %v2936, 3
      %v3855 = vrot.slane %v2937, 3
      %v3856 = vrot.slane %v2938, 3
      %v3857 = vrot.slane %v2939, 3
      %v3858 = vrot.slane %v2940, 3
      %v3859 = vrot.slane %v2941, 3
      %v3860 = vrot.slane %v2942, 3
      %v3861 = vrot.slane %v2943, 3
      %v3862 = vrot.slane %v2944, 3
      %v3863 = vrot.slane %v2945, 3
      %v3864 = vrot.slane %v2946, 3
      %v3865 = vrot.slane %v2947, 3
      %v3974 = vrot.slane %v3704, 6
      %v3975 = vrot.slane %v3705, 6
      %v3976 = vrot.slane %v3706, 6
      %v3977 = vrot.slane %v3707, 6
      %v3978 = vrot.slane %v3708, 6
      %v3979 = vrot.slane %v3709, 6
      %v3980 = vrot.slane %v3710, 6
      %v3981 = vrot.slane %v3711, 6
      %v3982 = vrot.slane %v3712, 6
      %v3983 = vrot.slane %v3713, 6
      %v3984 = vrot.slane %v3714, 6
      %v3985 = vrot.slane %v3715, 6
      %v3986 = vrot.slane %v3716, 6
      %v3987 = vrot.slane %v3717, 6
      %v3988 = vrot.slane %v3718, 6
      %v3989 = vrot.slane %v3719, 6
      %v3990 = vrot.slane %v3720, 6
      %v3991 = vrot.slane %v3721, 6
      %v3992 = vrot.slane %v3722, 6
      %v3993 = vrot.slane %v3723, 6
      %v3994 = vrot.slane %v3724, 6
      %v3995 = vrot.slane %v3725, 6
      %v3996 = vrot.slane %v3726, 6
      %v3997 = vrot.slane %v3727, 6
      %v3998 = vrot.slane %v3728, 6
      %v3999 = vrot.slane %v3729, 6
      %v4000 = vrot.slane %v3730, 6
      %v4001 = vrot.slane %v3731, 6
      %v4002 = vrot.slane %v3732, 6
      %v4003 = vrot.slane %v3733, 6
      %v4004 = vrot.slane %v3734, 6
      %v4005 = vrot.slane %v3735, 6
      %v4006 = vrot.slane %v3736, 6
      %v4007 = vrot.slane %v3737, 6
      %v4008 = vrot.slane %v3738, 6
      %v4009 = vrot.slane %v3739, 6
      %v4010 = vrot.slane %v3740, 6
      %v4011 = vrot.slane %v3741, 6
      %v4012 = vrot.slane %v3742, 6
      %v4013 = vrot.slane %v3743, 6
      %v4014 = vrot.slane %v3744, 6
      %v4015 = vrot.slane %v3745, 6
      %v4016 = vrot.slane %v3746, 6
      %v4017 = vrot.slane %v3747, 6
      %v4018 = vrot.slane %v3748, 6
      %v4019 = vrot.slane %v3749, 6
      %v4020 = vrot.slane %v3750, 6
      %v4021 = vrot.slane %v3751, 6
      %v4022 = vrot.slane %v3752, 6
      %v4023 = vrot.slane %v3753, 6
      %v4024 = vrot.slane %v3754, 6
      %v4025 = vrot.slane %v3755, 6
      %v4026 = vrot.slane %v3756, 6
      %v4027 = vrot.slane %v3757, 6
      %vm4082 = vcmask 1040384
      %v4083 = vsel %vm4082, %v2894, %v3812
      %v4084 = vsel %vm4082, %v2895, %v3813
      %v4085 = vsel %vm4082, %v2896, %v3814
      %v4086 = vsel %vm4082, %v2897, %v3815
      %v4087 = vsel %vm4082, %v2898, %v3816
      %v4088 = vsel %vm4082, %v2899, %v3817
      %v4089 = vsel %vm4082, %v2900, %v3818
      %v4090 = vsel %vm4082, %v2901, %v3819
      %v4091 = vsel %vm4082, %v2902, %v3820
      %v4092 = vsel %vm4082, %v2903, %v3821
      %v4093 = vsel %vm4082, %v2904, %v3822
      %v4094 = vsel %vm4082, %v2905, %v3823
      %v4095 = vsel %vm4082, %v2906, %v3824
      %v4096 = vsel %vm4082, %v2907, %v3825
      %v4097 = vsel %vm4082, %v2908, %v3826
      %v4098 = vsel %vm4082, %v2909, %v3827
      %v4099 = vsel %vm4082, %v2910, %v3828
      %v4100 = vsel %vm4082, %v2911, %v3829
      %v4101 = vsel %vm4082, %v2912, %v3830
      %v4102 = vsel %vm4082, %v2913, %v3831
      %v4103 = vsel %vm4082, %v2914, %v3832
      %v4104 = vsel %vm4082, %v2915, %v3833
      %v4105 = vsel %vm4082, %v2916, %v3834
      %v4106 = vsel %vm4082, %v2917, %v3835
      %v4107 = vsel %vm4082, %v2918, %v3836
      %v4108 = vsel %vm4082, %v2919, %v3837
      %v4109 = vsel %vm4082, %v2920, %v3838
      %v4110 = vsel %vm4082, %v2921, %v3839
      %v4111 = vsel %vm4082, %v2922, %v3840
      %v4112 = vsel %vm4082, %v2923, %v3841
      %v4113 = vsel %vm4082, %v2924, %v3842
      %v4114 = vsel %vm4082, %v2925, %v3843
      %v4115 = vsel %vm4082, %v2926, %v3844
      %v4116 = vsel %vm4082, %v2927, %v3845
      %v4117 = vsel %vm4082, %v2928, %v3846
      %v4118 = vsel %vm4082, %v2929, %v3847
      %v4119 = vsel %vm4082, %v2930, %v3848
      %v4120 = vsel %vm4082, %v2931, %v3849
      %v4121 = vsel %vm4082, %v2932, %v3850
      %v4122 = vsel %vm4082, %v2933, %v3851
      %v4123 = vsel %vm4082, %v2934, %v3852
      %v4124 = vsel %vm4082, %v2935, %v3853
      %v4125 = vsel %vm4082, %v2936, %v3854
      %v4126 = vsel %vm4082, %v2937, %v3855
      %v4127 = vsel %vm4082, %v2938, %v3856
      %v4128 = vsel %vm4082, %v2939, %v3857
      %v4129 = vsel %vm4082, %v2940, %v3858
      %v4130 = vsel %vm4082, %v2941, %v3859
      %v4131 = vsel %vm4082, %v2942, %v3860
      %v4132 = vsel %vm4082, %v2943, %v3861
      %v4133 = vsel %vm4082, %v2944, %v3862
      %v4134 = vsel %vm4082, %v2945, %v3863
      %v4135 = vsel %vm4082, %v2946, %v3864
      %v4136 = vsel %vm4082, %v2947, %v3865
      %vm4137 = vcmask 1041408
      %v4138 = vsel %vm4137, %v4083, %v3974
      %v4139 = vsel %vm4137, %v4084, %v3975
      %v4140 = vsel %vm4137, %v4085, %v3976
      %v4141 = vsel %vm4137, %v4086, %v3977
      %v4142 = vsel %vm4137, %v4087, %v3978
      %v4143 = vsel %vm4137, %v4088, %v3979
      %v4144 = vsel %vm4137, %v4089, %v3980
      %v4145 = vsel %vm4137, %v4090, %v3981
      %v4146 = vsel %vm4137, %v4091, %v3982
      %v4147 = vsel %vm4137, %v4092, %v3983
      %v4148 = vsel %vm4137, %v4093, %v3984
      %v4149 = vsel %vm4137, %v4094, %v3985
      %v4150 = vsel %vm4137, %v4095, %v3986
      %v4151 = vsel %vm4137, %v4096, %v3987
      %v4152 = vsel %vm4137, %v4097, %v3988
      %v4153 = vsel %vm4137, %v4098, %v3989
      %v4154 = vsel %vm4137, %v4099, %v3990
      %v4155 = vsel %vm4137, %v4100, %v3991
      %v4156 = vsel %vm4137, %v4101, %v3992
      %v4157 = vsel %vm4137, %v4102, %v3993
      %v4158 = vsel %vm4137, %v4103, %v3994
      %v4159 = vsel %vm4137, %v4104, %v3995
      %v4160 = vsel %vm4137, %v4105, %v3996
      %v4161 = vsel %vm4137, %v4106, %v3997
      %v4162 = vsel %vm4137, %v4107, %v3998
      %v4163 = vsel %vm4137, %v4108, %v3999
      %v4164 = vsel %vm4137, %v4109, %v4000
      %v4165 = vsel %vm4137, %v4110, %v4001
      %v4166 = vsel %vm4137, %v4111, %v4002
      %v4167 = vsel %vm4137, %v4112, %v4003
      %v4168 = vsel %vm4137, %v4113, %v4004
      %v4169 = vsel %vm4137, %v4114, %v4005
      %v4170 = vsel %vm4137, %v4115, %v4006
      %v4171 = vsel %vm4137, %v4116, %v4007
      %v4172 = vsel %vm4137, %v4117, %v4008
      %v4173 = vsel %vm4137, %v4118, %v4009
      %v4174 = vsel %vm4137, %v4119, %v4010
      %v4175 = vsel %vm4137, %v4120, %v4011
      %v4176 = vsel %vm4137, %v4121, %v4012
      %v4177 = vsel %vm4137, %v4122, %v4013
      %v4178 = vsel %vm4137, %v4123, %v4014
      %v4179 = vsel %vm4137, %v4124, %v4015
      %v4180 = vsel %vm4137, %v4125, %v4016
      %v4181 = vsel %vm4137, %v4126, %v4017
      %v4182 = vsel %vm4137, %v4127, %v4018
      %v4183 = vsel %vm4137, %v4128, %v4019
      %v4184 = vsel %vm4137, %v4129, %v4020
      %v4185 = vsel %vm4137, %v4130, %v4021
      %v4186 = vsel %vm4137, %v4131, %v4022
      %v4187 = vsel %vm4137, %v4132, %v4023
      %v4188 = vsel %vm4137, %v4133, %v4024
      %v4189 = vsel %vm4137, %v4134, %v4025
      %v4190 = vsel %vm4137, %v4135, %v4026
      %v4191 = vsel %vm4137, %v4136, %v4027
      %v4246 = vrot.slane %v4139, 4
      %v4247 = vrot.slane %v4141, 4
      %v4248 = vrot.slane %v4143, 4
      %v4249 = vrot.slane %v4145, 4
      %v4250 = vrot.slane %v4147, 4
      %v4251 = vrot.slane %v4149, 4
      %v4252 = vrot.slane %v4151, 4
      %v4253 = vrot.slane %v4153, 4
      %v4254 = vrot.slane %v4155, 4
      %v4255 = vrot.slane %v4157, 4
      %v4256 = vrot.slane %v4159, 4
      %v4257 = vrot.slane %v4161, 4
      %v4258 = vrot.slane %v4163, 4
      %v4259 = vrot.slane %v4165, 4
      %v4260 = vrot.slane %v4167, 4
      %v4261 = vrot.slane %v4169, 4
      %v4262 = vrot.slane %v4171, 4
      %v4263 = vrot.slane %v4173, 4
      %v4264 = vrot.slane %v4175, 4
      %v4265 = vrot.slane %v4177, 4
      %v4266 = vrot.slane %v4179, 4
      %v4267 = vrot.slane %v4181, 4
      %v4268 = vrot.slane %v4183, 4
      %v4269 = vrot.slane %v4185, 4
      %v4270 = vrot.slane %v4187, 4
      %v4271 = vrot.slane %v4189, 4
      %v4272 = vrot.slane %v4191, 4
      %vm4273 = vcmask 1043456
      %v4274 = vsel %vm4273, %v4138, %v4246
      %v4275 = vsel %vm4273, %v4140, %v4247
      %v4276 = vsel %vm4273, %v4142, %v4248
      %v4277 = vsel %vm4273, %v4144, %v4249
      %v4278 = vsel %vm4273, %v4146, %v4250
      %v4279 = vsel %vm4273, %v4148, %v4251
      %v4280 = vsel %vm4273, %v4150, %v4252
      %v4281 = vsel %vm4273, %v4152, %v4253
      %v4282 = vsel %vm4273, %v4154, %v4254
      %v4283 = vsel %vm4273, %v4156, %v4255
      %v4284 = vsel %vm4273, %v4158, %v4256
      %v4285 = vsel %vm4273, %v4160, %v4257
      %v4286 = vsel %vm4273, %v4162, %v4258
      %v4287 = vsel %vm4273, %v4164, %v4259
      %v4288 = vsel %vm4273, %v4166, %v4260
      %v4289 = vsel %vm4273, %v4168, %v4261
      %v4290 = vsel %vm4273, %v4170, %v4262
      %v4291 = vsel %vm4273, %v4172, %v4263
      %v4292 = vsel %vm4273, %v4174, %v4264
      %v4293 = vsel %vm4273, %v4176, %v4265
      %v4294 = vsel %vm4273, %v4178, %v4266
      %v4295 = vsel %vm4273, %v4180, %v4267
      %v4296 = vsel %vm4273, %v4182, %v4268
      %v4297 = vsel %vm4273, %v4184, %v4269
      %v4298 = vsel %vm4273, %v4186, %v4270
      %v4299 = vsel %vm4273, %v4188, %v4271
      %v4300 = vsel %vm4273, %v4190, %v4272
      %4328 = vst [vmem:[%s264] sm:$0x77] %v4274
      %4329 = vst [vmem:[%s264 + $0x8] sm:$0x77] %v4275
      %4330 = vst [vmem:[%s264 + $0x10] sm:$0x77] %v4276
      %4331 = vst [vmem:[%s264 + $0x18] sm:$0x77] %v4277
      %4332 = vst [vmem:[%s264 + $0x20] sm:$0x77] %v4278
      %4333 = vst [vmem:[%s264 + $0x28] sm:$0x77] %v4279
      %4334 = vst [vmem:[%s264 + $0x30] sm:$0x77] %v4280
      %4335 = vst [vmem:[%s264 + $0x38] sm:$0x77] %v4281
      %4336 = vst [vmem:[%s264 + $0x40] sm:$0x77] %v4282
      %4337 = vst [vmem:[%s264 + $0x48] sm:$0x77] %v4283
      %4338 = vst [vmem:[%s264 + $0x50] sm:$0x77] %v4284
      %4339 = vst [vmem:[%s264 + $0x58] sm:$0x77] %v4285
      %4340 = vst [vmem:[%s264 + $0x60] sm:$0x77] %v4286
      %4341 = vst [vmem:[%s264 + $0x68] sm:$0x77] %v4287
      %4342 = vst [vmem:[%s264 + $0x70] sm:$0x77] %v4288
      %4343 = vst [vmem:[%s264 + $0x78] sm:$0x77] %v4289
      %4344 = vst [vmem:[%s264 + $0x80] sm:$0x77] %v4290
      %4345 = vst [vmem:[%s264 + $0x88] sm:$0x77] %v4291
      %4346 = vst [vmem:[%s264 + $0x90] sm:$0x77] %v4292
      %4347 = vst [vmem:[%s264 + $0x98] sm:$0x77] %v4293
      %4348 = vst [vmem:[%s264 + $0xa0] sm:$0x77] %v4294
      %4349 = vst [vmem:[%s264 + $0xa8] sm:$0x77] %v4295
      %4350 = vst [vmem:[%s264 + $0xb0] sm:$0x77] %v4296
      %4351 = vst [vmem:[%s264 + $0xb8] sm:$0x77] %v4297
      %4352 = vst [vmem:[%s264 + $0xc0] sm:$0x77] %v4298
      %4353 = vst [vmem:[%s264 + $0xc8] sm:$0x77] %v4299
      %4354 = vst [vmem:[%s264 + $0xd0] sm:$0x77] %v4300
      %s4355 = smul.u32 54, %s19
      %p4356 = scmp.lt.s32.totalorder %s18, 1
      %s4357 = scalar_select %p4356, %s18, 1
      %p4358 = scmp.lt.s32.totalorder %s4355, 53
      %s4359 = scalar_select %p4358, %s4355, 53
      %s4360 = smul.addr %s4357, 54
      %s4361 = sadd.s32 %s4359, %s4360
      %s4362 = smul.addr %s4361, 4
      %s4363 = scalar_lea.vmem %s3, %s4362
      // Predicated region
      $region33: #{_lambda_.1} parent=31 // pred_check
        %p4364 = pneg %p128
      $region34: #{_lambda_.1} parent=31 // pred_check_branch
        %4366 = sbr.rel (%p4364) target = $region36
      $region35: #{_lambda_.1} parent=31 // pred_region
        %s4367 = smul.u32 54, %s19
      $region36: #{_lambda_.1} parent=31 // pred_fallthru
        _
    $region32: #{_lambda_.1} parent=5 // pred_fallthru
      _
    %p4368 = scmp.le.s32.totalorder 2, %s9
    // Predicated region
    $region37: #{_lambda_.1} parent=5 // pred_check
      %p4369 = pneg %p4368
    $region38: #{_lambda_.1} parent=5 // pred_check_branch
      %4371 = sbr.rel (%p4369) target = $region40
    $region39: #{_lambda_.1} parent=5 // pred_region
      %s4372 = ssub.s32 %s9, 2
      // Predicated region
      $region41: #{_lambda_.1} parent=39 // pred_check
        %p4373 = pneg %p134
      $region42: #{_lambda_.1} parent=39 // pred_check_branch
        %4375 = sbr.rel (%p4373) target = $region44
      $region43: #{_lambda_.1} parent=39 // pred_region
        %s4376 = smul.u32 54, %s21
        %p4377 = scmp.lt.s32.totalorder %s20, 1
        %s4378 = scalar_select %p4377, %s20, 1
        %p4379 = scmp.lt.s32.totalorder %s4376, 53
        %s4380 = scalar_select %p4379, %s4376, 53
        %s4381 = smul.addr %s4378, 54
        %s4382 = sadd.s32 %s4380, %s4381
        %s4383 = smul.addr %s4382, 4
        %s4384 = scalar_lea.vmem %s3, %s4383
      $region44: #{_lambda_.1} parent=39 // pred_fallthru
        _
    $region40: #{_lambda_.1} parent=5 // pred_fallthru
      _
  $region6: #{_lambda_.1} parent=0 // loop_footer
    %s13 = sadd.s32 1, %s9
  $region7: #{_lambda_.1} parent=0 // loop_footer_branch
    %8 = sbr.rel target = $region3
  $region8: #{_lambda_.1} parent=0 // loop_exit
    _

</llo_original>
